<compile_context>
chip_gen: v7x
topology: tpu7x:2x2x1
jax: 0.10.0
libtpu: 0.0.40
codegen_flags: <defaults>
</compile_context>

<pallas_src>
import jax
import jax.numpy as jnp
from jax.experimental import pallas as pl
from jax.experimental.pallas import tpu as pltpu

IN_FEATURES = 5
IN_PAD = 8                 # pad K of the first matmul to a sublane multiple
HIDDEN = 64 * 5 * 4        # 1280 (hard-coded "batch_size * 5 * 4" in the module)
OUT_FEATURES = 2
OUT_PAD = 128              # lane-dense output tile; sliced back to 2 in wrapper
MAX_TB = 256               # batch tile cap (grid > 1 at large B -> 2 TCs on v7x)


def mlp_kernel(x_ref, w1_ref, b1_ref, w2_ref, b2_ref, w3_ref, b3_ref, o_ref):
    # Fused 3-layer MLP: Linear -> ReLU -> Linear -> ReLU -> Linear.
    # Weights are bf16; MXU matmuls accumulate in f32; biases stay f32.
    x = x_ref[...].astype(jnp.bfloat16)                                   # (TB, 8)
    h1 = jnp.dot(x, w1_ref[...], preferred_element_type=jnp.float32)
    h1 = jnp.maximum(h1 + b1_ref[...], 0.0)                               # (TB, H)
    h2 = jnp.dot(h1.astype(jnp.bfloat16), w2_ref[...],
                 preferred_element_type=jnp.float32)
    h2 = jnp.maximum(h2 + b2_ref[...], 0.0)                               # (TB, H)
    o = jnp.dot(h2.astype(jnp.bfloat16), w3_ref[...],
                preferred_element_type=jnp.float32) + b3_ref[...]         # (TB, 128)
    o_ref[...] = o.astype(o_ref.dtype)


def neural_network_forward(x, packed_params):
    """Forward pass of NeuralNetwork. x: (B, 5) -> logits (B, 2) float32."""
    w1, b1, w2, b2, w3, b3 = packed_params
    B = x.shape[0]
    x2d = x.reshape(B, -1).astype(jnp.float32)            # nn.Flatten()
    x2d = jnp.pad(x2d, ((0, 0), (0, IN_PAD - IN_FEATURES)))

    TB = min(B, MAX_TB)
    Bp = pl.cdiv(B, TB) * TB                              # pad batch so TB tiles evenly
    if Bp != B:
        x2d = jnp.pad(x2d, ((0, Bp - B), (0, 0)))

    def weight_spec(shape):
        # Grid-invariant operand: single-buffered to avoid 2x VMEM residency.
        return pl.BlockSpec(shape, lambda i: (0, 0),
                            pipeline_mode=pl.Buffered(buffer_count=1))

    out = pl.pallas_call(
        mlp_kernel,
        out_shape=jax.ShapeDtypeStruct((Bp, OUT_PAD), jnp.float32),
        grid=(Bp // TB,),
        in_specs=[
            pl.BlockSpec((TB, IN_PAD), lambda i: (i, 0)),
            weight_spec((IN_PAD, HIDDEN)),
            weight_spec((1, HIDDEN)),
            weight_spec((HIDDEN, HIDDEN)),
            weight_spec((1, HIDDEN)),
            weight_spec((HIDDEN, OUT_PAD)),
            weight_spec((1, OUT_PAD)),
        ],
        out_specs=pl.BlockSpec((TB, OUT_PAD), lambda i: (i, 0)),
        compiler_params=pltpu.CompilerParams(
            dimension_semantics=("parallel",),
            vmem_limit_bytes=32 << 20,
        ),
    )(x2d, w1, b1, w2, b2, w3, b3)

    return out[:B, :OUT_FEATURES]


def init_params(key):
    """PyTorch-style init: U(-1/sqrt(fan_in), 1/sqrt(fan_in)); torch (5->H->H->2) shapes."""
    def linear(key, fan_in, fan_out):
        kw, kb = jax.random.split(key)
        bound = 1.0 / jnp.sqrt(fan_in)
        w = jax.random.uniform(kw, (fan_in, fan_out), jnp.float32, -bound, bound)
        b = jax.random.uniform(kb, (1, fan_out), jnp.float32, -bound, bound)
        return w, b

    k1, k2, k3 = jax.random.split(key, 3)
    w1, b1 = linear(k1, IN_FEATURES, HIDDEN)
    w2, b2 = linear(k2, HIDDEN, HIDDEN)
    w3, b3 = linear(k3, HIDDEN, OUT_FEATURES)
    return (w1, b1, w2, b2, w3, b3)


def pack_params(params):
    """Pad weights to kernel-friendly shapes and cast them to bf16 (biases stay f32)."""
    w1, b1, w2, b2, w3, b3 = params
    w1p = jnp.pad(w1, ((0, IN_PAD - IN_FEATURES), (0, 0))).astype(jnp.bfloat16)
    w3p = jnp.pad(w3, ((0, 0), (0, OUT_PAD - OUT_FEATURES))).astype(jnp.bfloat16)
    b3p = jnp.pad(b3, ((0, 0), (0, OUT_PAD - OUT_FEATURES)))
    return (w1p, b1, w2.astype(jnp.bfloat16), b2, w3p, b3p)


def reference_forward(x, packed_params):
    """Pure-JAX reference with the same bf16-weight / f32-accumulate arithmetic."""
    w1, b1, w2, b2, w3, b3 = packed_params
    B = x.shape[0]
    xp = jnp.pad(x.reshape(B, -1).astype(jnp.float32),
                 ((0, 0), (0, IN_PAD - IN_FEATURES))).astype(jnp.bfloat16)
    h1 = jnp.maximum(jnp.dot(xp, w1, preferred_element_type=jnp.float32) + b1, 0.0)
    h2 = jnp.maximum(jnp.dot(h1.astype(jnp.bfloat16), w2,
                             preferred_element_type=jnp.float32) + b2, 0.0)
    o = jnp.dot(h2.astype(jnp.bfloat16), w3,
                preferred_element_type=jnp.float32) + b3
    return o[:, :OUT_FEATURES]


if __name__ == "__main__":
    key = jax.random.PRNGKey(0)
    kx, kp = jax.random.split(key)

    B = 8  # small example batch
    x = jax.random.normal(kx, (B, IN_FEATURES), dtype=jnp.float32)
    params = init_params(kp)
    packed = pack_params(params)

    logits = neural_network_forward(x, packed)
    logits = jax.block_until_ready(logits)

    ref = reference_forward(x, packed)
    assert logits.shape == (B, OUT_FEATURES)
    assert jnp.allclose(logits, ref, atol=1e-3, rtol=1e-3), (
        "max abs diff = %f" % float(jnp.max(jnp.abs(logits - ref))))

    print("KERNEL_OK")
</pallas_src>

<mosaic_0001>
module attributes {stable_mosaic.version = 11 : i64} {
  func.func @mlp_kernel(%arg0: i32, %arg1: memref<8x8xf32, #tpu.memory_space<vmem>>, %arg2: memref<8x1280xbf16, #tpu.memory_space<vmem>>, %arg3: memref<1x1280xf32, #tpu.memory_space<vmem>>, %arg4: memref<1280x1280xbf16, #tpu.memory_space<vmem>>, %arg5: memref<1x1280xf32, #tpu.memory_space<vmem>>, %arg6: memref<1280x128xbf16, #tpu.memory_space<vmem>>, %arg7: memref<1x128xf32, #tpu.memory_space<vmem>>, %arg8: memref<8x128xf32, #tpu.memory_space<vmem>>) attributes {dimension_semantics = [#tpu.dimension_semantics<parallel>], iteration_bounds = array<i64: 1>, scalar_prefetch = 0 : i64, scratch_operands = 0 : i64, tpu.core_type = #tpu.core_type<tc>, window_params = [{transform_indices = @transform_0, window_bounds = array<i64: 8, 8>}, {pipeline_mode = #tpu.pipeline_mode<synchronous>, transform_indices = @transform_1, window_bounds = array<i64: 8, 1280>}, {pipeline_mode = #tpu.pipeline_mode<synchronous>, transform_indices = @transform_2, window_bounds = array<i64: 1, 1280>}, {pipeline_mode = #tpu.pipeline_mode<synchronous>, transform_indices = @transform_3, window_bounds = array<i64: 1280, 1280>}, {pipeline_mode = #tpu.pipeline_mode<synchronous>, transform_indices = @transform_4, window_bounds = array<i64: 1, 1280>}, {pipeline_mode = #tpu.pipeline_mode<synchronous>, transform_indices = @transform_5, window_bounds = array<i64: 1280, 128>}, {pipeline_mode = #tpu.pipeline_mode<synchronous>, transform_indices = @transform_6, window_bounds = array<i64: 1, 128>}, {transform_indices = @transform_7, window_bounds = array<i64: 8, 128>}]} {
    %c0 = arith.constant 0 : index
    %c0_0 = arith.constant 0 : index
    %0 = vector.load %arg1[%c0, %c0_0] : memref<8x8xf32, #tpu.memory_space<vmem>>, vector<8x8xf32>
    %1 = arith.truncf %0 : vector<8x8xf32> to vector<8x8xbf16>
    %c0_1 = arith.constant 0 : index
    %c0_2 = arith.constant 0 : index
    %2 = vector.load %arg2[%c0_1, %c0_2] : memref<8x1280xbf16, #tpu.memory_space<vmem>>, vector<8x1280xbf16>
    %cst = arith.constant dense<0.000000e+00> : vector<8x1280xf32>
    %3 = tpu.matmul %1, %2, %cst {dimension_numbers = #tpu.dot_dimension_numbers<[1], [0], [0], [1], [0, 0, 1, 1], [], []>} : vector<8x8xbf16>, vector<8x1280xbf16>, vector<8x1280xf32> -> vector<8x1280xf32>
    %c0_3 = arith.constant 0 : index
    %c0_4 = arith.constant 0 : index
    %4 = vector.load %arg3[%c0_3, %c0_4] : memref<1x1280xf32, #tpu.memory_space<vmem>>, vector<1x1280xf32>
    %5 = vector.broadcast %4 : vector<1x1280xf32> to vector<8x1280xf32>
    %6 = arith.addf %3, %5 : vector<8x1280xf32>
    %cst_5 = arith.constant 0.000000e+00 : f32
    %7 = vector.broadcast %cst_5 : f32 to vector<8x1280xf32>
    %8 = arith.maximumf %6, %7 : vector<8x1280xf32>
    %9 = arith.truncf %8 : vector<8x1280xf32> to vector<8x1280xbf16>
    %c0_6 = arith.constant 0 : index
    %c0_7 = arith.constant 0 : index
    %10 = vector.load %arg4[%c0_6, %c0_7] : memref<1280x1280xbf16, #tpu.memory_space<vmem>>, vector<1280x1280xbf16>
    %cst_8 = arith.constant dense<0.000000e+00> : vector<8x1280xf32>
    %11 = tpu.matmul %9, %10, %cst_8 {dimension_numbers = #tpu.dot_dimension_numbers<[1], [0], [0], [1], [0, 0, 1, 1], [], []>} : vector<8x1280xbf16>, vector<1280x1280xbf16>, vector<8x1280xf32> -> vector<8x1280xf32>
    %c0_9 = arith.constant 0 : index
    %c0_10 = arith.constant 0 : index
    %12 = vector.load %arg5[%c0_9, %c0_10] : memref<1x1280xf32, #tpu.memory_space<vmem>>, vector<1x1280xf32>
    %13 = vector.broadcast %12 : vector<1x1280xf32> to vector<8x1280xf32>
    %14 = arith.addf %11, %13 : vector<8x1280xf32>
    %cst_11 = arith.constant 0.000000e+00 : f32
    %15 = vector.broadcast %cst_11 : f32 to vector<8x1280xf32>
    %16 = arith.maximumf %14, %15 : vector<8x1280xf32>
    %17 = arith.truncf %16 : vector<8x1280xf32> to vector<8x1280xbf16>
    %c0_12 = arith.constant 0 : index
    %c0_13 = arith.constant 0 : index
    %18 = vector.load %arg6[%c0_12, %c0_13] : memref<1280x128xbf16, #tpu.memory_space<vmem>>, vector<1280x128xbf16>
    %cst_14 = arith.constant dense<0.000000e+00> : vector<8x128xf32>
    %19 = tpu.matmul %17, %18, %cst_14 {dimension_numbers = #tpu.dot_dimension_numbers<[1], [0], [0], [1], [0, 0, 1, 1], [], []>} : vector<8x1280xbf16>, vector<1280x128xbf16>, vector<8x128xf32> -> vector<8x128xf32>
    %c0_15 = arith.constant 0 : index
    %c0_16 = arith.constant 0 : index
    %20 = vector.load %arg7[%c0_15, %c0_16] : memref<1x128xf32, #tpu.memory_space<vmem>>, vector<1x128xf32>
    %21 = vector.broadcast %20 : vector<1x128xf32> to vector<8x128xf32>
    %22 = arith.addf %19, %21 : vector<8x128xf32>
    %c0_17 = arith.constant 0 : index
    %c0_18 = arith.constant 0 : index
    %23 = vector.load %arg8[%c0_17, %c0_18] : memref<8x128xf32, #tpu.memory_space<vmem>>, vector<8x128xf32>
    tpu.vector_store %arg8[%c0_17, %c0_18], %22 {strides = array<i32>} : memref<8x128xf32, #tpu.memory_space<vmem>>, vector<8x128xf32>,
    return
  }
  func.func @transform_0(%arg0: i32) -> (i32, i32) {
    %c0_i32 = arith.constant 0 : i32
    %c0_i32_0 = arith.constant 0 : i32
    return %arg0, %c0_i32 : i32, i32
  }
  func.func @transform_1(%arg0: i32) -> (i32, i32) {
    %c0_i32 = arith.constant 0 : i32
    %c0_i32_0 = arith.constant 0 : i32
    %c0_i32_1 = arith.constant 0 : i32
    return %c0_i32, %c0_i32_0 : i32, i32
  }
  func.func @transform_2(%arg0: i32) -> (i32, i32) {
    %c0_i32 = arith.constant 0 : i32
    %c0_i32_0 = arith.constant 0 : i32
    %c0_i32_1 = arith.constant 0 : i32
    return %c0_i32, %c0_i32_0 : i32, i32
  }
  func.func @transform_3(%arg0: i32) -> (i32, i32) {
    %c0_i32 = arith.constant 0 : i32
    %c0_i32_0 = arith.constant 0 : i32
    %c0_i32_1 = arith.constant 0 : i32
    return %c0_i32, %c0_i32_0 : i32, i32
  }
  func.func @transform_4(%arg0: i32) -> (i32, i32) {
    %c0_i32 = arith.constant 0 : i32
    %c0_i32_0 = arith.constant 0 : i32
    %c0_i32_1 = arith.constant 0 : i32
    return %c0_i32, %c0_i32_0 : i32, i32
  }
  func.func @transform_5(%arg0: i32) -> (i32, i32) {
    %c0_i32 = arith.constant 0 : i32
    %c0_i32_0 = arith.constant 0 : i32
    %c0_i32_1 = arith.constant 0 : i32
    return %c0_i32, %c0_i32_0 : i32, i32
  }
  func.func @transform_6(%arg0: i32) -> (i32, i32) {
    %c0_i32 = arith.constant 0 : i32
    %c0_i32_0 = arith.constant 0 : i32
    %c0_i32_1 = arith.constant 0 : i32
    return %c0_i32, %c0_i32_0 : i32, i32
  }
  func.func @transform_7(%arg0: i32) -> (i32, i32) {
    %c0_i32 = arith.constant 0 : i32
    %c0_i32_0 = arith.constant 0 : i32
    return %arg0, %c0_i32 : i32, i32
  }
}

</mosaic_0001>

<llo_original>
// kernel: tpu_custom_call.1
$region0: #{tpu_custom_call.1}
  #allocation0 [shape = 'u32[]', space=smem, size = 0x4, offset = 0x4, fixed_abs, tag = 'smem constant byte address 0x4 - core index']
  #allocation1 [shape = 'u32[144,128]{1,0:T(1,128)}', space=vmem, size = 0x12000, scoped, tag = 'internal scratch']
  %s0 = inlined_call_operand.hbm [shape: f32[8,8], index: 0, kind: input, shape index: {}]
  %s1 = inlined_call_operand.hbm [shape: bf16[8,1280], index: 1, kind: input, shape index: {}]
  %s2 = inlined_call_operand.hbm [shape: f32[1,1280], index: 2, kind: input, shape index: {}]
  %s3 = inlined_call_operand.hbm [shape: bf16[1280,1280], index: 3, kind: input, shape index: {}]
  %s4 = inlined_call_operand.hbm [shape: f32[1,1280], index: 4, kind: input, shape index: {}]
  %s5 = inlined_call_operand.hbm [shape: bf16[1280,128], index: 5, kind: input, shape index: {}]
  %s6 = inlined_call_operand.hbm [shape: f32[1,128], index: 6, kind: input, shape index: {}]
  %s7 = inlined_call_operand.hbm [shape: f32[8,128], index: 7, kind: output, shape index: {}]
  %s8 = sld [smem:[#allocation0]]
  $region66: #{tpu_custom_call.1} parent=0
    _
  %s10 = ssub.s32 1, %s8
  %s11 = scalar_select 0, %s10, %s8
  $region1: #{tpu_custom_call.1} parent=0
    #allocation2 [shape = 'u8[4096]{0}', space=vmem, size = 0x1000, scoped, tag = 'input window, operand 0, single buffered']
    #allocation3 [shape = 's32[1]{0}', space=sflag, size = 0x4, scoped, tag = 'scoped memory for tpu_custom_call.1']
    #allocation4 [shape = 's32[1]{0}', space=sflag, size = 0x4, scoped, tag = 'scoped memory for tpu_custom_call.1']
    #allocation5 [shape = 'u8[20480]{0}', space=vmem, size = 0x5000, scoped, tag = 'input window, operand 1, single buffered']
    #allocation6 [shape = 's32[1]{0}', space=sflag, size = 0x4, scoped, tag = 'scoped memory for tpu_custom_call.1']
    #allocation7 [shape = 'u8[5120]{0}', space=vmem, size = 0x1400, scoped, tag = 'input window, operand 2, single buffered']
    #allocation8 [shape = 'u8[3276800]{0}', space=vmem, size = 0x320000, scoped, tag = 'input window, operand 3, single buffered']
    #allocation9 [shape = 's32[1]{0}', space=sflag, size = 0x4, scoped, tag = 'scoped memory for tpu_custom_call.1']
    #allocation10 [shape = 'u8[5120]{0}', space=vmem, size = 0x1400, scoped, tag = 'input window, operand 4, single buffered']
    #allocation11 [shape = 'u8[327680]{0}', space=vmem, size = 0x50000, scoped, tag = 'input window, operand 5, single buffered']
    #allocation12 [shape = 's32[1]{0}', space=sflag, size = 0x4, scoped, tag = 'scoped memory for tpu_custom_call.1']
    #allocation13 [shape = 'u8[512]{0}', space=vmem, size = 0x400, scoped, tag = 'input window, operand 6, single buffered']
    #allocation14 [shape = 'u8[4096]{0}', space=vmem, size = 0x1000, scoped, tag = 'output window, operand 0, single buffered']
    %12 = vsyncpa [#allocation3], 0
    %13 = vsyncpa [#allocation6], 0
    %14 = vsyncpa [#allocation9], 0
    %15 = vsyncpa [#allocation12], 0
    %16 = vsyncpa [#allocation4], 0
    // Predicated region
    $region2: #{tpu_custom_call.1} parent=1 // pred_check
      _
    $region3: #{tpu_custom_call.1} parent=1 // pred_check_branch
      %18 = sbr.rel (0) target = $region5
    $region4: #{tpu_custom_call.1} parent=1 // pred_region
      %s20 = ssub.s32 128, 128
      %21 = vsyncadd [#allocation3], %s20
      %s23 = sshll.u32 [#allocation2], 4
      %s24 = int_to_ptr.vmem [resolvable:$true] %s23
      %26 = dma.hbm_to_vmem [thread:$0]  %s0, 128, %s24, [#allocation3]
    $region5: #{tpu_custom_call.1} parent=1 // pred_fallthru
      _
    // Predicated region
    $region6: #{tpu_custom_call.1} parent=1 // pred_check
      _
    $region7: #{tpu_custom_call.1} parent=1 // pred_check_branch
      %28 = sbr.rel (0) target = $region9
    $region8: #{tpu_custom_call.1} parent=1 // pred_region
      %s30 = ssub.s32 640, 640
      %31 = vsyncadd [#allocation6], %s30
      %s33 = sshll.u32 [#allocation5], 4
      %s34 = int_to_ptr.vmem [resolvable:$true] %s33
      %36 = dma.hbm_to_vmem [thread:$0]  %s1, 640, %s34, [#allocation6]
    $region9: #{tpu_custom_call.1} parent=1 // pred_fallthru
      _
    // Predicated region
    $region10: #{tpu_custom_call.1} parent=1 // pred_check
      _
    $region11: #{tpu_custom_call.1} parent=1 // pred_check_branch
      %38 = sbr.rel (0) target = $region13
    $region12: #{tpu_custom_call.1} parent=1 // pred_region
      %s40 = ssub.s32 160, 160
      %41 = vsyncadd [#allocation6], %s40
      %s43 = sshll.u32 [#allocation7], 4
      %s44 = int_to_ptr.vmem [resolvable:$true] %s43
      %46 = dma.hbm_to_vmem [thread:$0]  %s2, 160, %s44, [#allocation6]
    $region13: #{tpu_custom_call.1} parent=1 // pred_fallthru
      _
    // Predicated region
    $region14: #{tpu_custom_call.1} parent=1 // pred_check
      _
    $region15: #{tpu_custom_call.1} parent=1 // pred_check_branch
      %48 = sbr.rel (0) target = $region17
    $region16: #{tpu_custom_call.1} parent=1 // pred_region
      %s50 = ssub.s32 102400, 102400
      %51 = vsyncadd [#allocation9], %s50
      %s52 = sshll.u32 [#allocation8], 4
      %s53 = int_to_ptr.vmem [resolvable:$true] %s52
      %58 = dma.hbm_to_vmem [thread:$0]  %s3, 102400, %s53, [#allocation9], 640, 640, 40
    $region17: #{tpu_custom_call.1} parent=1 // pred_fallthru
      _
    // Predicated region
    $region18: #{tpu_custom_call.1} parent=1 // pred_check
      _
    $region19: #{tpu_custom_call.1} parent=1 // pred_check_branch
      %60 = sbr.rel (0) target = $region21
    $region20: #{tpu_custom_call.1} parent=1 // pred_region
      %s62 = ssub.s32 160, 160
      %63 = vsyncadd [#allocation9], %s62
      %s65 = sshll.u32 [#allocation10], 4
      %s66 = int_to_ptr.vmem [resolvable:$true] %s65
      %68 = dma.hbm_to_vmem [thread:$0]  %s4, 160, %s66, [#allocation9]
    $region21: #{tpu_custom_call.1} parent=1 // pred_fallthru
      _
    // Predicated region
    $region22: #{tpu_custom_call.1} parent=1 // pred_check
      _
    $region23: #{tpu_custom_call.1} parent=1 // pred_check_branch
      %70 = sbr.rel (0) target = $region25
    $region24: #{tpu_custom_call.1} parent=1 // pred_region
      %s72 = ssub.s32 10240, 10240
      %73 = vsyncadd [#allocation12], %s72
      %s74 = sshll.u32 [#allocation11], 4
      %s75 = int_to_ptr.vmem [resolvable:$true] %s74
      %80 = dma.hbm_to_vmem [thread:$0]  %s5, 10240, %s75, [#allocation12], 64, 64, 4
    $region25: #{tpu_custom_call.1} parent=1 // pred_fallthru
      _
    // Predicated region
    $region26: #{tpu_custom_call.1} parent=1 // pred_check
      _
    $region27: #{tpu_custom_call.1} parent=1 // pred_check_branch
      %82 = sbr.rel (0) target = $region29
    $region28: #{tpu_custom_call.1} parent=1 // pred_region
      %s84 = ssub.s32 16, 16
      %85 = vsyncadd [#allocation12], %s84
      %s87 = sshll.u32 [#allocation13], 4
      %s88 = int_to_ptr.vmem [resolvable:$true] %s87
      %90 = dma.hbm_to_vmem [thread:$0]  %s6, 16, %s88, [#allocation12]
    $region29: #{tpu_custom_call.1} parent=1 // pred_fallthru
      _
    // Predicated region
    $region30: #{tpu_custom_call.1} parent=1 // pred_check
      _
    $region31: #{tpu_custom_call.1} parent=1 // pred_check_branch
      %92 = sbr.rel (0) target = $region33
    $region32: #{tpu_custom_call.1} parent=1 // pred_region
      %93 = dma.done [#allocation3], 128
    $region33: #{tpu_custom_call.1} parent=1 // pred_fallthru
      _
    // Predicated region
    $region34: #{tpu_custom_call.1} parent=1 // pred_check
      _
    $region35: #{tpu_custom_call.1} parent=1 // pred_check_branch
      %95 = sbr.rel (0) target = $region37
    $region36: #{tpu_custom_call.1} parent=1 // pred_region
      %96 = dma.done [#allocation6], 640
    $region37: #{tpu_custom_call.1} parent=1 // pred_fallthru
      _
    // Predicated region
    $region38: #{tpu_custom_call.1} parent=1 // pred_check
      _
    $region39: #{tpu_custom_call.1} parent=1 // pred_check_branch
      %98 = sbr.rel (0) target = $region41
    $region40: #{tpu_custom_call.1} parent=1 // pred_region
      %99 = dma.done [#allocation6], 160
    $region41: #{tpu_custom_call.1} parent=1 // pred_fallthru
      _
    // Predicated region
    $region42: #{tpu_custom_call.1} parent=1 // pred_check
      _
    $region43: #{tpu_custom_call.1} parent=1 // pred_check_branch
      %101 = sbr.rel (0) target = $region45
    $region44: #{tpu_custom_call.1} parent=1 // pred_region
      %102 = dma.done [#allocation9], 102400
    $region45: #{tpu_custom_call.1} parent=1 // pred_fallthru
      _
    // Predicated region
    $region46: #{tpu_custom_call.1} parent=1 // pred_check
      _
    $region47: #{tpu_custom_call.1} parent=1 // pred_check_branch
      %104 = sbr.rel (0) target = $region49
    $region48: #{tpu_custom_call.1} parent=1 // pred_region
      %105 = dma.done [#allocation9], 160
    $region49: #{tpu_custom_call.1} parent=1 // pred_fallthru
      _
    // Predicated region
    $region50: #{tpu_custom_call.1} parent=1 // pred_check
      _
    $region51: #{tpu_custom_call.1} parent=1 // pred_check_branch
      %107 = sbr.rel (0) target = $region53
    $region52: #{tpu_custom_call.1} parent=1 // pred_region
      %108 = dma.done [#allocation12], 10240
    $region53: #{tpu_custom_call.1} parent=1 // pred_fallthru
      _
    // Predicated region
    $region54: #{tpu_custom_call.1} parent=1 // pred_check
      _
    $region55: #{tpu_custom_call.1} parent=1 // pred_check_branch
      %110 = sbr.rel (0) target = $region57
    $region56: #{tpu_custom_call.1} parent=1 // pred_region
      %111 = dma.done [#allocation12], 16
    $region57: #{tpu_custom_call.1} parent=1 // pred_fallthru
      _
    %v113 = vld [vmem:[#allocation2] sm:$0xff]
    %v114 = vpack.c.bf16 %v113, %v113
    %v115 = vld [vmem:[#allocation5] sm:$0xff]
    %v116 = vld [vmem:[#allocation5 + $0x8] sm:$0xff]
    %v117 = vld [vmem:[#allocation5 + $0x10] sm:$0xff]
    %v118 = vld [vmem:[#allocation5 + $0x18] sm:$0xff]
    %v119 = vld [vmem:[#allocation5 + $0x20] sm:$0xff]
    %v120 = vld [vmem:[#allocation7] sm:$0xff]
    %v121 = vld [vmem:[#allocation7 + $0x8] sm:$0x3]
    %v124 = vlaneseq
    %v125 = vshrl.u32 %v124, 7
    %v126 = vsub.s32 0, %v125
    %v127 = vrot.slane %v120, %v126
    %v128 = vlaneseq
    %v129 = vshrl.u32 %v128, 7
    %v130 = vsub.s32 1, %v129
    %v131 = vrot.slane %v120, %v130
    %v132 = vlaneseq
    %v133 = vshrl.u32 %v132, 7
    %v134 = vsub.s32 2, %v133
    %v135 = vrot.slane %v120, %v134
    %v136 = vlaneseq
    %v137 = vshrl.u32 %v136, 7
    %v138 = vsub.s32 3, %v137
    %v139 = vrot.slane %v120, %v138
    %v140 = vlaneseq
    %v141 = vshrl.u32 %v140, 7
    %v142 = vsub.s32 4, %v141
    %v143 = vrot.slane %v120, %v142
    %v144 = vlaneseq
    %v145 = vshrl.u32 %v144, 7
    %v146 = vsub.s32 5, %v145
    %v147 = vrot.slane %v120, %v146
    %v148 = vlaneseq
    %v149 = vshrl.u32 %v148, 7
    %v150 = vsub.s32 6, %v149
    %v151 = vrot.slane %v120, %v150
    %v152 = vlaneseq
    %v153 = vshrl.u32 %v152, 7
    %v154 = vsub.s32 7, %v153
    %v155 = vrot.slane %v120, %v154
    %v156 = vlaneseq
    %v157 = vshrl.u32 %v156, 7
    %v158 = vsub.s32 0, %v157
    %v159 = vrot.slane %v121, %v158
    %v160 = vlaneseq
    %v161 = vshrl.u32 %v160, 7
    %v162 = vsub.s32 1, %v161
    %v163 = vrot.slane %v121, %v162
    %v179 = vunpack.c.l.b16 %v115
    %v180 = vunpack.c.h.b16 %v115
    %v181 = vunpack.c.l.b16 %v116
    %v182 = vunpack.c.h.b16 %v116
    %v183 = vunpack.c.l.b16 %v117
    %v184 = vunpack.c.h.b16 %v117
    %v185 = vunpack.c.l.b16 %v118
    %v186 = vunpack.c.h.b16 %v118
    %v187 = vunpack.c.l.b16 %v119
    %v188 = vunpack.c.h.b16 %v119
    %v189 = vpack.c.b16 %v179, %v179
    %v190 = vpack.c.b16 %v180, %v180
    %v191 = vpack.c.b16 %v181, %v181
    %v192 = vpack.c.b16 %v182, %v182
    %v193 = vpack.c.b16 %v183, %v183
    %v194 = vpack.c.b16 %v184, %v184
    %v195 = vpack.c.b16 %v185, %v185
    %v196 = vpack.c.b16 %v186, %v186
    %v197 = vpack.c.b16 %v187, %v187
    %v198 = vpack.c.b16 %v188, %v188
    %vm199 = vcmask 64512
    %v201 = vsel %vm199, %v114, 0
    %vm203 = vcmask 1043456
    %v205 = vsel %vm203, %v189, 0
    %v208 = vsel %vm203, %v190, 0
    %v211 = vsel %vm203, %v191, 0
    %v214 = vsel %vm203, %v192, 0
    %v217 = vsel %vm203, %v193, 0
    %v220 = vsel %vm203, %v194, 0
    %v223 = vsel %vm203, %v195, 0
    %v226 = vsel %vm203, %v196, 0
    %v229 = vsel %vm203, %v197, 0
    %v232 = vsel %vm203, %v198, 0
    %234 = vmatprep.subr.bf16.mxu0 %v208
    %235 = vmatpush1.bf16.msra.mxu0 %v205
    %236 = vmatprep.subr.bf16.mxu0 0
    %237 = vmatpush1.bf16.msra.mxu0 0
    %238 = vmatprep.subr.bf16.mxu0 0
    %239 = vmatpush1.bf16.msra.mxu0 0
    %240 = vmatprep.subr.bf16.mxu0 0
    %241 = vmatpush1.bf16.msra.mxu0 0
    %242 = vmatprep.subr.bf16.mxu0 0
    %243 = vmatpush1.bf16.msra.mxu0 0
    %244 = vmatprep.subr.bf16.mxu0 0
    %245 = vmatpush1.bf16.msra.mxu0 0
    %246 = vmatprep.subr.bf16.mxu0 0
    %247 = vmatpush1.bf16.msra.mxu0 0
    %248 = vmatprep.subr.bf16.mxu0 0
    %249 = vmatpush1.bf16.msra.mxu0 0
    %250 = vmatprep.subr.bf16.mxu0 0
    %251 = vmatpush1.bf16.msra.mxu0 0
    %252 = vmatprep.subr.bf16.mxu0 0
    %253 = vmatpush1.bf16.msra.mxu0 0
    %254 = vmatprep.subr.bf16.mxu0 0
    %255 = vmatpush1.bf16.msra.mxu0 0
    %256 = vmatprep.subr.bf16.mxu0 0
    %257 = vmatpush1.bf16.msra.mxu0 0
    %258 = vmatprep.subr.bf16.mxu0 0
    %259 = vmatpush1.bf16.msra.mxu0 0
    %260 = vmatprep.subr.bf16.mxu0 0
    %261 = vmatpush1.bf16.msra.mxu0 0
    %262 = vmatprep.subr.bf16.mxu0 0
    %263 = vmatpush1.bf16.msra.mxu0 0
    %264 = vmatprep.subr.bf16.mxu0 0
    %265 = vmatpush1.bf16.msra.mxu0 0
    %266 = vmatprep.mubr.bf16.mxu0 0
    %267 = vmatmul.mubr.bf16.gmra.mrb[0].mxu0 %v201
    %v268 = vpop.f32.mrb[0].mxu0
    %v269 = vadd.f32 %v127, %v268
    %v270 = vpop.f32.mrb[0].mxu0
    %v271 = vadd.f32 %v131, %v270
    %v272 = vpop.f32.mrb[0].mxu0
    %v273 = vpop.f32.mrb[0].mxu0
    %274 = vdwg.mxu0
    %275 = vmatprep.subr.bf16.mxu0 %v214
    %276 = vmatpush1.bf16.msra.mxu0 %v211
    %277 = vmatprep.subr.bf16.mxu0 0
    %278 = vmatpush1.bf16.msra.mxu0 0
    %279 = vmatprep.subr.bf16.mxu0 0
    %280 = vmatpush1.bf16.msra.mxu0 0
    %281 = vmatprep.subr.bf16.mxu0 0
    %282 = vmatpush1.bf16.msra.mxu0 0
    %283 = vmatprep.subr.bf16.mxu0 0
    %284 = vmatpush1.bf16.msra.mxu0 0
    %285 = vmatprep.subr.bf16.mxu0 0
    %286 = vmatpush1.bf16.msra.mxu0 0
    %287 = vmatprep.subr.bf16.mxu0 0
    %288 = vmatpush1.bf16.msra.mxu0 0
    %289 = vmatprep.subr.bf16.mxu0 0
    %290 = vmatpush1.bf16.msra.mxu0 0
    %291 = vmatprep.subr.bf16.mxu0 0
    %292 = vmatpush1.bf16.msra.mxu0 0
    %293 = vmatprep.subr.bf16.mxu0 0
    %294 = vmatpush1.bf16.msra.mxu0 0
    %295 = vmatprep.subr.bf16.mxu0 0
    %296 = vmatpush1.bf16.msra.mxu0 0
    %297 = vmatprep.subr.bf16.mxu0 0
    %298 = vmatpush1.bf16.msra.mxu0 0
    %299 = vmatprep.subr.bf16.mxu0 0
    %300 = vmatpush1.bf16.msra.mxu0 0
    %301 = vmatprep.subr.bf16.mxu0 0
    %302 = vmatpush1.bf16.msra.mxu0 0
    %303 = vmatprep.subr.bf16.mxu0 0
    %304 = vmatpush1.bf16.msra.mxu0 0
    %305 = vmatprep.subr.bf16.mxu0 0
    %306 = vmatpush1.bf16.msra.mxu0 0
    %307 = vmatprep.mubr.bf16.mxu0 0
    %308 = vmatmul.mubr.bf16.gmra.mrb[0].mxu0 %v201
    %v309 = vpop.f32.mrb[0].mxu0
    %v310 = vadd.f32 %v135, %v309
    %v311 = vpop.f32.mrb[0].mxu0
    %v312 = vadd.f32 %v139, %v311
    %v313 = vpop.f32.mrb[0].mxu0
    %v314 = vpop.f32.mrb[0].mxu0
    %315 = vdwg.mxu0
    %316 = vmatprep.subr.bf16.mxu0 %v220
    %317 = vmatpush1.bf16.msra.mxu0 %v217
    %318 = vmatprep.subr.bf16.mxu0 0
    %319 = vmatpush1.bf16.msra.mxu0 0
    %320 = vmatprep.subr.bf16.mxu0 0
    %321 = vmatpush1.bf16.msra.mxu0 0
    %322 = vmatprep.subr.bf16.mxu0 0
    %323 = vmatpush1.bf16.msra.mxu0 0
    %324 = vmatprep.subr.bf16.mxu0 0
    %325 = vmatpush1.bf16.msra.mxu0 0
    %326 = vmatprep.subr.bf16.mxu0 0
    %327 = vmatpush1.bf16.msra.mxu0 0
    %328 = vmatprep.subr.bf16.mxu0 0
    %329 = vmatpush1.bf16.msra.mxu0 0
    %330 = vmatprep.subr.bf16.mxu0 0
    %331 = vmatpush1.bf16.msra.mxu0 0
    %332 = vmatprep.subr.bf16.mxu0 0
    %333 = vmatpush1.bf16.msra.mxu0 0
    %334 = vmatprep.subr.bf16.mxu0 0
    %335 = vmatpush1.bf16.msra.mxu0 0
    %336 = vmatprep.subr.bf16.mxu0 0
    %337 = vmatpush1.bf16.msra.mxu0 0
    %338 = vmatprep.subr.bf16.mxu0 0
    %339 = vmatpush1.bf16.msra.mxu0 0
    %340 = vmatprep.subr.bf16.mxu0 0
    %341 = vmatpush1.bf16.msra.mxu0 0
    %342 = vmatprep.subr.bf16.mxu0 0
    %343 = vmatpush1.bf16.msra.mxu0 0
    %344 = vmatprep.subr.bf16.mxu0 0
    %345 = vmatpush1.bf16.msra.mxu0 0
    %346 = vmatprep.subr.bf16.mxu0 0
    %347 = vmatpush1.bf16.msra.mxu0 0
    %348 = vmatprep.mubr.bf16.mxu0 0
    %349 = vmatmul.mubr.bf16.gmra.mrb[0].mxu0 %v201
    %v350 = vpop.f32.mrb[0].mxu0
    %v351 = vadd.f32 %v143, %v350
    %v352 = vpop.f32.mrb[0].mxu0
    %v353 = vadd.f32 %v147, %v352
    %v354 = vpop.f32.mrb[0].mxu0
    %v355 = vpop.f32.mrb[0].mxu0
    %356 = vdwg.mxu0
    %357 = vmatprep.subr.bf16.mxu0 %v226
    %358 = vmatpush1.bf16.msra.mxu0 %v223
    %359 = vmatprep.subr.bf16.mxu0 0
    %360 = vmatpush1.bf16.msra.mxu0 0
    %361 = vmatprep.subr.bf16.mxu0 0
    %362 = vmatpush1.bf16.msra.mxu0 0
    %363 = vmatprep.subr.bf16.mxu0 0
    %364 = vmatpush1.bf16.msra.mxu0 0
    %365 = vmatprep.subr.bf16.mxu0 0
    %366 = vmatpush1.bf16.msra.mxu0 0
    %367 = vmatprep.subr.bf16.mxu0 0
    %368 = vmatpush1.bf16.msra.mxu0 0
    %369 = vmatprep.subr.bf16.mxu0 0
    %370 = vmatpush1.bf16.msra.mxu0 0
    %371 = vmatprep.subr.bf16.mxu0 0
    %372 = vmatpush1.bf16.msra.mxu0 0
    %373 = vmatprep.subr.bf16.mxu0 0
    %374 = vmatpush1.bf16.msra.mxu0 0
    %375 = vmatprep.subr.bf16.mxu0 0
    %376 = vmatpush1.bf16.msra.mxu0 0
    %377 = vmatprep.subr.bf16.mxu0 0
    %378 = vmatpush1.bf16.msra.mxu0 0
    %379 = vmatprep.subr.bf16.mxu0 0
    %380 = vmatpush1.bf16.msra.mxu0 0
    %381 = vmatprep.subr.bf16.mxu0 0
    %382 = vmatpush1.bf16.msra.mxu0 0
    %383 = vmatprep.subr.bf16.mxu0 0
    %384 = vmatpush1.bf16.msra.mxu0 0
    %385 = vmatprep.subr.bf16.mxu0 0
    %386 = vmatpush1.bf16.msra.mxu0 0
    %387 = vmatprep.subr.bf16.mxu0 0
    %388 = vmatpush1.bf16.msra.mxu0 0
    %389 = vmatprep.mubr.bf16.mxu0 0
    %390 = vmatmul.mubr.bf16.gmra.mrb[0].mxu0 %v201
    %v391 = vpop.f32.mrb[0].mxu0
    %v392 = vadd.f32 %v151, %v391
    %v393 = vpop.f32.mrb[0].mxu0
    %v394 = vadd.f32 %v155, %v393
    %v395 = vpop.f32.mrb[0].mxu0
    %v396 = vpop.f32.mrb[0].mxu0
    %397 = vdwg.mxu0
    %398 = vmatprep.subr.bf16.mxu0 %v232
    %399 = vmatpush1.bf16.msra.mxu0 %v229
    %400 = vmatprep.subr.bf16.mxu0 0
    %401 = vmatpush1.bf16.msra.mxu0 0
    %402 = vmatprep.subr.bf16.mxu0 0
    %403 = vmatpush1.bf16.msra.mxu0 0
    %404 = vmatprep.subr.bf16.mxu0 0
    %405 = vmatpush1.bf16.msra.mxu0 0
    %406 = vmatprep.subr.bf16.mxu0 0
    %407 = vmatpush1.bf16.msra.mxu0 0
    %408 = vmatprep.subr.bf16.mxu0 0
    %409 = vmatpush1.bf16.msra.mxu0 0
    %410 = vmatprep.subr.bf16.mxu0 0
    %411 = vmatpush1.bf16.msra.mxu0 0
    %412 = vmatprep.subr.bf16.mxu0 0
    %413 = vmatpush1.bf16.msra.mxu0 0
    %414 = vmatprep.subr.bf16.mxu0 0
    %415 = vmatpush1.bf16.msra.mxu0 0
    %416 = vmatprep.subr.bf16.mxu0 0
    %417 = vmatpush1.bf16.msra.mxu0 0
    %418 = vmatprep.subr.bf16.mxu0 0
    %419 = vmatpush1.bf16.msra.mxu0 0
    %420 = vmatprep.subr.bf16.mxu0 0
    %421 = vmatpush1.bf16.msra.mxu0 0
    %422 = vmatprep.subr.bf16.mxu0 0
    %423 = vmatpush1.bf16.msra.mxu0 0
    %424 = vmatprep.subr.bf16.mxu0 0
    %425 = vmatpush1.bf16.msra.mxu0 0
    %426 = vmatprep.subr.bf16.mxu0 0
    %427 = vmatpush1.bf16.msra.mxu0 0
    %428 = vmatprep.subr.bf16.mxu0 0
    %429 = vmatpush1.bf16.msra.mxu0 0
    %430 = vmatprep.mubr.bf16.mxu0 0
    %431 = vmatmul.mubr.bf16.gmra.mrb[0].mxu0 %v201
    %v432 = vpop.f32.mrb[0].mxu0
    %v433 = vadd.f32 %v159, %v432
    %v434 = vpop.f32.mrb[0].mxu0
    %v435 = vadd.f32 %v163, %v434
    %v436 = vpop.f32.mrb[0].mxu0
    %v437 = vpop.f32.mrb[0].mxu0
    %438 = vdwg.mxu0
    %v439 = vmax.f32 %v269, 0.0
    %v440 = vmax.f32 %v271, 0.0
    %v441 = vmax.f32 %v310, 0.0
    %v442 = vmax.f32 %v312, 0.0
    %v443 = vmax.f32 %v351, 0.0
    %v444 = vmax.f32 %v353, 0.0
    %v445 = vmax.f32 %v392, 0.0
    %v446 = vmax.f32 %v394, 0.0
    %v447 = vmax.f32 %v433, 0.0
    %v448 = vmax.f32 %v435, 0.0
    %v449 = vpack.c.bf16 %v439, %v439
    %v450 = vpack.c.bf16 %v440, %v440
    %v451 = vpack.c.bf16 %v441, %v441
    %v452 = vpack.c.bf16 %v442, %v442
    %v453 = vpack.c.bf16 %v443, %v443
    %v454 = vpack.c.bf16 %v444, %v444
    %v455 = vpack.c.bf16 %v445, %v445
    %v456 = vpack.c.bf16 %v446, %v446
    %v457 = vpack.c.bf16 %v447, %v447
    %v458 = vpack.c.bf16 %v448, %v448
    %v459 = vld [vmem:[#allocation8] sm:$0xff]
    %v460 = vld [vmem:[#allocation8 + $0x8] sm:$0xff]
    %v461 = vld [vmem:[#allocation8 + $0x10] sm:$0xff]
    %v462 = vld [vmem:[#allocation8 + $0x18] sm:$0xff]
    %v463 = vld [vmem:[#allocation8 + $0x20] sm:$0xff]
    %v464 = vld [vmem:[#allocation8 + $0x28] sm:$0xff]
    %v465 = vld [vmem:[#allocation8 + $0x30] sm:$0xff]
    %v466 = vld [vmem:[#allocation8 + $0x38] sm:$0xff]
    %v467 = vld [vmem:[#allocation8 + $0x40] sm:$0xff]
    %v468 = vld [vmem:[#allocation8 + $0x48] sm:$0xff]
    %v469 = vld [vmem:[#allocation8 + $0x50] sm:$0xff]
    %v470 = vld [vmem:[#allocation8 + $0x58] sm:$0xff]
    %v471 = vld [vmem:[#allocation8 + $0x60] sm:$0xff]
    %v472 = vld [vmem:[#allocation8 + $0x68] sm:$0xff]
    %v473 = vld [vmem:[#allocation8 + $0x70] sm:$0xff]
    %v474 = vld [vmem:[#allocation8 + $0x78] sm:$0xff]
    %v475 = vld [vmem:[#allocation8 + $0x80] sm:$0xff]
    %v476 = vld [vmem:[#allocation8 + $0x88] sm:$0xff]
    %v477 = vld [vmem:[#allocation8 + $0x90] sm:$0xff]
    %v478 = vld [vmem:[#allocation8 + $0x98] sm:$0xff]
    %v479 = vld [vmem:[#allocation8 + $0xa0] sm:$0xff]
    %v480 = vld [vmem:[#allocation8 + $0xa8] sm:$0xff]
    %v481 = vld [vmem:[#allocation8 + $0xb0] sm:$0xff]
    %v482 = vld [vmem:[#allocation8 + $0xb8] sm:$0xff]
    %v483 = vld [vmem:[#allocation8 + $0xc0] sm:$0xff]
    %v484 = vld [vmem:[#allocation8 + $0xc8] sm:$0xff]
    %v485 = vld [vmem:[#allocation8 + $0xd0] sm:$0xff]
    %v486 = vld [vmem:[#allocation8 + $0xd8] sm:$0xff]
    %v487 = vld [vmem:[#allocation8 + $0xe0] sm:$0xff]
    %v488 = vld [vmem:[#allocation8 + $0xe8] sm:$0xff]
    %v489 = vld [vmem:[#allocation8 + $0xf0] sm:$0xff]
    %v490 = vld [vmem:[#allocation8 + $0xf8] sm:$0xff]
    %v491 = vld [vmem:[#allocation8 + $0x100] sm:$0xff]
    %v492 = vld [vmem:[#allocation8 + $0x108] sm:$0xff]
    %v493 = vld [vmem:[#allocation8 + $0x110] sm:$0xff]
    %v494 = vld [vmem:[#allocation8 + $0x118] sm:$0xff]
    %v495 = vld [vmem:[#allocation8 + $0x120] sm:$0xff]
    %v496 = vld [vmem:[#allocation8 + $0x128] sm:$0xff]
    %v497 = vld [vmem:[#allocation8 + $0x130] sm:$0xff]
    %v498 = vld [vmem:[#allocation8 + $0x138] sm:$0xff]
    %v499 = vld [vmem:[#allocation8 + $0x140] sm:$0xff]
    %v500 = vld [vmem:[#allocation8 + $0x148] sm:$0xff]
    %v501 = vld [vmem:[#allocation8 + $0x150] sm:$0xff]
    %v502 = vld [vmem:[#allocation8 + $0x158] sm:$0xff]
    %v503 = vld [vmem:[#allocation8 + $0x160] sm:$0xff]
    %v504 = vld [vmem:[#allocation8 + $0x168] sm:$0xff]
    %v505 = vld [vmem:[#allocation8 + $0x170] sm:$0xff]
    %v506 = vld [vmem:[#allocation8 + $0x178] sm:$0xff]
    %v507 = vld [vmem:[#allocation8 + $0x180] sm:$0xff]
    %v508 = vld [vmem:[#allocation8 + $0x188] sm:$0xff]
    %v509 = vld [vmem:[#allocation8 + $0x190] sm:$0xff]
    %v510 = vld [vmem:[#allocation8 + $0x198] sm:$0xff]
    %v511 = vld [vmem:[#allocation8 + $0x1a0] sm:$0xff]
    %v512 = vld [vmem:[#allocation8 + $0x1a8] sm:$0xff]
    %v513 = vld [vmem:[#allocation8 + $0x1b0] sm:$0xff]
    %v514 = vld [vmem:[#allocation8 + $0x1b8] sm:$0xff]
    %v515 = vld [vmem:[#allocation8 + $0x1c0] sm:$0xff]
    %v516 = vld [vmem:[#allocation8 + $0x1c8] sm:$0xff]
    %v517 = vld [vmem:[#allocation8 + $0x1d0] sm:$0xff]
    %v518 = vld [vmem:[#allocation8 + $0x1d8] sm:$0xff]
    %v519 = vld [vmem:[#allocation8 + $0x1e0] sm:$0xff]
    %v520 = vld [vmem:[#allocation8 + $0x1e8] sm:$0xff]
    %v521 = vld [vmem:[#allocation8 + $0x1f0] sm:$0xff]
    %v522 = vld [vmem:[#allocation8 + $0x1f8] sm:$0xff]
    %v523 = vld [vmem:[#allocation8 + $0x200] sm:$0xff]
    %v524 = vld [vmem:[#allocation8 + $0x208] sm:$0xff]
    %v525 = vld [vmem:[#allocation8 + $0x210] sm:$0xff]
    %v526 = vld [vmem:[#allocation8 + $0x218] sm:$0xff]
    %v527 = vld [vmem:[#allocation8 + $0x220] sm:$0xff]
    %v528 = vld [vmem:[#allocation8 + $0x228] sm:$0xff]
    %v529 = vld [vmem:[#allocation8 + $0x230] sm:$0xff]
    %v530 = vld [vmem:[#allocation8 + $0x238] sm:$0xff]
    %v531 = vld [vmem:[#allocation8 + $0x240] sm:$0xff]
    %v532 = vld [vmem:[#allocation8 + $0x248] sm:$0xff]
    %v533 = vld [vmem:[#allocation8 + $0x250] sm:$0xff]
    %v534 = vld [vmem:[#allocation8 + $0x258] sm:$0xff]
    %v535 = vld [vmem:[#allocation8 + $0x260] sm:$0xff]
    %v536 = vld [vmem:[#allocation8 + $0x268] sm:$0xff]
    %v537 = vld [vmem:[#allocation8 + $0x270] sm:$0xff]
    %v538 = vld [vmem:[#allocation8 + $0x278] sm:$0xff]
    %v539 = vld [vmem:[#allocation8 + $0x280] sm:$0xff]
    %v540 = vld [vmem:[#allocation8 + $0x288] sm:$0xff]
    %v541 = vld [vmem:[#allocation8 + $0x290] sm:$0xff]
    %v542 = vld [vmem:[#allocation8 + $0x298] sm:$0xff]
    %v543 = vld [vmem:[#allocation8 + $0x2a0] sm:$0xff]
    %v544 = vld [vmem:[#allocation8 + $0x2a8] sm:$0xff]
    %v545 = vld [vmem:[#allocation8 + $0x2b0] sm:$0xff]
    %v546 = vld [vmem:[#allocation8 + $0x2b8] sm:$0xff]
    %v547 = vld [vmem:[#allocation8 + $0x2c0] sm:$0xff]
    %v548 = vld [vmem:[#allocation8 + $0x2c8] sm:$0xff]
    %v549 = vld [vmem:[#allocation8 + $0x2d0] sm:$0xff]
    %v550 = vld [vmem:[#allocation8 + $0x2d8] sm:$0xff]
    %v551 = vld [vmem:[#allocation8 + $0x2e0] sm:$0xff]
    %v552 = vld [vmem:[#allocation8 + $0x2e8] sm:$0xff]
    %v553 = vld [vmem:[#allocation8 + $0x2f0] sm:$0xff]
    %v554 = vld [vmem:[#allocation8 + $0x2f8] sm:$0xff]
    %v555 = vld [vmem:[#allocation8 + $0x300] sm:$0xff]
    %v556 = vld [vmem:[#allocation8 + $0x308] sm:$0xff]
    %v557 = vld [vmem:[#allocation8 + $0x310] sm:$0xff]
    %v558 = vld [vmem:[#allocation8 + $0x318] sm:$0xff]
    %v559 = vld [vmem:[#allocation8 + $0x320] sm:$0xff]
    %v560 = vld [vmem:[#allocation8 + $0x328] sm:$0xff]
    %v561 = vld [vmem:[#allocation8 + $0x330] sm:$0xff]
    %v562 = vld [vmem:[#allocation8 + $0x338] sm:$0xff]
    %v563 = vld [vmem:[#allocation8 + $0x340] sm:$0xff]
    %v564 = vld [vmem:[#allocation8 + $0x348] sm:$0xff]
    %v565 = vld [vmem:[#allocation8 + $0x350] sm:$0xff]
    %v566 = vld [vmem:[#allocation8 + $0x358] sm:$0xff]
    %v567 = vld [vmem:[#allocation8 + $0x360] sm:$0xff]
    %v568 = vld [vmem:[#allocation8 + $0x368] sm:$0xff]
    %v569 = vld [vmem:[#allocation8 + $0x370] sm:$0xff]
    %v570 = vld [vmem:[#allocation8 + $0x378] sm:$0xff]
    %v571 = vld [vmem:[#allocation8 + $0x380] sm:$0xff]
    %v572 = vld [vmem:[#allocation8 + $0x388] sm:$0xff]
    %v573 = vld [vmem:[#allocation8 + $0x390] sm:$0xff]
    %v574 = vld [vmem:[#allocation8 + $0x398] sm:$0xff]
    %v575 = vld [vmem:[#allocation8 + $0x3a0] sm:$0xff]
    %v576 = vld [vmem:[#allocation8 + $0x3a8] sm:$0xff]
    %v577 = vld [vmem:[#allocation8 + $0x3b0] sm:$0xff]
    %v578 = vld [vmem:[#allocation8 + $0x3b8] sm:$0xff]
    %v579 = vld [vmem:[#allocation8 + $0x3c0] sm:$0xff]
    %v580 = vld [vmem:[#allocation8 + $0x3c8] sm:$0xff]
    %v581 = vld [vmem:[#allocation8 + $0x3d0] sm:$0xff]
    %v582 = vld [vmem:[#allocation8 + $0x3d8] sm:$0xff]
    %v583 = vld [vmem:[#allocation8 + $0x3e0] sm:$0xff]
    %v584 = vld [vmem:[#allocation8 + $0x3e8] sm:$0xff]
    %v585 = vld [vmem:[#allocation8 + $0x3f0] sm:$0xff]
    %v586 = vld [vmem:[#allocation8 + $0x3f8] sm:$0xff]
    %v587 = vld [vmem:[#allocation8 + $0x400] sm:$0xff]
    %v588 = vld [vmem:[#allocation8 + $0x408] sm:$0xff]
    %v589 = vld [vmem:[#allocation8 + $0x410] sm:$0xff]
    %v590 = vld [vmem:[#allocation8 + $0x418] sm:$0xff]
    %v591 = vld [vmem:[#allocation8 + $0x420] sm:$0xff]
    %v592 = vld [vmem:[#allocation8 + $0x428] sm:$0xff]
    %v593 = vld [vmem:[#allocation8 + $0x430] sm:$0xff]
    %v594 = vld [vmem:[#allocation8 + $0x438] sm:$0xff]
    %v595 = vld [vmem:[#allocation8 + $0x440] sm:$0xff]
    %v596 = vld [vmem:[#allocation8 + $0x448] sm:$0xff]
    %v597 = vld [vmem:[#allocation8 + $0x450] sm:$0xff]
    %v598 = vld [vmem:[#allocation8 + $0x458] sm:$0xff]
    %v599 = vld [vmem:[#allocation8 + $0x460] sm:$0xff]
    %v600 = vld [vmem:[#allocation8 + $0x468] sm:$0xff]
    %v601 = vld [vmem:[#allocation8 + $0x470] sm:$0xff]
    %v602 = vld [vmem:[#allocation8 + $0x478] sm:$0xff]
    %v603 = vld [vmem:[#allocation8 + $0x480] sm:$0xff]
    %v604 = vld [vmem:[#allocation8 + $0x488] sm:$0xff]
    %v605 = vld [vmem:[#allocation8 + $0x490] sm:$0xff]
    %v606 = vld [vmem:[#allocation8 + $0x498] sm:$0xff]
    %v607 = vld [vmem:[#allocation8 + $0x4a0] sm:$0xff]
    %v608 = vld [vmem:[#allocation8 + $0x4a8] sm:$0xff]
    %v609 = vld [vmem:[#allocation8 + $0x4b0] sm:$0xff]
    %v610 = vld [vmem:[#allocation8 + $0x4b8] sm:$0xff]
    %v611 = vld [vmem:[#allocation8 + $0x4c0] sm:$0xff]
    %v612 = vld [vmem:[#allocation8 + $0x4c8] sm:$0xff]
    %v613 = vld [vmem:[#allocation8 + $0x4d0] sm:$0xff]
    %v614 = vld [vmem:[#allocation8 + $0x4d8] sm:$0xff]
    %v615 = vld [vmem:[#allocation8 + $0x4e0] sm:$0xff]
    %v616 = vld [vmem:[#allocation8 + $0x4e8] sm:$0xff]
    %v617 = vld [vmem:[#allocation8 + $0x4f0] sm:$0xff]
    %v618 = vld [vmem:[#allocation8 + $0x4f8] sm:$0xff]
    %v619 = vld [vmem:[#allocation8 + $0x500] sm:$0xff]
    %v620 = vld [vmem:[#allocation8 + $0x508] sm:$0xff]
    %v621 = vld [vmem:[#allocation8 + $0x510] sm:$0xff]
    %v622 = vld [vmem:[#allocation8 + $0x518] sm:$0xff]
    %v623 = vld [vmem:[#allocation8 + $0x520] sm:$0xff]
    %v624 = vld [vmem:[#allocation8 + $0x528] sm:$0xff]
    %v625 = vld [vmem:[#allocation8 + $0x530] sm:$0xff]
    %v626 = vld [vmem:[#allocation8 + $0x538] sm:$0xff]
    %v627 = vld [vmem:[#allocation8 + $0x540] sm:$0xff]
    %v628 = vld [vmem:[#allocation8 + $0x548] sm:$0xff]
    %v629 = vld [vmem:[#allocation8 + $0x550] sm:$0xff]
    %v630 = vld [vmem:[#allocation8 + $0x558] sm:$0xff]
    %v631 = vld [vmem:[#allocation8 + $0x560] sm:$0xff]
    %v632 = vld [vmem:[#allocation8 + $0x568] sm:$0xff]
    %v633 = vld [vmem:[#allocation8 + $0x570] sm:$0xff]
    %v634 = vld [vmem:[#allocation8 + $0x578] sm:$0xff]
    %v635 = vld [vmem:[#allocation8 + $0x580] sm:$0xff]
    %v636 = vld [vmem:[#allocation8 + $0x588] sm:$0xff]
    %v637 = vld [vmem:[#allocation8 + $0x590] sm:$0xff]
    %v638 = vld [vmem:[#allocation8 + $0x598] sm:$0xff]
    %v639 = vld [vmem:[#allocation8 + $0x5a0] sm:$0xff]
    %v640 = vld [vmem:[#allocation8 + $0x5a8] sm:$0xff]
    %v641 = vld [vmem:[#allocation8 + $0x5b0] sm:$0xff]
    %v642 = vld [vmem:[#allocation8 + $0x5b8] sm:$0xff]
    %v643 = vld [vmem:[#allocation8 + $0x5c0] sm:$0xff]
    %v644 = vld [vmem:[#allocation8 + $0x5c8] sm:$0xff]
    %v645 = vld [vmem:[#allocation8 + $0x5d0] sm:$0xff]
    %v646 = vld [vmem:[#allocation8 + $0x5d8] sm:$0xff]
    %v647 = vld [vmem:[#allocation8 + $0x5e0] sm:$0xff]
    %v648 = vld [vmem:[#allocation8 + $0x5e8] sm:$0xff]
    %v649 = vld [vmem:[#allocation8 + $0x5f0] sm:$0xff]
    %v650 = vld [vmem:[#allocation8 + $0x5f8] sm:$0xff]
    %v651 = vld [vmem:[#allocation8 + $0x600] sm:$0xff]
    %v652 = vld [vmem:[#allocation8 + $0x608] sm:$0xff]
    %v653 = vld [vmem:[#allocation8 + $0x610] sm:$0xff]
    %v654 = vld [vmem:[#allocation8 + $0x618] sm:$0xff]
    %v655 = vld [vmem:[#allocation8 + $0x620] sm:$0xff]
    %v656 = vld [vmem:[#allocation8 + $0x628] sm:$0xff]
    %v657 = vld [vmem:[#allocation8 + $0x630] sm:$0xff]
    %v658 = vld [vmem:[#allocation8 + $0x638] sm:$0xff]
    %v659 = vld [vmem:[#allocation8 + $0x640] sm:$0xff]
    %v660 = vld [vmem:[#allocation8 + $0x648] sm:$0xff]
    %v661 = vld [vmem:[#allocation8 + $0x650] sm:$0xff]
    %v662 = vld [vmem:[#allocation8 + $0x658] sm:$0xff]
    %v663 = vld [vmem:[#allocation8 + $0x660] sm:$0xff]
    %v664 = vld [vmem:[#allocation8 + $0x668] sm:$0xff]
    %v665 = vld [vmem:[#allocation8 + $0x670] sm:$0xff]
    %v666 = vld [vmem:[#allocation8 + $0x678] sm:$0xff]
    %v667 = vld [vmem:[#allocation8 + $0x680] sm:$0xff]
    %v668 = vld [vmem:[#allocation8 + $0x688] sm:$0xff]
    %v669 = vld [vmem:[#allocation8 + $0x690] sm:$0xff]
    %v670 = vld [vmem:[#allocation8 + $0x698] sm:$0xff]
    %v671 = vld [vmem:[#allocation8 + $0x6a0] sm:$0xff]
    %v672 = vld [vmem:[#allocation8 + $0x6a8] sm:$0xff]
    %v673 = vld [vmem:[#allocation8 + $0x6b0] sm:$0xff]
    %v674 = vld [vmem:[#allocation8 + $0x6b8] sm:$0xff]
    %v675 = vld [vmem:[#allocation8 + $0x6c0] sm:$0xff]
    %v676 = vld [vmem:[#allocation8 + $0x6c8] sm:$0xff]
    %v677 = vld [vmem:[#allocation8 + $0x6d0] sm:$0xff]
    %v678 = vld [vmem:[#allocation8 + $0x6d8] sm:$0xff]
    %v679 = vld [vmem:[#allocation8 + $0x6e0] sm:$0xff]
    %v680 = vld [vmem:[#allocation8 + $0x6e8] sm:$0xff]
    %v681 = vld [vmem:[#allocation8 + $0x6f0] sm:$0xff]
    %v682 = vld [vmem:[#allocation8 + $0x6f8] sm:$0xff]
    %v683 = vld [vmem:[#allocation8 + $0x700] sm:$0xff]
    %v684 = vld [vmem:[#allocation8 + $0x708] sm:$0xff]
    %v685 = vld [vmem:[#allocation8 + $0x710] sm:$0xff]
    %v686 = vld [vmem:[#allocation8 + $0x718] sm:$0xff]
    %v687 = vld [vmem:[#allocation8 + $0x720] sm:$0xff]
    %v688 = vld [vmem:[#allocation8 + $0x728] sm:$0xff]
    %v689 = vld [vmem:[#allocation8 + $0x730] sm:$0xff]
    %v690 = vld [vmem:[#allocation8 + $0x738] sm:$0xff]
    %v691 = vld [vmem:[#allocation8 + $0x740] sm:$0xff]
    %v692 = vld [vmem:[#allocation8 + $0x748] sm:$0xff]
    %v693 = vld [vmem:[#allocation8 + $0x750] sm:$0xff]
    %v694 = vld [vmem:[#allocation8 + $0x758] sm:$0xff]
    %v695 = vld [vmem:[#allocation8 + $0x760] sm:$0xff]
    %v696 = vld [vmem:[#allocation8 + $0x768] sm:$0xff]
    %v697 = vld [vmem:[#allocation8 + $0x770] sm:$0xff]
    %v698 = vld [vmem:[#allocation8 + $0x778] sm:$0xff]
    %v699 = vld [vmem:[#allocation8 + $0x780] sm:$0xff]
    %v700 = vld [vmem:[#allocation8 + $0x788] sm:$0xff]
    %v701 = vld [vmem:[#allocation8 + $0x790] sm:$0xff]
    %v702 = vld [vmem:[#allocation8 + $0x798] sm:$0xff]
    %v703 = vld [vmem:[#allocation8 + $0x7a0] sm:$0xff]
    %v704 = vld [vmem:[#allocation8 + $0x7a8] sm:$0xff]
    %v705 = vld [vmem:[#allocation8 + $0x7b0] sm:$0xff]
    %v706 = vld [vmem:[#allocation8 + $0x7b8] sm:$0xff]
    %v707 = vld [vmem:[#allocation8 + $0x7c0] sm:$0xff]
    %v708 = vld [vmem:[#allocation8 + $0x7c8] sm:$0xff]
    %v709 = vld [vmem:[#allocation8 + $0x7d0] sm:$0xff]
    %v710 = vld [vmem:[#allocation8 + $0x7d8] sm:$0xff]
    %v711 = vld [vmem:[#allocation8 + $0x7e0] sm:$0xff]
    %v712 = vld [vmem:[#allocation8 + $0x7e8] sm:$0xff]
    %v713 = vld [vmem:[#allocation8 + $0x7f0] sm:$0xff]
    %v714 = vld [vmem:[#allocation8 + $0x7f8] sm:$0xff]
    %v715 = vld [vmem:[#allocation8 + $0x800] sm:$0xff]
    %v716 = vld [vmem:[#allocation8 + $0x808] sm:$0xff]
    %v717 = vld [vmem:[#allocation8 + $0x810] sm:$0xff]
    %v718 = vld [vmem:[#allocation8 + $0x818] sm:$0xff]
    %v719 = vld [vmem:[#allocation8 + $0x820] sm:$0xff]
    %v720 = vld [vmem:[#allocation8 + $0x828] sm:$0xff]
    %v721 = vld [vmem:[#allocation8 + $0x830] sm:$0xff]
    %v722 = vld [vmem:[#allocation8 + $0x838] sm:$0xff]
    %v723 = vld [vmem:[#allocation8 + $0x840] sm:$0xff]
    %v724 = vld [vmem:[#allocation8 + $0x848] sm:$0xff]
    %v725 = vld [vmem:[#allocation8 + $0x850] sm:$0xff]
    %v726 = vld [vmem:[#allocation8 + $0x858] sm:$0xff]
    %v727 = vld [vmem:[#allocation8 + $0x860] sm:$0xff]
    %v728 = vld [vmem:[#allocation8 + $0x868] sm:$0xff]
    %v729 = vld [vmem:[#allocation8 + $0x870] sm:$0xff]
    %v730 = vld [vmem:[#allocation8 + $0x878] sm:$0xff]
    %v731 = vld [vmem:[#allocation8 + $0x880] sm:$0xff]
    %v732 = vld [vmem:[#allocation8 + $0x888] sm:$0xff]
    %v733 = vld [vmem:[#allocation8 + $0x890] sm:$0xff]
    %v734 = vld [vmem:[#allocation8 + $0x898] sm:$0xff]
    %v735 = vld [vmem:[#allocation8 + $0x8a0] sm:$0xff]
    %v736 = vld [vmem:[#allocation8 + $0x8a8] sm:$0xff]
    %v737 = vld [vmem:[#allocation8 + $0x8b0] sm:$0xff]
    %v738 = vld [vmem:[#allocation8 + $0x8b8] sm:$0xff]
    %v739 = vld [vmem:[#allocation8 + $0x8c0] sm:$0xff]
    %v740 = vld [vmem:[#allocation8 + $0x8c8] sm:$0xff]
    %v741 = vld [vmem:[#allocation8 + $0x8d0] sm:$0xff]
    %v742 = vld [vmem:[#allocation8 + $0x8d8] sm:$0xff]
    %v743 = vld [vmem:[#allocation8 + $0x8e0] sm:$0xff]
    %v744 = vld [vmem:[#allocation8 + $0x8e8] sm:$0xff]
    %v745 = vld [vmem:[#allocation8 + $0x8f0] sm:$0xff]
    %v746 = vld [vmem:[#allocation8 + $0x8f8] sm:$0xff]
    %v747 = vld [vmem:[#allocation8 + $0x900] sm:$0xff]
    %v748 = vld [vmem:[#allocation8 + $0x908] sm:$0xff]
    %v749 = vld [vmem:[#allocation8 + $0x910] sm:$0xff]
    %v750 = vld [vmem:[#allocation8 + $0x918] sm:$0xff]
    %v751 = vld [vmem:[#allocation8 + $0x920] sm:$0xff]
    %v752 = vld [vmem:[#allocation8 + $0x928] sm:$0xff]
    %v753 = vld [vmem:[#allocation8 + $0x930] sm:$0xff]
    %v754 = vld [vmem:[#allocation8 + $0x938] sm:$0xff]
    %v755 = vld [vmem:[#allocation8 + $0x940] sm:$0xff]
    %v756 = vld [vmem:[#allocation8 + $0x948] sm:$0xff]
    %v757 = vld [vmem:[#allocation8 + $0x950] sm:$0xff]
    %v758 = vld [vmem:[#allocation8 + $0x958] sm:$0xff]
    %v759 = vld [vmem:[#allocation8 + $0x960] sm:$0xff]
    %v760 = vld [vmem:[#allocation8 + $0x968] sm:$0xff]
    %v761 = vld [vmem:[#allocation8 + $0x970] sm:$0xff]
    %v762 = vld [vmem:[#allocation8 + $0x978] sm:$0xff]
    %v763 = vld [vmem:[#allocation8 + $0x980] sm:$0xff]
    %v764 = vld [vmem:[#allocation8 + $0x988] sm:$0xff]
    %v765 = vld [vmem:[#allocation8 + $0x990] sm:$0xff]
    %v766 = vld [vmem:[#allocation8 + $0x998] sm:$0xff]
    %v767 = vld [vmem:[#allocation8 + $0x9a0] sm:$0xff]
    %v768 = vld [vmem:[#allocation8 + $0x9a8] sm:$0xff]
    %v769 = vld [vmem:[#allocation8 + $0x9b0] sm:$0xff]
    %v770 = vld [vmem:[#allocation8 + $0x9b8] sm:$0xff]
    %v771 = vld [vmem:[#allocation8 + $0x9c0] sm:$0xff]
    %v772 = vld [vmem:[#allocation8 + $0x9c8] sm:$0xff]
    %v773 = vld [vmem:[#allocation8 + $0x9d0] sm:$0xff]
    %v774 = vld [vmem:[#allocation8 + $0x9d8] sm:$0xff]
    %v775 = vld [vmem:[#allocation8 + $0x9e0] sm:$0xff]
    %v776 = vld [vmem:[#allocation8 + $0x9e8] sm:$0xff]
    %v777 = vld [vmem:[#allocation8 + $0x9f0] sm:$0xff]
    %v778 = vld [vmem:[#allocation8 + $0x9f8] sm:$0xff]
    %v779 = vld [vmem:[#allocation8 + $0xa00] sm:$0xff]
    %v780 = vld [vmem:[#allocation8 + $0xa08] sm:$0xff]
    %v781 = vld [vmem:[#allocation8 + $0xa10] sm:$0xff]
    %v782 = vld [vmem:[#allocation8 + $0xa18] sm:$0xff]
    %v783 = vld [vmem:[#allocation8 + $0xa20] sm:$0xff]
    %v784 = vld [vmem:[#allocation8 + $0xa28] sm:$0xff]
    %v785 = vld [vmem:[#allocation8 + $0xa30] sm:$0xff]
    %v786 = vld [vmem:[#allocation8 + $0xa38] sm:$0xff]
    %v787 = vld [vmem:[#allocation8 + $0xa40] sm:$0xff]
    %v788 = vld [vmem:[#allocation8 + $0xa48] sm:$0xff]
    %v789 = vld [vmem:[#allocation8 + $0xa50] sm:$0xff]
    %v790 = vld [vmem:[#allocation8 + $0xa58] sm:$0xff]
    %v791 = vld [vmem:[#allocation8 + $0xa60] sm:$0xff]
    %v792 = vld [vmem:[#allocation8 + $0xa68] sm:$0xff]
    %v793 = vld [vmem:[#allocation8 + $0xa70] sm:$0xff]
    %v794 = vld [vmem:[#allocation8 + $0xa78] sm:$0xff]
    %v795 = vld [vmem:[#allocation8 + $0xa80] sm:$0xff]
    %v796 = vld [vmem:[#allocation8 + $0xa88] sm:$0xff]
    %v797 = vld [vmem:[#allocation8 + $0xa90] sm:$0xff]
    %v798 = vld [vmem:[#allocation8 + $0xa98] sm:$0xff]
    %v799 = vld [vmem:[#allocation8 + $0xaa0] sm:$0xff]
    %v800 = vld [vmem:[#allocation8 + $0xaa8] sm:$0xff]
    %v801 = vld [vmem:[#allocation8 + $0xab0] sm:$0xff]
    %v802 = vld [vmem:[#allocation8 + $0xab8] sm:$0xff]
    %v803 = vld [vmem:[#allocation8 + $0xac0] sm:$0xff]
    %v804 = vld [vmem:[#allocation8 + $0xac8] sm:$0xff]
    %v805 = vld [vmem:[#allocation8 + $0xad0] sm:$0xff]
    %v806 = vld [vmem:[#allocation8 + $0xad8] sm:$0xff]
    %v807 = vld [vmem:[#allocation8 + $0xae0] sm:$0xff]
    %v808 = vld [vmem:[#allocation8 + $0xae8] sm:$0xff]
    %v809 = vld [vmem:[#allocation8 + $0xaf0] sm:$0xff]
    %v810 = vld [vmem:[#allocation8 + $0xaf8] sm:$0xff]
    %v811 = vld [vmem:[#allocation8 + $0xb00] sm:$0xff]
    %v812 = vld [vmem:[#allocation8 + $0xb08] sm:$0xff]
    %v813 = vld [vmem:[#allocation8 + $0xb10] sm:$0xff]
    %v814 = vld [vmem:[#allocation8 + $0xb18] sm:$0xff]
    %v815 = vld [vmem:[#allocation8 + $0xb20] sm:$0xff]
    %v816 = vld [vmem:[#allocation8 + $0xb28] sm:$0xff]
    %v817 = vld [vmem:[#allocation8 + $0xb30] sm:$0xff]
    %v818 = vld [vmem:[#allocation8 + $0xb38] sm:$0xff]
    %v819 = vld [vmem:[#allocation8 + $0xb40] sm:$0xff]
    %v820 = vld [vmem:[#allocation8 + $0xb48] sm:$0xff]
    %v821 = vld [vmem:[#allocation8 + $0xb50] sm:$0xff]
    %v822 = vld [vmem:[#allocation8 + $0xb58] sm:$0xff]
    %v823 = vld [vmem:[#allocation8 + $0xb60] sm:$0xff]
    %v824 = vld [vmem:[#allocation8 + $0xb68] sm:$0xff]
    %v825 = vld [vmem:[#allocation8 + $0xb70] sm:$0xff]
    %v826 = vld [vmem:[#allocation8 + $0xb78] sm:$0xff]
    %v827 = vld [vmem:[#allocation8 + $0xb80] sm:$0xff]
    %v828 = vld [vmem:[#allocation8 + $0xb88] sm:$0xff]
    %v829 = vld [vmem:[#allocation8 + $0xb90] sm:$0xff]
    %v830 = vld [vmem:[#allocation8 + $0xb98] sm:$0xff]
    %v831 = vld [vmem:[#allocation8 + $0xba0] sm:$0xff]
    %v832 = vld [vmem:[#allocation8 + $0xba8] sm:$0xff]
    %v833 = vld [vmem:[#allocation8 + $0xbb0] sm:$0xff]
    %v834 = vld [vmem:[#allocation8 + $0xbb8] sm:$0xff]
    %v835 = vld [vmem:[#allocation8 + $0xbc0] sm:$0xff]
    %v836 = vld [vmem:[#allocation8 + $0xbc8] sm:$0xff]
    %v837 = vld [vmem:[#allocation8 + $0xbd0] sm:$0xff]
    %v838 = vld [vmem:[#allocation8 + $0xbd8] sm:$0xff]
    %v839 = vld [vmem:[#allocation8 + $0xbe0] sm:$0xff]
    %v840 = vld [vmem:[#allocation8 + $0xbe8] sm:$0xff]
    %v841 = vld [vmem:[#allocation8 + $0xbf0] sm:$0xff]
    %v842 = vld [vmem:[#allocation8 + $0xbf8] sm:$0xff]
    %v843 = vld [vmem:[#allocation8 + $0xc00] sm:$0xff]
    %v844 = vld [vmem:[#allocation8 + $0xc08] sm:$0xff]
    %v845 = vld [vmem:[#allocation8 + $0xc10] sm:$0xff]
    %v846 = vld [vmem:[#allocation8 + $0xc18] sm:$0xff]
    %v847 = vld [vmem:[#allocation8 + $0xc20] sm:$0xff]
    %v848 = vld [vmem:[#allocation8 + $0xc28] sm:$0xff]
    %v849 = vld [vmem:[#allocation8 + $0xc30] sm:$0xff]
    %v850 = vld [vmem:[#allocation8 + $0xc38] sm:$0xff]
    %v851 = vld [vmem:[#allocation8 + $0xc40] sm:$0xff]
    %v852 = vld [vmem:[#allocation8 + $0xc48] sm:$0xff]
    %v853 = vld [vmem:[#allocation8 + $0xc50] sm:$0xff]
    %v854 = vld [vmem:[#allocation8 + $0xc58] sm:$0xff]
    %v855 = vld [vmem:[#allocation8 + $0xc60] sm:$0xff]
    %v856 = vld [vmem:[#allocation8 + $0xc68] sm:$0xff]
    %v857 = vld [vmem:[#allocation8 + $0xc70] sm:$0xff]
    %v858 = vld [vmem:[#allocation8 + $0xc78] sm:$0xff]
    %v859 = vld [vmem:[#allocation8 + $0xc80] sm:$0xff]
    %v860 = vld [vmem:[#allocation8 + $0xc88] sm:$0xff]
    %v861 = vld [vmem:[#allocation8 + $0xc90] sm:$0xff]
    %v862 = vld [vmem:[#allocation8 + $0xc98] sm:$0xff]
    %v863 = vld [vmem:[#allocation8 + $0xca0] sm:$0xff]
    %v864 = vld [vmem:[#allocation8 + $0xca8] sm:$0xff]
    %v865 = vld [vmem:[#allocation8 + $0xcb0] sm:$0xff]
    %v866 = vld [vmem:[#allocation8 + $0xcb8] sm:$0xff]
    %v867 = vld [vmem:[#allocation8 + $0xcc0] sm:$0xff]
    %v868 = vld [vmem:[#allocation8 + $0xcc8] sm:$0xff]
    %v869 = vld [vmem:[#allocation8 + $0xcd0] sm:$0xff]
    %v870 = vld [vmem:[#allocation8 + $0xcd8] sm:$0xff]
    %v871 = vld [vmem:[#allocation8 + $0xce0] sm:$0xff]
    %v872 = vld [vmem:[#allocation8 + $0xce8] sm:$0xff]
    %v873 = vld [vmem:[#allocation8 + $0xcf0] sm:$0xff]
    %v874 = vld [vmem:[#allocation8 + $0xcf8] sm:$0xff]
    %v875 = vld [vmem:[#allocation8 + $0xd00] sm:$0xff]
    %v876 = vld [vmem:[#allocation8 + $0xd08] sm:$0xff]
    %v877 = vld [vmem:[#allocation8 + $0xd10] sm:$0xff]
    %v878 = vld [vmem:[#allocation8 + $0xd18] sm:$0xff]
    %v879 = vld [vmem:[#allocation8 + $0xd20] sm:$0xff]
    %v880 = vld [vmem:[#allocation8 + $0xd28] sm:$0xff]
    %v881 = vld [vmem:[#allocation8 + $0xd30] sm:$0xff]
    %v882 = vld [vmem:[#allocation8 + $0xd38] sm:$0xff]
    %v883 = vld [vmem:[#allocation8 + $0xd40] sm:$0xff]
    %v884 = vld [vmem:[#allocation8 + $0xd48] sm:$0xff]
    %v885 = vld [vmem:[#allocation8 + $0xd50] sm:$0xff]
    %v886 = vld [vmem:[#allocation8 + $0xd58] sm:$0xff]
    %v887 = vld [vmem:[#allocation8 + $0xd60] sm:$0xff]
    %v888 = vld [vmem:[#allocation8 + $0xd68] sm:$0xff]
    %v889 = vld [vmem:[#allocation8 + $0xd70] sm:$0xff]
    %v890 = vld [vmem:[#allocation8 + $0xd78] sm:$0xff]
    %v891 = vld [vmem:[#allocation8 + $0xd80] sm:$0xff]
    %v892 = vld [vmem:[#allocation8 + $0xd88] sm:$0xff]
    %v893 = vld [vmem:[#allocation8 + $0xd90] sm:$0xff]
    %v894 = vld [vmem:[#allocation8 + $0xd98] sm:$0xff]
    %v895 = vld [vmem:[#allocation8 + $0xda0] sm:$0xff]
    %v896 = vld [vmem:[#allocation8 + $0xda8] sm:$0xff]
    %v897 = vld [vmem:[#allocation8 + $0xdb0] sm:$0xff]
    %v898 = vld [vmem:[#allocation8 + $0xdb8] sm:$0xff]
    %v899 = vld [vmem:[#allocation8 + $0xdc0] sm:$0xff]
    %v900 = vld [vmem:[#allocation8 + $0xdc8] sm:$0xff]
    %v901 = vld [vmem:[#allocation8 + $0xdd0] sm:$0xff]
    %v902 = vld [vmem:[#allocation8 + $0xdd8] sm:$0xff]
    %v903 = vld [vmem:[#allocation8 + $0xde0] sm:$0xff]
    %v904 = vld [vmem:[#allocation8 + $0xde8] sm:$0xff]
    %v905 = vld [vmem:[#allocation8 + $0xdf0] sm:$0xff]
    %v906 = vld [vmem:[#allocation8 + $0xdf8] sm:$0xff]
    %v907 = vld [vmem:[#allocation8 + $0xe00] sm:$0xff]
    %v908 = vld [vmem:[#allocation8 + $0xe08] sm:$0xff]
    %v909 = vld [vmem:[#allocation8 + $0xe10] sm:$0xff]
    %v910 = vld [vmem:[#allocation8 + $0xe18] sm:$0xff]
    %v911 = vld [vmem:[#allocation8 + $0xe20] sm:$0xff]
    %v912 = vld [vmem:[#allocation8 + $0xe28] sm:$0xff]
    %v913 = vld [vmem:[#allocation8 + $0xe30] sm:$0xff]
    %v914 = vld [vmem:[#allocation8 + $0xe38] sm:$0xff]
    %v915 = vld [vmem:[#allocation8 + $0xe40] sm:$0xff]
    %v916 = vld [vmem:[#allocation8 + $0xe48] sm:$0xff]
    %v917 = vld [vmem:[#allocation8 + $0xe50] sm:$0xff]
    %v918 = vld [vmem:[#allocation8 + $0xe58] sm:$0xff]
    %v919 = vld [vmem:[#allocation8 + $0xe60] sm:$0xff]
    %v920 = vld [vmem:[#allocation8 + $0xe68] sm:$0xff]
    %v921 = vld [vmem:[#allocation8 + $0xe70] sm:$0xff]
    %v922 = vld [vmem:[#allocation8 + $0xe78] sm:$0xff]
    %v923 = vld [vmem:[#allocation8 + $0xe80] sm:$0xff]
    %v924 = vld [vmem:[#allocation8 + $0xe88] sm:$0xff]
    %v925 = vld [vmem:[#allocation8 + $0xe90] sm:$0xff]
    %v926 = vld [vmem:[#allocation8 + $0xe98] sm:$0xff]
    %v927 = vld [vmem:[#allocation8 + $0xea0] sm:$0xff]
    %v928 = vld [vmem:[#allocation8 + $0xea8] sm:$0xff]
    %v929 = vld [vmem:[#allocation8 + $0xeb0] sm:$0xff]
    %v930 = vld [vmem:[#allocation8 + $0xeb8] sm:$0xff]
    %v931 = vld [vmem:[#allocation8 + $0xec0] sm:$0xff]
    %v932 = vld [vmem:[#allocation8 + $0xec8] sm:$0xff]
    %v933 = vld [vmem:[#allocation8 + $0xed0] sm:$0xff]
    %v934 = vld [vmem:[#allocation8 + $0xed8] sm:$0xff]
    %v935 = vld [vmem:[#allocation8 + $0xee0] sm:$0xff]
    %v936 = vld [vmem:[#allocation8 + $0xee8] sm:$0xff]
    %v937 = vld [vmem:[#allocation8 + $0xef0] sm:$0xff]
    %v938 = vld [vmem:[#allocation8 + $0xef8] sm:$0xff]
    %v939 = vld [vmem:[#allocation8 + $0xf00] sm:$0xff]
    %v940 = vld [vmem:[#allocation8 + $0xf08] sm:$0xff]
    %v941 = vld [vmem:[#allocation8 + $0xf10] sm:$0xff]
    %v942 = vld [vmem:[#allocation8 + $0xf18] sm:$0xff]
    %v943 = vld [vmem:[#allocation8 + $0xf20] sm:$0xff]
    %v944 = vld [vmem:[#allocation8 + $0xf28] sm:$0xff]
    %v945 = vld [vmem:[#allocation8 + $0xf30] sm:$0xff]
    %v946 = vld [vmem:[#allocation8 + $0xf38] sm:$0xff]
    %v947 = vld [vmem:[#allocation8 + $0xf40] sm:$0xff]
    %v948 = vld [vmem:[#allocation8 + $0xf48] sm:$0xff]
    %v949 = vld [vmem:[#allocation8 + $0xf50] sm:$0xff]
    %v950 = vld [vmem:[#allocation8 + $0xf58] sm:$0xff]
    %v951 = vld [vmem:[#allocation8 + $0xf60] sm:$0xff]
    %v952 = vld [vmem:[#allocation8 + $0xf68] sm:$0xff]
    %v953 = vld [vmem:[#allocation8 + $0xf70] sm:$0xff]
    %v954 = vld [vmem:[#allocation8 + $0xf78] sm:$0xff]
    %v955 = vld [vmem:[#allocation8 + $0xf80] sm:$0xff]
    %v956 = vld [vmem:[#allocation8 + $0xf88] sm:$0xff]
    %v957 = vld [vmem:[#allocation8 + $0xf90] sm:$0xff]
    %v958 = vld [vmem:[#allocation8 + $0xf98] sm:$0xff]
    %v959 = vld [vmem:[#allocation8 + $0xfa0] sm:$0xff]
    %v960 = vld [vmem:[#allocation8 + $0xfa8] sm:$0xff]
    %v961 = vld [vmem:[#allocation8 + $0xfb0] sm:$0xff]
    %v962 = vld [vmem:[#allocation8 + $0xfb8] sm:$0xff]
    %v963 = vld [vmem:[#allocation8 + $0xfc0] sm:$0xff]
    %v964 = vld [vmem:[#allocation8 + $0xfc8] sm:$0xff]
    %v965 = vld [vmem:[#allocation8 + $0xfd0] sm:$0xff]
    %v966 = vld [vmem:[#allocation8 + $0xfd8] sm:$0xff]
    %v967 = vld [vmem:[#allocation8 + $0xfe0] sm:$0xff]
    %v968 = vld [vmem:[#allocation8 + $0xfe8] sm:$0xff]
    %v969 = vld [vmem:[#allocation8 + $0xff0] sm:$0xff]
    %v970 = vld [vmem:[#allocation8 + $0xff8] sm:$0xff]
    %v971 = vld [vmem:[#allocation8 + $0x1000] sm:$0xff]
    %v972 = vld [vmem:[#allocation8 + $0x1008] sm:$0xff]
    %v973 = vld [vmem:[#allocation8 + $0x1010] sm:$0xff]
    %v974 = vld [vmem:[#allocation8 + $0x1018] sm:$0xff]
    %v975 = vld [vmem:[#allocation8 + $0x1020] sm:$0xff]
    %v976 = vld [vmem:[#allocation8 + $0x1028] sm:$0xff]
    %v977 = vld [vmem:[#allocation8 + $0x1030] sm:$0xff]
    %v978 = vld [vmem:[#allocation8 + $0x1038] sm:$0xff]
    %v979 = vld [vmem:[#allocation8 + $0x1040] sm:$0xff]
    %v980 = vld [vmem:[#allocation8 + $0x1048] sm:$0xff]
    %v981 = vld [vmem:[#allocation8 + $0x1050] sm:$0xff]
    %v982 = vld [vmem:[#allocation8 + $0x1058] sm:$0xff]
    %v983 = vld [vmem:[#allocation8 + $0x1060] sm:$0xff]
    %v984 = vld [vmem:[#allocation8 + $0x1068] sm:$0xff]
    %v985 = vld [vmem:[#allocation8 + $0x1070] sm:$0xff]
    %v986 = vld [vmem:[#allocation8 + $0x1078] sm:$0xff]
    %v987 = vld [vmem:[#allocation8 + $0x1080] sm:$0xff]
    %v988 = vld [vmem:[#allocation8 + $0x1088] sm:$0xff]
    %v989 = vld [vmem:[#allocation8 + $0x1090] sm:$0xff]
    %v990 = vld [vmem:[#allocation8 + $0x1098] sm:$0xff]
    %v991 = vld [vmem:[#allocation8 + $0x10a0] sm:$0xff]
    %v992 = vld [vmem:[#allocation8 + $0x10a8] sm:$0xff]
    %v993 = vld [vmem:[#allocation8 + $0x10b0] sm:$0xff]
    %v994 = vld [vmem:[#allocation8 + $0x10b8] sm:$0xff]
    %v995 = vld [vmem:[#allocation8 + $0x10c0] sm:$0xff]
    %v996 = vld [vmem:[#allocation8 + $0x10c8] sm:$0xff]
    %v997 = vld [vmem:[#allocation8 + $0x10d0] sm:$0xff]
    %v998 = vld [vmem:[#allocation8 + $0x10d8] sm:$0xff]
    %v999 = vld [vmem:[#allocation8 + $0x10e0] sm:$0xff]
    %v1000 = vld [vmem:[#allocation8 + $0x10e8] sm:$0xff]
    %v1001 = vld [vmem:[#allocation8 + $0x10f0] sm:$0xff]
    %v1002 = vld [vmem:[#allocation8 + $0x10f8] sm:$0xff]
    %v1003 = vld [vmem:[#allocation8 + $0x1100] sm:$0xff]
    %v1004 = vld [vmem:[#allocation8 + $0x1108] sm:$0xff]
    %v1005 = vld [vmem:[#allocation8 + $0x1110] sm:$0xff]
    %v1006 = vld [vmem:[#allocation8 + $0x1118] sm:$0xff]
    %v1007 = vld [vmem:[#allocation8 + $0x1120] sm:$0xff]
    %v1008 = vld [vmem:[#allocation8 + $0x1128] sm:$0xff]
    %v1009 = vld [vmem:[#allocation8 + $0x1130] sm:$0xff]
    %v1010 = vld [vmem:[#allocation8 + $0x1138] sm:$0xff]
    %v1011 = vld [vmem:[#allocation8 + $0x1140] sm:$0xff]
    %v1012 = vld [vmem:[#allocation8 + $0x1148] sm:$0xff]
    %v1013 = vld [vmem:[#allocation8 + $0x1150] sm:$0xff]
    %v1014 = vld [vmem:[#allocation8 + $0x1158] sm:$0xff]
    %v1015 = vld [vmem:[#allocation8 + $0x1160] sm:$0xff]
    %v1016 = vld [vmem:[#allocation8 + $0x1168] sm:$0xff]
    %v1017 = vld [vmem:[#allocation8 + $0x1170] sm:$0xff]
    %v1018 = vld [vmem:[#allocation8 + $0x1178] sm:$0xff]
    %v1019 = vld [vmem:[#allocation8 + $0x1180] sm:$0xff]
    %v1020 = vld [vmem:[#allocation8 + $0x1188] sm:$0xff]
    %v1021 = vld [vmem:[#allocation8 + $0x1190] sm:$0xff]
    %v1022 = vld [vmem:[#allocation8 + $0x1198] sm:$0xff]
    %v1023 = vld [vmem:[#allocation8 + $0x11a0] sm:$0xff]
    %v1024 = vld [vmem:[#allocation8 + $0x11a8] sm:$0xff]
    %v1025 = vld [vmem:[#allocation8 + $0x11b0] sm:$0xff]
    %v1026 = vld [vmem:[#allocation8 + $0x11b8] sm:$0xff]
    %v1027 = vld [vmem:[#allocation8 + $0x11c0] sm:$0xff]
    %v1028 = vld [vmem:[#allocation8 + $0x11c8] sm:$0xff]
    %v1029 = vld [vmem:[#allocation8 + $0x11d0] sm:$0xff]
    %v1030 = vld [vmem:[#allocation8 + $0x11d8] sm:$0xff]
    %v1031 = vld [vmem:[#allocation8 + $0x11e0] sm:$0xff]
    %v1032 = vld [vmem:[#allocation8 + $0x11e8] sm:$0xff]
    %v1033 = vld [vmem:[#allocation8 + $0x11f0] sm:$0xff]
    %v1034 = vld [vmem:[#allocation8 + $0x11f8] sm:$0xff]
    %v1035 = vld [vmem:[#allocation8 + $0x1200] sm:$0xff]
    %v1036 = vld [vmem:[#allocation8 + $0x1208] sm:$0xff]
    %v1037 = vld [vmem:[#allocation8 + $0x1210] sm:$0xff]
    %v1038 = vld [vmem:[#allocation8 + $0x1218] sm:$0xff]
    %v1039 = vld [vmem:[#allocation8 + $0x1220] sm:$0xff]
    %v1040 = vld [vmem:[#allocation8 + $0x1228] sm:$0xff]
    %v1041 = vld [vmem:[#allocation8 + $0x1230] sm:$0xff]
    %v1042 = vld [vmem:[#allocation8 + $0x1238] sm:$0xff]
    %v1043 = vld [vmem:[#allocation8 + $0x1240] sm:$0xff]
    %v1044 = vld [vmem:[#allocation8 + $0x1248] sm:$0xff]
    %v1045 = vld [vmem:[#allocation8 + $0x1250] sm:$0xff]
    %v1046 = vld [vmem:[#allocation8 + $0x1258] sm:$0xff]
    %v1047 = vld [vmem:[#allocation8 + $0x1260] sm:$0xff]
    %v1048 = vld [vmem:[#allocation8 + $0x1268] sm:$0xff]
    %v1049 = vld [vmem:[#allocation8 + $0x1270] sm:$0xff]
    %v1050 = vld [vmem:[#allocation8 + $0x1278] sm:$0xff]
    %v1051 = vld [vmem:[#allocation8 + $0x1280] sm:$0xff]
    %v1052 = vld [vmem:[#allocation8 + $0x1288] sm:$0xff]
    %v1053 = vld [vmem:[#allocation8 + $0x1290] sm:$0xff]
    %v1054 = vld [vmem:[#allocation8 + $0x1298] sm:$0xff]
    %v1055 = vld [vmem:[#allocation8 + $0x12a0] sm:$0xff]
    %v1056 = vld [vmem:[#allocation8 + $0x12a8] sm:$0xff]
    %v1057 = vld [vmem:[#allocation8 + $0x12b0] sm:$0xff]
    %v1058 = vld [vmem:[#allocation8 + $0x12b8] sm:$0xff]
    %v1059 = vld [vmem:[#allocation8 + $0x12c0] sm:$0xff]
    %v1060 = vld [vmem:[#allocation8 + $0x12c8] sm:$0xff]
    %v1061 = vld [vmem:[#allocation8 + $0x12d0] sm:$0xff]
    %v1062 = vld [vmem:[#allocation8 + $0x12d8] sm:$0xff]
    %v1063 = vld [vmem:[#allocation8 + $0x12e0] sm:$0xff]
    %v1064 = vld [vmem:[#allocation8 + $0x12e8] sm:$0xff]
    %v1065 = vld [vmem:[#allocation8 + $0x12f0] sm:$0xff]
    %v1066 = vld [vmem:[#allocation8 + $0x12f8] sm:$0xff]
    %v1067 = vld [vmem:[#allocation8 + $0x1300] sm:$0xff]
    %v1068 = vld [vmem:[#allocation8 + $0x1308] sm:$0xff]
    %v1069 = vld [vmem:[#allocation8 + $0x1310] sm:$0xff]
    %v1070 = vld [vmem:[#allocation8 + $0x1318] sm:$0xff]
    %v1071 = vld [vmem:[#allocation8 + $0x1320] sm:$0xff]
    %v1072 = vld [vmem:[#allocation8 + $0x1328] sm:$0xff]
    %v1073 = vld [vmem:[#allocation8 + $0x1330] sm:$0xff]
    %v1074 = vld [vmem:[#allocation8 + $0x1338] sm:$0xff]
    %v1075 = vld [vmem:[#allocation8 + $0x1340] sm:$0xff]
    %v1076 = vld [vmem:[#allocation8 + $0x1348] sm:$0xff]
    %v1077 = vld [vmem:[#allocation8 + $0x1350] sm:$0xff]
    %v1078 = vld [vmem:[#allocation8 + $0x1358] sm:$0xff]
    %v1079 = vld [vmem:[#allocation8 + $0x1360] sm:$0xff]
    %v1080 = vld [vmem:[#allocation8 + $0x1368] sm:$0xff]
    %v1081 = vld [vmem:[#allocation8 + $0x1370] sm:$0xff]
    %v1082 = vld [vmem:[#allocation8 + $0x1378] sm:$0xff]
    %v1083 = vld [vmem:[#allocation8 + $0x1380] sm:$0xff]
    %v1084 = vld [vmem:[#allocation8 + $0x1388] sm:$0xff]
    %v1085 = vld [vmem:[#allocation8 + $0x1390] sm:$0xff]
    %v1086 = vld [vmem:[#allocation8 + $0x1398] sm:$0xff]
    %v1087 = vld [vmem:[#allocation8 + $0x13a0] sm:$0xff]
    %v1088 = vld [vmem:[#allocation8 + $0x13a8] sm:$0xff]
    %v1089 = vld [vmem:[#allocation8 + $0x13b0] sm:$0xff]
    %v1090 = vld [vmem:[#allocation8 + $0x13b8] sm:$0xff]
    %v1091 = vld [vmem:[#allocation8 + $0x13c0] sm:$0xff]
    %v1092 = vld [vmem:[#allocation8 + $0x13c8] sm:$0xff]
    %v1093 = vld [vmem:[#allocation8 + $0x13d0] sm:$0xff]
    %v1094 = vld [vmem:[#allocation8 + $0x13d8] sm:$0xff]
    %v1095 = vld [vmem:[#allocation8 + $0x13e0] sm:$0xff]
    %v1096 = vld [vmem:[#allocation8 + $0x13e8] sm:$0xff]
    %v1097 = vld [vmem:[#allocation8 + $0x13f0] sm:$0xff]
    %v1098 = vld [vmem:[#allocation8 + $0x13f8] sm:$0xff]
    %v1099 = vld [vmem:[#allocation8 + $0x1400] sm:$0xff]
    %v1100 = vld [vmem:[#allocation8 + $0x1408] sm:$0xff]
    %v1101 = vld [vmem:[#allocation8 + $0x1410] sm:$0xff]
    %v1102 = vld [vmem:[#allocation8 + $0x1418] sm:$0xff]
    %v1103 = vld [vmem:[#allocation8 + $0x1420] sm:$0xff]
    %v1104 = vld [vmem:[#allocation8 + $0x1428] sm:$0xff]
    %v1105 = vld [vmem:[#allocation8 + $0x1430] sm:$0xff]
    %v1106 = vld [vmem:[#allocation8 + $0x1438] sm:$0xff]
    %v1107 = vld [vmem:[#allocation8 + $0x1440] sm:$0xff]
    %v1108 = vld [vmem:[#allocation8 + $0x1448] sm:$0xff]
    %v1109 = vld [vmem:[#allocation8 + $0x1450] sm:$0xff]
    %v1110 = vld [vmem:[#allocation8 + $0x1458] sm:$0xff]
    %v1111 = vld [vmem:[#allocation8 + $0x1460] sm:$0xff]
    %v1112 = vld [vmem:[#allocation8 + $0x1468] sm:$0xff]
    %v1113 = vld [vmem:[#allocation8 + $0x1470] sm:$0xff]
    %v1114 = vld [vmem:[#allocation8 + $0x1478] sm:$0xff]
    %v1115 = vld [vmem:[#allocation8 + $0x1480] sm:$0xff]
    %v1116 = vld [vmem:[#allocation8 + $0x1488] sm:$0xff]
    %v1117 = vld [vmem:[#allocation8 + $0x1490] sm:$0xff]
    %v1118 = vld [vmem:[#allocation8 + $0x1498] sm:$0xff]
    %v1119 = vld [vmem:[#allocation8 + $0x14a0] sm:$0xff]
    %v1120 = vld [vmem:[#allocation8 + $0x14a8] sm:$0xff]
    %v1121 = vld [vmem:[#allocation8 + $0x14b0] sm:$0xff]
    %v1122 = vld [vmem:[#allocation8 + $0x14b8] sm:$0xff]
    %v1123 = vld [vmem:[#allocation8 + $0x14c0] sm:$0xff]
    %v1124 = vld [vmem:[#allocation8 + $0x14c8] sm:$0xff]
    %v1125 = vld [vmem:[#allocation8 + $0x14d0] sm:$0xff]
    %v1126 = vld [vmem:[#allocation8 + $0x14d8] sm:$0xff]
    %v1127 = vld [vmem:[#allocation8 + $0x14e0] sm:$0xff]
    %v1128 = vld [vmem:[#allocation8 + $0x14e8] sm:$0xff]
    %v1129 = vld [vmem:[#allocation8 + $0x14f0] sm:$0xff]
    %v1130 = vld [vmem:[#allocation8 + $0x14f8] sm:$0xff]
    %v1131 = vld [vmem:[#allocation8 + $0x1500] sm:$0xff]
    %v1132 = vld [vmem:[#allocation8 + $0x1508] sm:$0xff]
    %v1133 = vld [vmem:[#allocation8 + $0x1510] sm:$0xff]
    %v1134 = vld [vmem:[#allocation8 + $0x1518] sm:$0xff]
    %v1135 = vld [vmem:[#allocation8 + $0x1520] sm:$0xff]
    %v1136 = vld [vmem:[#allocation8 + $0x1528] sm:$0xff]
    %v1137 = vld [vmem:[#allocation8 + $0x1530] sm:$0xff]
    %v1138 = vld [vmem:[#allocation8 + $0x1538] sm:$0xff]
    %v1139 = vld [vmem:[#allocation8 + $0x1540] sm:$0xff]
    %v1140 = vld [vmem:[#allocation8 + $0x1548] sm:$0xff]
    %v1141 = vld [vmem:[#allocation8 + $0x1550] sm:$0xff]
    %v1142 = vld [vmem:[#allocation8 + $0x1558] sm:$0xff]
    %v1143 = vld [vmem:[#allocation8 + $0x1560] sm:$0xff]
    %v1144 = vld [vmem:[#allocation8 + $0x1568] sm:$0xff]
    %v1145 = vld [vmem:[#allocation8 + $0x1570] sm:$0xff]
    %v1146 = vld [vmem:[#allocation8 + $0x1578] sm:$0xff]
    %v1147 = vld [vmem:[#allocation8 + $0x1580] sm:$0xff]
    %v1148 = vld [vmem:[#allocation8 + $0x1588] sm:$0xff]
    %v1149 = vld [vmem:[#allocation8 + $0x1590] sm:$0xff]
    %v1150 = vld [vmem:[#allocation8 + $0x1598] sm:$0xff]
    %v1151 = vld [vmem:[#allocation8 + $0x15a0] sm:$0xff]
    %v1152 = vld [vmem:[#allocation8 + $0x15a8] sm:$0xff]
    %v1153 = vld [vmem:[#allocation8 + $0x15b0] sm:$0xff]
    %v1154 = vld [vmem:[#allocation8 + $0x15b8] sm:$0xff]
    %v1155 = vld [vmem:[#allocation8 + $0x15c0] sm:$0xff]
    %v1156 = vld [vmem:[#allocation8 + $0x15c8] sm:$0xff]
    %v1157 = vld [vmem:[#allocation8 + $0x15d0] sm:$0xff]
    %v1158 = vld [vmem:[#allocation8 + $0x15d8] sm:$0xff]
    %v1159 = vld [vmem:[#allocation8 + $0x15e0] sm:$0xff]
    %v1160 = vld [vmem:[#allocation8 + $0x15e8] sm:$0xff]
    %v1161 = vld [vmem:[#allocation8 + $0x15f0] sm:$0xff]
    %v1162 = vld [vmem:[#allocation8 + $0x15f8] sm:$0xff]
    %v1163 = vld [vmem:[#allocation8 + $0x1600] sm:$0xff]
    %v1164 = vld [vmem:[#allocation8 + $0x1608] sm:$0xff]
    %v1165 = vld [vmem:[#allocation8 + $0x1610] sm:$0xff]
    %v1166 = vld [vmem:[#allocation8 + $0x1618] sm:$0xff]
    %v1167 = vld [vmem:[#allocation8 + $0x1620] sm:$0xff]
    %v1168 = vld [vmem:[#allocation8 + $0x1628] sm:$0xff]
    %v1169 = vld [vmem:[#allocation8 + $0x1630] sm:$0xff]
    %v1170 = vld [vmem:[#allocation8 + $0x1638] sm:$0xff]
    %v1171 = vld [vmem:[#allocation8 + $0x1640] sm:$0xff]
    %v1172 = vld [vmem:[#allocation8 + $0x1648] sm:$0xff]
    %v1173 = vld [vmem:[#allocation8 + $0x1650] sm:$0xff]
    %v1174 = vld [vmem:[#allocation8 + $0x1658] sm:$0xff]
    %v1175 = vld [vmem:[#allocation8 + $0x1660] sm:$0xff]
    %v1176 = vld [vmem:[#allocation8 + $0x1668] sm:$0xff]
    %v1177 = vld [vmem:[#allocation8 + $0x1670] sm:$0xff]
    %v1178 = vld [vmem:[#allocation8 + $0x1678] sm:$0xff]
    %v1179 = vld [vmem:[#allocation8 + $0x1680] sm:$0xff]
    %v1180 = vld [vmem:[#allocation8 + $0x1688] sm:$0xff]
    %v1181 = vld [vmem:[#allocation8 + $0x1690] sm:$0xff]
    %v1182 = vld [vmem:[#allocation8 + $0x1698] sm:$0xff]
    %v1183 = vld [vmem:[#allocation8 + $0x16a0] sm:$0xff]
    %v1184 = vld [vmem:[#allocation8 + $0x16a8] sm:$0xff]
    %v1185 = vld [vmem:[#allocation8 + $0x16b0] sm:$0xff]
    %v1186 = vld [vmem:[#allocation8 + $0x16b8] sm:$0xff]
    %v1187 = vld [vmem:[#allocation8 + $0x16c0] sm:$0xff]
    %v1188 = vld [vmem:[#allocation8 + $0x16c8] sm:$0xff]
    %v1189 = vld [vmem:[#allocation8 + $0x16d0] sm:$0xff]
    %v1190 = vld [vmem:[#allocation8 + $0x16d8] sm:$0xff]
    %v1191 = vld [vmem:[#allocation8 + $0x16e0] sm:$0xff]
    %v1192 = vld [vmem:[#allocation8 + $0x16e8] sm:$0xff]
    %v1193 = vld [vmem:[#allocation8 + $0x16f0] sm:$0xff]
    %v1194 = vld [vmem:[#allocation8 + $0x16f8] sm:$0xff]
    %v1195 = vld [vmem:[#allocation8 + $0x1700] sm:$0xff]
    %v1196 = vld [vmem:[#allocation8 + $0x1708] sm:$0xff]
    %v1197 = vld [vmem:[#allocation8 + $0x1710] sm:$0xff]
    %v1198 = vld [vmem:[#allocation8 + $0x1718] sm:$0xff]
    %v1199 = vld [vmem:[#allocation8 + $0x1720] sm:$0xff]
    %v1200 = vld [vmem:[#allocation8 + $0x1728] sm:$0xff]
    %v1201 = vld [vmem:[#allocation8 + $0x1730] sm:$0xff]
    %v1202 = vld [vmem:[#allocation8 + $0x1738] sm:$0xff]
    %v1203 = vld [vmem:[#allocation8 + $0x1740] sm:$0xff]
    %v1204 = vld [vmem:[#allocation8 + $0x1748] sm:$0xff]
    %v1205 = vld [vmem:[#allocation8 + $0x1750] sm:$0xff]
    %v1206 = vld [vmem:[#allocation8 + $0x1758] sm:$0xff]
    %v1207 = vld [vmem:[#allocation8 + $0x1760] sm:$0xff]
    %v1208 = vld [vmem:[#allocation8 + $0x1768] sm:$0xff]
    %v1209 = vld [vmem:[#allocation8 + $0x1770] sm:$0xff]
    %v1210 = vld [vmem:[#allocation8 + $0x1778] sm:$0xff]
    %v1211 = vld [vmem:[#allocation8 + $0x1780] sm:$0xff]
    %v1212 = vld [vmem:[#allocation8 + $0x1788] sm:$0xff]
    %v1213 = vld [vmem:[#allocation8 + $0x1790] sm:$0xff]
    %v1214 = vld [vmem:[#allocation8 + $0x1798] sm:$0xff]
    %v1215 = vld [vmem:[#allocation8 + $0x17a0] sm:$0xff]
    %v1216 = vld [vmem:[#allocation8 + $0x17a8] sm:$0xff]
    %v1217 = vld [vmem:[#allocation8 + $0x17b0] sm:$0xff]
    %v1218 = vld [vmem:[#allocation8 + $0x17b8] sm:$0xff]
    %v1219 = vld [vmem:[#allocation8 + $0x17c0] sm:$0xff]
    %v1220 = vld [vmem:[#allocation8 + $0x17c8] sm:$0xff]
    %v1221 = vld [vmem:[#allocation8 + $0x17d0] sm:$0xff]
    %v1222 = vld [vmem:[#allocation8 + $0x17d8] sm:$0xff]
    %v1223 = vld [vmem:[#allocation8 + $0x17e0] sm:$0xff]
    %v1224 = vld [vmem:[#allocation8 + $0x17e8] sm:$0xff]
    %v1225 = vld [vmem:[#allocation8 + $0x17f0] sm:$0xff]
    %v1226 = vld [vmem:[#allocation8 + $0x17f8] sm:$0xff]
    %v1227 = vld [vmem:[#allocation8 + $0x1800] sm:$0xff]
    %v1228 = vld [vmem:[#allocation8 + $0x1808] sm:$0xff]
    %v1229 = vld [vmem:[#allocation8 + $0x1810] sm:$0xff]
    %v1230 = vld [vmem:[#allocation8 + $0x1818] sm:$0xff]
    %v1231 = vld [vmem:[#allocation8 + $0x1820] sm:$0xff]
    %v1232 = vld [vmem:[#allocation8 + $0x1828] sm:$0xff]
    %v1233 = vld [vmem:[#allocation8 + $0x1830] sm:$0xff]
    %v1234 = vld [vmem:[#allocation8 + $0x1838] sm:$0xff]
    %v1235 = vld [vmem:[#allocation8 + $0x1840] sm:$0xff]
    %v1236 = vld [vmem:[#allocation8 + $0x1848] sm:$0xff]
    %v1237 = vld [vmem:[#allocation8 + $0x1850] sm:$0xff]
    %v1238 = vld [vmem:[#allocation8 + $0x1858] sm:$0xff]
    %v1239 = vld [vmem:[#allocation8 + $0x1860] sm:$0xff]
    %v1240 = vld [vmem:[#allocation8 + $0x1868] sm:$0xff]
    %v1241 = vld [vmem:[#allocation8 + $0x1870] sm:$0xff]
    %v1242 = vld [vmem:[#allocation8 + $0x1878] sm:$0xff]
    %v1243 = vld [vmem:[#allocation8 + $0x1880] sm:$0xff]
    %v1244 = vld [vmem:[#allocation8 + $0x1888] sm:$0xff]
    %v1245 = vld [vmem:[#allocation8 + $0x1890] sm:$0xff]
    %v1246 = vld [vmem:[#allocation8 + $0x1898] sm:$0xff]
    %v1247 = vld [vmem:[#allocation8 + $0x18a0] sm:$0xff]
    %v1248 = vld [vmem:[#allocation8 + $0x18a8] sm:$0xff]
    %v1249 = vld [vmem:[#allocation8 + $0x18b0] sm:$0xff]
    %v1250 = vld [vmem:[#allocation8 + $0x18b8] sm:$0xff]
    %v1251 = vld [vmem:[#allocation8 + $0x18c0] sm:$0xff]
    %v1252 = vld [vmem:[#allocation8 + $0x18c8] sm:$0xff]
    %v1253 = vld [vmem:[#allocation8 + $0x18d0] sm:$0xff]
    %v1254 = vld [vmem:[#allocation8 + $0x18d8] sm:$0xff]
    %v1255 = vld [vmem:[#allocation8 + $0x18e0] sm:$0xff]
    %v1256 = vld [vmem:[#allocation8 + $0x18e8] sm:$0xff]
    %v1257 = vld [vmem:[#allocation8 + $0x18f0] sm:$0xff]
    %v1258 = vld [vmem:[#allocation8 + $0x18f8] sm:$0xff]
    %v1259 = vld [vmem:[#allocation10] sm:$0xff]
    %v1260 = vld [vmem:[#allocation10 + $0x8] sm:$0x3]
    %v1263 = vlaneseq
    %v1264 = vshrl.u32 %v1263, 7
    %v1265 = vsub.s32 0, %v1264
    %v1266 = vrot.slane %v1259, %v1265
    %v1267 = vlaneseq
    %v1268 = vshrl.u32 %v1267, 7
    %v1269 = vsub.s32 1, %v1268
    %v1270 = vrot.slane %v1259, %v1269
    %v1271 = vlaneseq
    %v1272 = vshrl.u32 %v1271, 7
    %v1273 = vsub.s32 2, %v1272
    %v1274 = vrot.slane %v1259, %v1273
    %v1275 = vlaneseq
    %v1276 = vshrl.u32 %v1275, 7
    %v1277 = vsub.s32 3, %v1276
    %v1278 = vrot.slane %v1259, %v1277
    %v1279 = vlaneseq
    %v1280 = vshrl.u32 %v1279, 7
    %v1281 = vsub.s32 4, %v1280
    %v1282 = vrot.slane %v1259, %v1281
    %v1283 = vlaneseq
    %v1284 = vshrl.u32 %v1283, 7
    %v1285 = vsub.s32 5, %v1284
    %v1286 = vrot.slane %v1259, %v1285
    %v1287 = vlaneseq
    %v1288 = vshrl.u32 %v1287, 7
    %v1289 = vsub.s32 6, %v1288
    %v1290 = vrot.slane %v1259, %v1289
    %v1291 = vlaneseq
    %v1292 = vshrl.u32 %v1291, 7
    %v1293 = vsub.s32 7, %v1292
    %v1294 = vrot.slane %v1259, %v1293
    %v1295 = vlaneseq
    %v1296 = vshrl.u32 %v1295, 7
    %v1297 = vsub.s32 0, %v1296
    %v1298 = vrot.slane %v1260, %v1297
    %v1299 = vlaneseq
    %v1300 = vshrl.u32 %v1299, 7
    %v1301 = vsub.s32 1, %v1300
    %v1302 = vrot.slane %v1260, %v1301
    %v2113 = vunpack.c.l.b16 %v459
    %v2114 = vunpack.c.h.b16 %v459
    %v2115 = vunpack.c.l.b16 %v460
    %v2116 = vunpack.c.h.b16 %v460
    %v2117 = vunpack.c.l.b16 %v461
    %v2118 = vunpack.c.h.b16 %v461
    %v2119 = vunpack.c.l.b16 %v462
    %v2120 = vunpack.c.h.b16 %v462
    %v2121 = vunpack.c.l.b16 %v463
    %v2122 = vunpack.c.h.b16 %v463
    %v2123 = vunpack.c.l.b16 %v464
    %v2124 = vunpack.c.h.b16 %v464
    %v2125 = vunpack.c.l.b16 %v465
    %v2126 = vunpack.c.h.b16 %v465
    %v2127 = vunpack.c.l.b16 %v466
    %v2128 = vunpack.c.h.b16 %v466
    %v2129 = vunpack.c.l.b16 %v467
    %v2130 = vunpack.c.h.b16 %v467
    %v2131 = vunpack.c.l.b16 %v468
    %v2132 = vunpack.c.h.b16 %v468
    %v2133 = vunpack.c.l.b16 %v469
    %v2134 = vunpack.c.h.b16 %v469
    %v2135 = vunpack.c.l.b16 %v470
    %v2136 = vunpack.c.h.b16 %v470
    %v2137 = vunpack.c.l.b16 %v471
    %v2138 = vunpack.c.h.b16 %v471
    %v2139 = vunpack.c.l.b16 %v472
    %v2140 = vunpack.c.h.b16 %v472
    %v2141 = vunpack.c.l.b16 %v473
    %v2142 = vunpack.c.h.b16 %v473
    %v2143 = vunpack.c.l.b16 %v474
    %v2144 = vunpack.c.h.b16 %v474
    %v2145 = vunpack.c.l.b16 %v475
    %v2146 = vunpack.c.h.b16 %v475
    %v2147 = vunpack.c.l.b16 %v476
    %v2148 = vunpack.c.h.b16 %v476
    %v2149 = vunpack.c.l.b16 %v477
    %v2150 = vunpack.c.h.b16 %v477
    %v2151 = vunpack.c.l.b16 %v478
    %v2152 = vunpack.c.h.b16 %v478
    %v2153 = vunpack.c.l.b16 %v479
    %v2154 = vunpack.c.h.b16 %v479
    %v2155 = vunpack.c.l.b16 %v480
    %v2156 = vunpack.c.h.b16 %v480
    %v2157 = vunpack.c.l.b16 %v481
    %v2158 = vunpack.c.h.b16 %v481
    %v2159 = vunpack.c.l.b16 %v482
    %v2160 = vunpack.c.h.b16 %v482
    %v2161 = vunpack.c.l.b16 %v483
    %v2162 = vunpack.c.h.b16 %v483
    %v2163 = vunpack.c.l.b16 %v484
    %v2164 = vunpack.c.h.b16 %v484
    %v2165 = vunpack.c.l.b16 %v485
    %v2166 = vunpack.c.h.b16 %v485
    %v2167 = vunpack.c.l.b16 %v486
    %v2168 = vunpack.c.h.b16 %v486
    %v2169 = vunpack.c.l.b16 %v487
    %v2170 = vunpack.c.h.b16 %v487
    %v2171 = vunpack.c.l.b16 %v488
    %v2172 = vunpack.c.h.b16 %v488
    %v2173 = vunpack.c.l.b16 %v489
    %v2174 = vunpack.c.h.b16 %v489
    %v2175 = vunpack.c.l.b16 %v490
    %v2176 = vunpack.c.h.b16 %v490
    %v2177 = vunpack.c.l.b16 %v491
    %v2178 = vunpack.c.h.b16 %v491
    %v2179 = vunpack.c.l.b16 %v492
    %v2180 = vunpack.c.h.b16 %v492
    %v2181 = vunpack.c.l.b16 %v493
    %v2182 = vunpack.c.h.b16 %v493
    %v2183 = vunpack.c.l.b16 %v494
    %v2184 = vunpack.c.h.b16 %v494
    %v2185 = vunpack.c.l.b16 %v495
    %v2186 = vunpack.c.h.b16 %v495
    %v2187 = vunpack.c.l.b16 %v496
    %v2188 = vunpack.c.h.b16 %v496
    %v2189 = vunpack.c.l.b16 %v497
    %v2190 = vunpack.c.h.b16 %v497
    %v2191 = vunpack.c.l.b16 %v498
    %v2192 = vunpack.c.h.b16 %v498
    %v2193 = vunpack.c.l.b16 %v499
    %v2194 = vunpack.c.h.b16 %v499
    %v2195 = vunpack.c.l.b16 %v500
    %v2196 = vunpack.c.h.b16 %v500
    %v2197 = vunpack.c.l.b16 %v501
    %v2198 = vunpack.c.h.b16 %v501
    %v2199 = vunpack.c.l.b16 %v502
    %v2200 = vunpack.c.h.b16 %v502
    %v2201 = vunpack.c.l.b16 %v503
    %v2202 = vunpack.c.h.b16 %v503
    %v2203 = vunpack.c.l.b16 %v504
    %v2204 = vunpack.c.h.b16 %v504
    %v2205 = vunpack.c.l.b16 %v505
    %v2206 = vunpack.c.h.b16 %v505
    %v2207 = vunpack.c.l.b16 %v506
    %v2208 = vunpack.c.h.b16 %v506
    %v2209 = vunpack.c.l.b16 %v507
    %v2210 = vunpack.c.h.b16 %v507
    %v2211 = vunpack.c.l.b16 %v508
    %v2212 = vunpack.c.h.b16 %v508
    %v2213 = vunpack.c.l.b16 %v509
    %v2214 = vunpack.c.h.b16 %v509
    %v2215 = vunpack.c.l.b16 %v510
    %v2216 = vunpack.c.h.b16 %v510
    %v2217 = vunpack.c.l.b16 %v511
    %v2218 = vunpack.c.h.b16 %v511
    %v2219 = vunpack.c.l.b16 %v512
    %v2220 = vunpack.c.h.b16 %v512
    %v2221 = vunpack.c.l.b16 %v513
    %v2222 = vunpack.c.h.b16 %v513
    %v2223 = vunpack.c.l.b16 %v514
    %v2224 = vunpack.c.h.b16 %v514
    %v2225 = vunpack.c.l.b16 %v515
    %v2226 = vunpack.c.h.b16 %v515
    %v2227 = vunpack.c.l.b16 %v516
    %v2228 = vunpack.c.h.b16 %v516
    %v2229 = vunpack.c.l.b16 %v517
    %v2230 = vunpack.c.h.b16 %v517
    %v2231 = vunpack.c.l.b16 %v518
    %v2232 = vunpack.c.h.b16 %v518
    %v2233 = vunpack.c.l.b16 %v519
    %v2234 = vunpack.c.h.b16 %v519
    %v2235 = vunpack.c.l.b16 %v520
    %v2236 = vunpack.c.h.b16 %v520
    %v2237 = vunpack.c.l.b16 %v521
    %v2238 = vunpack.c.h.b16 %v521
    %v2239 = vunpack.c.l.b16 %v522
    %v2240 = vunpack.c.h.b16 %v522
    %v2241 = vunpack.c.l.b16 %v523
    %v2242 = vunpack.c.h.b16 %v523
    %v2243 = vunpack.c.l.b16 %v524
    %v2244 = vunpack.c.h.b16 %v524
    %v2245 = vunpack.c.l.b16 %v525
    %v2246 = vunpack.c.h.b16 %v525
    %v2247 = vunpack.c.l.b16 %v526
    %v2248 = vunpack.c.h.b16 %v526
    %v2249 = vunpack.c.l.b16 %v527
    %v2250 = vunpack.c.h.b16 %v527
    %v2251 = vunpack.c.l.b16 %v528
    %v2252 = vunpack.c.h.b16 %v528
    %v2253 = vunpack.c.l.b16 %v529
    %v2254 = vunpack.c.h.b16 %v529
    %v2255 = vunpack.c.l.b16 %v530
    %v2256 = vunpack.c.h.b16 %v530
    %v2257 = vunpack.c.l.b16 %v531
    %v2258 = vunpack.c.h.b16 %v531
    %v2259 = vunpack.c.l.b16 %v532
    %v2260 = vunpack.c.h.b16 %v532
    %v2261 = vunpack.c.l.b16 %v533
    %v2262 = vunpack.c.h.b16 %v533
    %v2263 = vunpack.c.l.b16 %v534
    %v2264 = vunpack.c.h.b16 %v534
    %v2265 = vunpack.c.l.b16 %v535
    %v2266 = vunpack.c.h.b16 %v535
    %v2267 = vunpack.c.l.b16 %v536
    %v2268 = vunpack.c.h.b16 %v536
    %v2269 = vunpack.c.l.b16 %v537
    %v2270 = vunpack.c.h.b16 %v537
    %v2271 = vunpack.c.l.b16 %v538
    %v2272 = vunpack.c.h.b16 %v538
    %v2273 = vunpack.c.l.b16 %v539
    %v2274 = vunpack.c.h.b16 %v539
    %v2275 = vunpack.c.l.b16 %v540
    %v2276 = vunpack.c.h.b16 %v540
    %v2277 = vunpack.c.l.b16 %v541
    %v2278 = vunpack.c.h.b16 %v541
    %v2279 = vunpack.c.l.b16 %v542
    %v2280 = vunpack.c.h.b16 %v542
    %v2281 = vunpack.c.l.b16 %v543
    %v2282 = vunpack.c.h.b16 %v543
    %v2283 = vunpack.c.l.b16 %v544
    %v2284 = vunpack.c.h.b16 %v544
    %v2285 = vunpack.c.l.b16 %v545
    %v2286 = vunpack.c.h.b16 %v545
    %v2287 = vunpack.c.l.b16 %v546
    %v2288 = vunpack.c.h.b16 %v546
    %v2289 = vunpack.c.l.b16 %v547
    %v2290 = vunpack.c.h.b16 %v547
    %v2291 = vunpack.c.l.b16 %v548
    %v2292 = vunpack.c.h.b16 %v548
    %v2293 = vunpack.c.l.b16 %v549
    %v2294 = vunpack.c.h.b16 %v549
    %v2295 = vunpack.c.l.b16 %v550
    %v2296 = vunpack.c.h.b16 %v550
    %v2297 = vunpack.c.l.b16 %v551
    %v2298 = vunpack.c.h.b16 %v551
    %v2299 = vunpack.c.l.b16 %v552
    %v2300 = vunpack.c.h.b16 %v552
    %v2301 = vunpack.c.l.b16 %v553
    %v2302 = vunpack.c.h.b16 %v553
    %v2303 = vunpack.c.l.b16 %v554
    %v2304 = vunpack.c.h.b16 %v554
    %v2305 = vunpack.c.l.b16 %v555
    %v2306 = vunpack.c.h.b16 %v555
    %v2307 = vunpack.c.l.b16 %v556
    %v2308 = vunpack.c.h.b16 %v556
    %v2309 = vunpack.c.l.b16 %v557
    %v2310 = vunpack.c.h.b16 %v557
    %v2311 = vunpack.c.l.b16 %v558
    %v2312 = vunpack.c.h.b16 %v558
    %v2313 = vunpack.c.l.b16 %v559
    %v2314 = vunpack.c.h.b16 %v559
    %v2315 = vunpack.c.l.b16 %v560
    %v2316 = vunpack.c.h.b16 %v560
    %v2317 = vunpack.c.l.b16 %v561
    %v2318 = vunpack.c.h.b16 %v561
    %v2319 = vunpack.c.l.b16 %v562
    %v2320 = vunpack.c.h.b16 %v562
    %v2321 = vunpack.c.l.b16 %v563
    %v2322 = vunpack.c.h.b16 %v563
    %v2323 = vunpack.c.l.b16 %v564
    %v2324 = vunpack.c.h.b16 %v564
    %v2325 = vunpack.c.l.b16 %v565
    %v2326 = vunpack.c.h.b16 %v565
    %v2327 = vunpack.c.l.b16 %v566
    %v2328 = vunpack.c.h.b16 %v566
    %v2329 = vunpack.c.l.b16 %v567
    %v2330 = vunpack.c.h.b16 %v567
    %v2331 = vunpack.c.l.b16 %v568
    %v2332 = vunpack.c.h.b16 %v568
    %v2333 = vunpack.c.l.b16 %v569
    %v2334 = vunpack.c.h.b16 %v569
    %v2335 = vunpack.c.l.b16 %v570
    %v2336 = vunpack.c.h.b16 %v570
    %v2337 = vunpack.c.l.b16 %v571
    %v2338 = vunpack.c.h.b16 %v571
    %v2339 = vunpack.c.l.b16 %v572
    %v2340 = vunpack.c.h.b16 %v572
    %v2341 = vunpack.c.l.b16 %v573
    %v2342 = vunpack.c.h.b16 %v573
    %v2343 = vunpack.c.l.b16 %v574
    %v2344 = vunpack.c.h.b16 %v574
    %v2345 = vunpack.c.l.b16 %v575
    %v2346 = vunpack.c.h.b16 %v575
    %v2347 = vunpack.c.l.b16 %v576
    %v2348 = vunpack.c.h.b16 %v576
    %v2349 = vunpack.c.l.b16 %v577
    %v2350 = vunpack.c.h.b16 %v577
    %v2351 = vunpack.c.l.b16 %v578
    %v2352 = vunpack.c.h.b16 %v578
    %v2353 = vunpack.c.l.b16 %v579
    %v2354 = vunpack.c.h.b16 %v579
    %v2355 = vunpack.c.l.b16 %v580
    %v2356 = vunpack.c.h.b16 %v580
    %v2357 = vunpack.c.l.b16 %v581
    %v2358 = vunpack.c.h.b16 %v581
    %v2359 = vunpack.c.l.b16 %v582
    %v2360 = vunpack.c.h.b16 %v582
    %v2361 = vunpack.c.l.b16 %v583
    %v2362 = vunpack.c.h.b16 %v583
    %v2363 = vunpack.c.l.b16 %v584
    %v2364 = vunpack.c.h.b16 %v584
    %v2365 = vunpack.c.l.b16 %v585
    %v2366 = vunpack.c.h.b16 %v585
    %v2367 = vunpack.c.l.b16 %v586
    %v2368 = vunpack.c.h.b16 %v586
    %v2369 = vunpack.c.l.b16 %v587
    %v2370 = vunpack.c.h.b16 %v587
    %v2371 = vunpack.c.l.b16 %v588
    %v2372 = vunpack.c.h.b16 %v588
    %v2373 = vunpack.c.l.b16 %v589
    %v2374 = vunpack.c.h.b16 %v589
    %v2375 = vunpack.c.l.b16 %v590
    %v2376 = vunpack.c.h.b16 %v590
    %v2377 = vunpack.c.l.b16 %v591
    %v2378 = vunpack.c.h.b16 %v591
    %v2379 = vunpack.c.l.b16 %v592
    %v2380 = vunpack.c.h.b16 %v592
    %v2381 = vunpack.c.l.b16 %v593
    %v2382 = vunpack.c.h.b16 %v593
    %v2383 = vunpack.c.l.b16 %v594
    %v2384 = vunpack.c.h.b16 %v594
    %v2385 = vunpack.c.l.b16 %v595
    %v2386 = vunpack.c.h.b16 %v595
    %v2387 = vunpack.c.l.b16 %v596
    %v2388 = vunpack.c.h.b16 %v596
    %v2389 = vunpack.c.l.b16 %v597
    %v2390 = vunpack.c.h.b16 %v597
    %v2391 = vunpack.c.l.b16 %v598
    %v2392 = vunpack.c.h.b16 %v598
    %v2393 = vunpack.c.l.b16 %v599
    %v2394 = vunpack.c.h.b16 %v599
    %v2395 = vunpack.c.l.b16 %v600
    %v2396 = vunpack.c.h.b16 %v600
    %v2397 = vunpack.c.l.b16 %v601
    %v2398 = vunpack.c.h.b16 %v601
    %v2399 = vunpack.c.l.b16 %v602
    %v2400 = vunpack.c.h.b16 %v602
    %v2401 = vunpack.c.l.b16 %v603
    %v2402 = vunpack.c.h.b16 %v603
    %v2403 = vunpack.c.l.b16 %v604
    %v2404 = vunpack.c.h.b16 %v604
    %v2405 = vunpack.c.l.b16 %v605
    %v2406 = vunpack.c.h.b16 %v605
    %v2407 = vunpack.c.l.b16 %v606
    %v2408 = vunpack.c.h.b16 %v606
    %v2409 = vunpack.c.l.b16 %v607
    %v2410 = vunpack.c.h.b16 %v607
    %v2411 = vunpack.c.l.b16 %v608
    %v2412 = vunpack.c.h.b16 %v608
    %v2413 = vunpack.c.l.b16 %v609
    %v2414 = vunpack.c.h.b16 %v609
    %v2415 = vunpack.c.l.b16 %v610
    %v2416 = vunpack.c.h.b16 %v610
    %v2417 = vunpack.c.l.b16 %v611
    %v2418 = vunpack.c.h.b16 %v611
    %v2419 = vunpack.c.l.b16 %v612
    %v2420 = vunpack.c.h.b16 %v612
    %v2421 = vunpack.c.l.b16 %v613
    %v2422 = vunpack.c.h.b16 %v613
    %v2423 = vunpack.c.l.b16 %v614
    %v2424 = vunpack.c.h.b16 %v614
    %v2425 = vunpack.c.l.b16 %v615
    %v2426 = vunpack.c.h.b16 %v615
    %v2427 = vunpack.c.l.b16 %v616
    %v2428 = vunpack.c.h.b16 %v616
    %v2429 = vunpack.c.l.b16 %v617
    %v2430 = vunpack.c.h.b16 %v617
    %v2431 = vunpack.c.l.b16 %v618
    %v2432 = vunpack.c.h.b16 %v618
    %v2433 = vunpack.c.l.b16 %v619
    %v2434 = vunpack.c.h.b16 %v619
    %v2435 = vunpack.c.l.b16 %v620
    %v2436 = vunpack.c.h.b16 %v620
    %v2437 = vunpack.c.l.b16 %v621
    %v2438 = vunpack.c.h.b16 %v621
    %v2439 = vunpack.c.l.b16 %v622
    %v2440 = vunpack.c.h.b16 %v622
    %v2441 = vunpack.c.l.b16 %v623
    %v2442 = vunpack.c.h.b16 %v623
    %v2443 = vunpack.c.l.b16 %v624
    %v2444 = vunpack.c.h.b16 %v624
    %v2445 = vunpack.c.l.b16 %v625
    %v2446 = vunpack.c.h.b16 %v625
    %v2447 = vunpack.c.l.b16 %v626
    %v2448 = vunpack.c.h.b16 %v626
    %v2449 = vunpack.c.l.b16 %v627
    %v2450 = vunpack.c.h.b16 %v627
    %v2451 = vunpack.c.l.b16 %v628
    %v2452 = vunpack.c.h.b16 %v628
    %v2453 = vunpack.c.l.b16 %v629
    %v2454 = vunpack.c.h.b16 %v629
    %v2455 = vunpack.c.l.b16 %v630
    %v2456 = vunpack.c.h.b16 %v630
    %v2457 = vunpack.c.l.b16 %v631
    %v2458 = vunpack.c.h.b16 %v631
    %v2459 = vunpack.c.l.b16 %v632
    %v2460 = vunpack.c.h.b16 %v632
    %v2461 = vunpack.c.l.b16 %v633
    %v2462 = vunpack.c.h.b16 %v633
    %v2463 = vunpack.c.l.b16 %v634
    %v2464 = vunpack.c.h.b16 %v634
    %v2465 = vunpack.c.l.b16 %v635
    %v2466 = vunpack.c.h.b16 %v635
    %v2467 = vunpack.c.l.b16 %v636
    %v2468 = vunpack.c.h.b16 %v636
    %v2469 = vunpack.c.l.b16 %v637
    %v2470 = vunpack.c.h.b16 %v637
    %v2471 = vunpack.c.l.b16 %v638
    %v2472 = vunpack.c.h.b16 %v638
    %v2473 = vunpack.c.l.b16 %v639
    %v2474 = vunpack.c.h.b16 %v639
    %v2475 = vunpack.c.l.b16 %v640
    %v2476 = vunpack.c.h.b16 %v640
    %v2477 = vunpack.c.l.b16 %v641
    %v2478 = vunpack.c.h.b16 %v641
    %v2479 = vunpack.c.l.b16 %v642
    %v2480 = vunpack.c.h.b16 %v642
    %v2481 = vunpack.c.l.b16 %v643
    %v2482 = vunpack.c.h.b16 %v643
    %v2483 = vunpack.c.l.b16 %v644
    %v2484 = vunpack.c.h.b16 %v644
    %v2485 = vunpack.c.l.b16 %v645
    %v2486 = vunpack.c.h.b16 %v645
    %v2487 = vunpack.c.l.b16 %v646
    %v2488 = vunpack.c.h.b16 %v646
    %v2489 = vunpack.c.l.b16 %v647
    %v2490 = vunpack.c.h.b16 %v647
    %v2491 = vunpack.c.l.b16 %v648
    %v2492 = vunpack.c.h.b16 %v648
    %v2493 = vunpack.c.l.b16 %v649
    %v2494 = vunpack.c.h.b16 %v649
    %v2495 = vunpack.c.l.b16 %v650
    %v2496 = vunpack.c.h.b16 %v650
    %v2497 = vunpack.c.l.b16 %v651
    %v2498 = vunpack.c.h.b16 %v651
    %v2499 = vunpack.c.l.b16 %v652
    %v2500 = vunpack.c.h.b16 %v652
    %v2501 = vunpack.c.l.b16 %v653
    %v2502 = vunpack.c.h.b16 %v653
    %v2503 = vunpack.c.l.b16 %v654
    %v2504 = vunpack.c.h.b16 %v654
    %v2505 = vunpack.c.l.b16 %v655
    %v2506 = vunpack.c.h.b16 %v655
    %v2507 = vunpack.c.l.b16 %v656
    %v2508 = vunpack.c.h.b16 %v656
    %v2509 = vunpack.c.l.b16 %v657
    %v2510 = vunpack.c.h.b16 %v657
    %v2511 = vunpack.c.l.b16 %v658
    %v2512 = vunpack.c.h.b16 %v658
    %v2513 = vunpack.c.l.b16 %v659
    %v2514 = vunpack.c.h.b16 %v659
    %v2515 = vunpack.c.l.b16 %v660
    %v2516 = vunpack.c.h.b16 %v660
    %v2517 = vunpack.c.l.b16 %v661
    %v2518 = vunpack.c.h.b16 %v661
    %v2519 = vunpack.c.l.b16 %v662
    %v2520 = vunpack.c.h.b16 %v662
    %v2521 = vunpack.c.l.b16 %v663
    %v2522 = vunpack.c.h.b16 %v663
    %v2523 = vunpack.c.l.b16 %v664
    %v2524 = vunpack.c.h.b16 %v664
    %v2525 = vunpack.c.l.b16 %v665
    %v2526 = vunpack.c.h.b16 %v665
    %v2527 = vunpack.c.l.b16 %v666
    %v2528 = vunpack.c.h.b16 %v666
    %v2529 = vunpack.c.l.b16 %v667
    %v2530 = vunpack.c.h.b16 %v667
    %v2531 = vunpack.c.l.b16 %v668
    %v2532 = vunpack.c.h.b16 %v668
    %v2533 = vunpack.c.l.b16 %v669
    %v2534 = vunpack.c.h.b16 %v669
    %v2535 = vunpack.c.l.b16 %v670
    %v2536 = vunpack.c.h.b16 %v670
    %v2537 = vunpack.c.l.b16 %v671
    %v2538 = vunpack.c.h.b16 %v671
    %v2539 = vunpack.c.l.b16 %v672
    %v2540 = vunpack.c.h.b16 %v672
    %v2541 = vunpack.c.l.b16 %v673
    %v2542 = vunpack.c.h.b16 %v673
    %v2543 = vunpack.c.l.b16 %v674
    %v2544 = vunpack.c.h.b16 %v674
    %v2545 = vunpack.c.l.b16 %v675
    %v2546 = vunpack.c.h.b16 %v675
    %v2547 = vunpack.c.l.b16 %v676
    %v2548 = vunpack.c.h.b16 %v676
    %v2549 = vunpack.c.l.b16 %v677
    %v2550 = vunpack.c.h.b16 %v677
    %v2551 = vunpack.c.l.b16 %v678
    %v2552 = vunpack.c.h.b16 %v678
    %v2553 = vunpack.c.l.b16 %v679
    %v2554 = vunpack.c.h.b16 %v679
    %v2555 = vunpack.c.l.b16 %v680
    %v2556 = vunpack.c.h.b16 %v680
    %v2557 = vunpack.c.l.b16 %v681
    %v2558 = vunpack.c.h.b16 %v681
    %v2559 = vunpack.c.l.b16 %v682
    %v2560 = vunpack.c.h.b16 %v682
    %v2561 = vunpack.c.l.b16 %v683
    %v2562 = vunpack.c.h.b16 %v683
    %v2563 = vunpack.c.l.b16 %v684
    %v2564 = vunpack.c.h.b16 %v684
    %v2565 = vunpack.c.l.b16 %v685
    %v2566 = vunpack.c.h.b16 %v685
    %v2567 = vunpack.c.l.b16 %v686
    %v2568 = vunpack.c.h.b16 %v686
    %v2569 = vunpack.c.l.b16 %v687
    %v2570 = vunpack.c.h.b16 %v687
    %v2571 = vunpack.c.l.b16 %v688
    %v2572 = vunpack.c.h.b16 %v688
    %v2573 = vunpack.c.l.b16 %v689
    %v2574 = vunpack.c.h.b16 %v689
    %v2575 = vunpack.c.l.b16 %v690
    %v2576 = vunpack.c.h.b16 %v690
    %v2577 = vunpack.c.l.b16 %v691
    %v2578 = vunpack.c.h.b16 %v691
    %v2579 = vunpack.c.l.b16 %v692
    %v2580 = vunpack.c.h.b16 %v692
    %v2581 = vunpack.c.l.b16 %v693
    %v2582 = vunpack.c.h.b16 %v693
    %v2583 = vunpack.c.l.b16 %v694
    %v2584 = vunpack.c.h.b16 %v694
    %v2585 = vunpack.c.l.b16 %v695
    %v2586 = vunpack.c.h.b16 %v695
    %v2587 = vunpack.c.l.b16 %v696
    %v2588 = vunpack.c.h.b16 %v696
    %v2589 = vunpack.c.l.b16 %v697
    %v2590 = vunpack.c.h.b16 %v697
    %v2591 = vunpack.c.l.b16 %v698
    %v2592 = vunpack.c.h.b16 %v698
    %v2593 = vunpack.c.l.b16 %v699
    %v2594 = vunpack.c.h.b16 %v699
    %v2595 = vunpack.c.l.b16 %v700
    %v2596 = vunpack.c.h.b16 %v700
    %v2597 = vunpack.c.l.b16 %v701
    %v2598 = vunpack.c.h.b16 %v701
    %v2599 = vunpack.c.l.b16 %v702
    %v2600 = vunpack.c.h.b16 %v702
    %v2601 = vunpack.c.l.b16 %v703
    %v2602 = vunpack.c.h.b16 %v703
    %v2603 = vunpack.c.l.b16 %v704
    %v2604 = vunpack.c.h.b16 %v704
    %v2605 = vunpack.c.l.b16 %v705
    %v2606 = vunpack.c.h.b16 %v705
    %v2607 = vunpack.c.l.b16 %v706
    %v2608 = vunpack.c.h.b16 %v706
    %v2609 = vunpack.c.l.b16 %v707
    %v2610 = vunpack.c.h.b16 %v707
    %v2611 = vunpack.c.l.b16 %v708
    %v2612 = vunpack.c.h.b16 %v708
    %v2613 = vunpack.c.l.b16 %v709
    %v2614 = vunpack.c.h.b16 %v709
    %v2615 = vunpack.c.l.b16 %v710
    %v2616 = vunpack.c.h.b16 %v710
    %v2617 = vunpack.c.l.b16 %v711
    %v2618 = vunpack.c.h.b16 %v711
    %v2619 = vunpack.c.l.b16 %v712
    %v2620 = vunpack.c.h.b16 %v712
    %v2621 = vunpack.c.l.b16 %v713
    %v2622 = vunpack.c.h.b16 %v713
    %v2623 = vunpack.c.l.b16 %v714
    %v2624 = vunpack.c.h.b16 %v714
    %v2625 = vunpack.c.l.b16 %v715
    %v2626 = vunpack.c.h.b16 %v715
    %v2627 = vunpack.c.l.b16 %v716
    %v2628 = vunpack.c.h.b16 %v716
    %v2629 = vunpack.c.l.b16 %v717
    %v2630 = vunpack.c.h.b16 %v717
    %v2631 = vunpack.c.l.b16 %v718
    %v2632 = vunpack.c.h.b16 %v718
    %v2633 = vunpack.c.l.b16 %v719
    %v2634 = vunpack.c.h.b16 %v719
    %v2635 = vunpack.c.l.b16 %v720
    %v2636 = vunpack.c.h.b16 %v720
    %v2637 = vunpack.c.l.b16 %v721
    %v2638 = vunpack.c.h.b16 %v721
    %v2639 = vunpack.c.l.b16 %v722
    %v2640 = vunpack.c.h.b16 %v722
    %v2641 = vunpack.c.l.b16 %v723
    %v2642 = vunpack.c.h.b16 %v723
    %v2643 = vunpack.c.l.b16 %v724
    %v2644 = vunpack.c.h.b16 %v724
    %v2645 = vunpack.c.l.b16 %v725
    %v2646 = vunpack.c.h.b16 %v725
    %v2647 = vunpack.c.l.b16 %v726
    %v2648 = vunpack.c.h.b16 %v726
    %v2649 = vunpack.c.l.b16 %v727
    %v2650 = vunpack.c.h.b16 %v727
    %v2651 = vunpack.c.l.b16 %v728
    %v2652 = vunpack.c.h.b16 %v728
    %v2653 = vunpack.c.l.b16 %v729
    %v2654 = vunpack.c.h.b16 %v729
    %v2655 = vunpack.c.l.b16 %v730
    %v2656 = vunpack.c.h.b16 %v730
    %v2657 = vunpack.c.l.b16 %v731
    %v2658 = vunpack.c.h.b16 %v731
    %v2659 = vunpack.c.l.b16 %v732
    %v2660 = vunpack.c.h.b16 %v732
    %v2661 = vunpack.c.l.b16 %v733
    %v2662 = vunpack.c.h.b16 %v733
    %v2663 = vunpack.c.l.b16 %v734
    %v2664 = vunpack.c.h.b16 %v734
    %v2665 = vunpack.c.l.b16 %v735
    %v2666 = vunpack.c.h.b16 %v735
    %v2667 = vunpack.c.l.b16 %v736
    %v2668 = vunpack.c.h.b16 %v736
    %v2669 = vunpack.c.l.b16 %v737
    %v2670 = vunpack.c.h.b16 %v737
    %v2671 = vunpack.c.l.b16 %v738
    %v2672 = vunpack.c.h.b16 %v738
    %v2673 = vunpack.c.l.b16 %v739
    %v2674 = vunpack.c.h.b16 %v739
    %v2675 = vunpack.c.l.b16 %v740
    %v2676 = vunpack.c.h.b16 %v740
    %v2677 = vunpack.c.l.b16 %v741
    %v2678 = vunpack.c.h.b16 %v741
    %v2679 = vunpack.c.l.b16 %v742
    %v2680 = vunpack.c.h.b16 %v742
    %v2681 = vunpack.c.l.b16 %v743
    %v2682 = vunpack.c.h.b16 %v743
    %v2683 = vunpack.c.l.b16 %v744
    %v2684 = vunpack.c.h.b16 %v744
    %v2685 = vunpack.c.l.b16 %v745
    %v2686 = vunpack.c.h.b16 %v745
    %v2687 = vunpack.c.l.b16 %v746
    %v2688 = vunpack.c.h.b16 %v746
    %v2689 = vunpack.c.l.b16 %v747
    %v2690 = vunpack.c.h.b16 %v747
    %v2691 = vunpack.c.l.b16 %v748
    %v2692 = vunpack.c.h.b16 %v748
    %v2693 = vunpack.c.l.b16 %v749
    %v2694 = vunpack.c.h.b16 %v749
    %v2695 = vunpack.c.l.b16 %v750
    %v2696 = vunpack.c.h.b16 %v750
    %v2697 = vunpack.c.l.b16 %v751
    %v2698 = vunpack.c.h.b16 %v751
    %v2699 = vunpack.c.l.b16 %v752
    %v2700 = vunpack.c.h.b16 %v752
    %v2701 = vunpack.c.l.b16 %v753
    %v2702 = vunpack.c.h.b16 %v753
    %v2703 = vunpack.c.l.b16 %v754
    %v2704 = vunpack.c.h.b16 %v754
    %v2705 = vunpack.c.l.b16 %v755
    %v2706 = vunpack.c.h.b16 %v755
    %v2707 = vunpack.c.l.b16 %v756
    %v2708 = vunpack.c.h.b16 %v756
    %v2709 = vunpack.c.l.b16 %v757
    %v2710 = vunpack.c.h.b16 %v757
    %v2711 = vunpack.c.l.b16 %v758
    %v2712 = vunpack.c.h.b16 %v758
    %v2713 = vunpack.c.l.b16 %v759
    %v2714 = vunpack.c.h.b16 %v759
    %v2715 = vunpack.c.l.b16 %v760
    %v2716 = vunpack.c.h.b16 %v760
    %v2717 = vunpack.c.l.b16 %v761
    %v2718 = vunpack.c.h.b16 %v761
    %v2719 = vunpack.c.l.b16 %v762
    %v2720 = vunpack.c.h.b16 %v762
    %v2721 = vunpack.c.l.b16 %v763
    %v2722 = vunpack.c.h.b16 %v763
    %v2723 = vunpack.c.l.b16 %v764
    %v2724 = vunpack.c.h.b16 %v764
    %v2725 = vunpack.c.l.b16 %v765
    %v2726 = vunpack.c.h.b16 %v765
    %v2727 = vunpack.c.l.b16 %v766
    %v2728 = vunpack.c.h.b16 %v766
    %v2729 = vunpack.c.l.b16 %v767
    %v2730 = vunpack.c.h.b16 %v767
    %v2731 = vunpack.c.l.b16 %v768
    %v2732 = vunpack.c.h.b16 %v768
    %v2733 = vunpack.c.l.b16 %v769
    %v2734 = vunpack.c.h.b16 %v769
    %v2735 = vunpack.c.l.b16 %v770
    %v2736 = vunpack.c.h.b16 %v770
    %v2737 = vunpack.c.l.b16 %v771
    %v2738 = vunpack.c.h.b16 %v771
    %v2739 = vunpack.c.l.b16 %v772
    %v2740 = vunpack.c.h.b16 %v772
    %v2741 = vunpack.c.l.b16 %v773
    %v2742 = vunpack.c.h.b16 %v773
    %v2743 = vunpack.c.l.b16 %v774
    %v2744 = vunpack.c.h.b16 %v774
    %v2745 = vunpack.c.l.b16 %v775
    %v2746 = vunpack.c.h.b16 %v775
    %v2747 = vunpack.c.l.b16 %v776
    %v2748 = vunpack.c.h.b16 %v776
    %v2749 = vunpack.c.l.b16 %v777
    %v2750 = vunpack.c.h.b16 %v777
    %v2751 = vunpack.c.l.b16 %v778
    %v2752 = vunpack.c.h.b16 %v778
    %v2753 = vunpack.c.l.b16 %v779
    %v2754 = vunpack.c.h.b16 %v779
    %v2755 = vunpack.c.l.b16 %v780
    %v2756 = vunpack.c.h.b16 %v780
    %v2757 = vunpack.c.l.b16 %v781
    %v2758 = vunpack.c.h.b16 %v781
    %v2759 = vunpack.c.l.b16 %v782
    %v2760 = vunpack.c.h.b16 %v782
    %v2761 = vunpack.c.l.b16 %v783
    %v2762 = vunpack.c.h.b16 %v783
    %v2763 = vunpack.c.l.b16 %v784
    %v2764 = vunpack.c.h.b16 %v784
    %v2765 = vunpack.c.l.b16 %v785
    %v2766 = vunpack.c.h.b16 %v785
    %v2767 = vunpack.c.l.b16 %v786
    %v2768 = vunpack.c.h.b16 %v786
    %v2769 = vunpack.c.l.b16 %v787
    %v2770 = vunpack.c.h.b16 %v787
    %v2771 = vunpack.c.l.b16 %v788
    %v2772 = vunpack.c.h.b16 %v788
    %v2773 = vunpack.c.l.b16 %v789
    %v2774 = vunpack.c.h.b16 %v789
    %v2775 = vunpack.c.l.b16 %v790
    %v2776 = vunpack.c.h.b16 %v790
    %v2777 = vunpack.c.l.b16 %v791
    %v2778 = vunpack.c.h.b16 %v791
    %v2779 = vunpack.c.l.b16 %v792
    %v2780 = vunpack.c.h.b16 %v792
    %v2781 = vunpack.c.l.b16 %v793
    %v2782 = vunpack.c.h.b16 %v793
    %v2783 = vunpack.c.l.b16 %v794
    %v2784 = vunpack.c.h.b16 %v794
    %v2785 = vunpack.c.l.b16 %v795
    %v2786 = vunpack.c.h.b16 %v795
    %v2787 = vunpack.c.l.b16 %v796
    %v2788 = vunpack.c.h.b16 %v796
    %v2789 = vunpack.c.l.b16 %v797
    %v2790 = vunpack.c.h.b16 %v797
    %v2791 = vunpack.c.l.b16 %v798
    %v2792 = vunpack.c.h.b16 %v798
    %v2793 = vunpack.c.l.b16 %v799
    %v2794 = vunpack.c.h.b16 %v799
    %v2795 = vunpack.c.l.b16 %v800
    %v2796 = vunpack.c.h.b16 %v800
    %v2797 = vunpack.c.l.b16 %v801
    %v2798 = vunpack.c.h.b16 %v801
    %v2799 = vunpack.c.l.b16 %v802
    %v2800 = vunpack.c.h.b16 %v802
    %v2801 = vunpack.c.l.b16 %v803
    %v2802 = vunpack.c.h.b16 %v803
    %v2803 = vunpack.c.l.b16 %v804
    %v2804 = vunpack.c.h.b16 %v804
    %v2805 = vunpack.c.l.b16 %v805
    %v2806 = vunpack.c.h.b16 %v805
    %v2807 = vunpack.c.l.b16 %v806
    %v2808 = vunpack.c.h.b16 %v806
    %v2809 = vunpack.c.l.b16 %v807
    %v2810 = vunpack.c.h.b16 %v807
    %v2811 = vunpack.c.l.b16 %v808
    %v2812 = vunpack.c.h.b16 %v808
    %v2813 = vunpack.c.l.b16 %v809
    %v2814 = vunpack.c.h.b16 %v809
    %v2815 = vunpack.c.l.b16 %v810
    %v2816 = vunpack.c.h.b16 %v810
    %v2817 = vunpack.c.l.b16 %v811
    %v2818 = vunpack.c.h.b16 %v811
    %v2819 = vunpack.c.l.b16 %v812
    %v2820 = vunpack.c.h.b16 %v812
    %v2821 = vunpack.c.l.b16 %v813
    %v2822 = vunpack.c.h.b16 %v813
    %v2823 = vunpack.c.l.b16 %v814
    %v2824 = vunpack.c.h.b16 %v814
    %v2825 = vunpack.c.l.b16 %v815
    %v2826 = vunpack.c.h.b16 %v815
    %v2827 = vunpack.c.l.b16 %v816
    %v2828 = vunpack.c.h.b16 %v816
    %v2829 = vunpack.c.l.b16 %v817
    %v2830 = vunpack.c.h.b16 %v817
    %v2831 = vunpack.c.l.b16 %v818
    %v2832 = vunpack.c.h.b16 %v818
    %v2833 = vunpack.c.l.b16 %v819
    %v2834 = vunpack.c.h.b16 %v819
    %v2835 = vunpack.c.l.b16 %v820
    %v2836 = vunpack.c.h.b16 %v820
    %v2837 = vunpack.c.l.b16 %v821
    %v2838 = vunpack.c.h.b16 %v821
    %v2839 = vunpack.c.l.b16 %v822
    %v2840 = vunpack.c.h.b16 %v822
    %v2841 = vunpack.c.l.b16 %v823
    %v2842 = vunpack.c.h.b16 %v823
    %v2843 = vunpack.c.l.b16 %v824
    %v2844 = vunpack.c.h.b16 %v824
    %v2845 = vunpack.c.l.b16 %v825
    %v2846 = vunpack.c.h.b16 %v825
    %v2847 = vunpack.c.l.b16 %v826
    %v2848 = vunpack.c.h.b16 %v826
    %v2849 = vunpack.c.l.b16 %v827
    %v2850 = vunpack.c.h.b16 %v827
    %v2851 = vunpack.c.l.b16 %v828
    %v2852 = vunpack.c.h.b16 %v828
    %v2853 = vunpack.c.l.b16 %v829
    %v2854 = vunpack.c.h.b16 %v829
    %v2855 = vunpack.c.l.b16 %v830
    %v2856 = vunpack.c.h.b16 %v830
    %v2857 = vunpack.c.l.b16 %v831
    %v2858 = vunpack.c.h.b16 %v831
    %v2859 = vunpack.c.l.b16 %v832
    %v2860 = vunpack.c.h.b16 %v832
    %v2861 = vunpack.c.l.b16 %v833
    %v2862 = vunpack.c.h.b16 %v833
    %v2863 = vunpack.c.l.b16 %v834
    %v2864 = vunpack.c.h.b16 %v834
    %v2865 = vunpack.c.l.b16 %v835
    %v2866 = vunpack.c.h.b16 %v835
    %v2867 = vunpack.c.l.b16 %v836
    %v2868 = vunpack.c.h.b16 %v836
    %v2869 = vunpack.c.l.b16 %v837
    %v2870 = vunpack.c.h.b16 %v837
    %v2871 = vunpack.c.l.b16 %v838
    %v2872 = vunpack.c.h.b16 %v838
    %v2873 = vunpack.c.l.b16 %v839
    %v2874 = vunpack.c.h.b16 %v839
    %v2875 = vunpack.c.l.b16 %v840
    %v2876 = vunpack.c.h.b16 %v840
    %v2877 = vunpack.c.l.b16 %v841
    %v2878 = vunpack.c.h.b16 %v841
    %v2879 = vunpack.c.l.b16 %v842
    %v2880 = vunpack.c.h.b16 %v842
    %v2881 = vunpack.c.l.b16 %v843
    %v2882 = vunpack.c.h.b16 %v843
    %v2883 = vunpack.c.l.b16 %v844
    %v2884 = vunpack.c.h.b16 %v844
    %v2885 = vunpack.c.l.b16 %v845
    %v2886 = vunpack.c.h.b16 %v845
    %v2887 = vunpack.c.l.b16 %v846
    %v2888 = vunpack.c.h.b16 %v846
    %v2889 = vunpack.c.l.b16 %v847
    %v2890 = vunpack.c.h.b16 %v847
    %v2891 = vunpack.c.l.b16 %v848
    %v2892 = vunpack.c.h.b16 %v848
    %v2893 = vunpack.c.l.b16 %v849
    %v2894 = vunpack.c.h.b16 %v849
    %v2895 = vunpack.c.l.b16 %v850
    %v2896 = vunpack.c.h.b16 %v850
    %v2897 = vunpack.c.l.b16 %v851
    %v2898 = vunpack.c.h.b16 %v851
    %v2899 = vunpack.c.l.b16 %v852
    %v2900 = vunpack.c.h.b16 %v852
    %v2901 = vunpack.c.l.b16 %v853
    %v2902 = vunpack.c.h.b16 %v853
    %v2903 = vunpack.c.l.b16 %v854
    %v2904 = vunpack.c.h.b16 %v854
    %v2905 = vunpack.c.l.b16 %v855
    %v2906 = vunpack.c.h.b16 %v855
    %v2907 = vunpack.c.l.b16 %v856
    %v2908 = vunpack.c.h.b16 %v856
    %v2909 = vunpack.c.l.b16 %v857
    %v2910 = vunpack.c.h.b16 %v857
    %v2911 = vunpack.c.l.b16 %v858
    %v2912 = vunpack.c.h.b16 %v858
    %v2913 = vunpack.c.l.b16 %v859
    %v2914 = vunpack.c.h.b16 %v859
    %v2915 = vunpack.c.l.b16 %v860
    %v2916 = vunpack.c.h.b16 %v860
    %v2917 = vunpack.c.l.b16 %v861
    %v2918 = vunpack.c.h.b16 %v861
    %v2919 = vunpack.c.l.b16 %v862
    %v2920 = vunpack.c.h.b16 %v862
    %v2921 = vunpack.c.l.b16 %v863
    %v2922 = vunpack.c.h.b16 %v863
    %v2923 = vunpack.c.l.b16 %v864
    %v2924 = vunpack.c.h.b16 %v864
    %v2925 = vunpack.c.l.b16 %v865
    %v2926 = vunpack.c.h.b16 %v865
    %v2927 = vunpack.c.l.b16 %v866
    %v2928 = vunpack.c.h.b16 %v866
    %v2929 = vunpack.c.l.b16 %v867
    %v2930 = vunpack.c.h.b16 %v867
    %v2931 = vunpack.c.l.b16 %v868
    %v2932 = vunpack.c.h.b16 %v868
    %v2933 = vunpack.c.l.b16 %v869
    %v2934 = vunpack.c.h.b16 %v869
    %v2935 = vunpack.c.l.b16 %v870
    %v2936 = vunpack.c.h.b16 %v870
    %v2937 = vunpack.c.l.b16 %v871
    %v2938 = vunpack.c.h.b16 %v871
    %v2939 = vunpack.c.l.b16 %v872
    %v2940 = vunpack.c.h.b16 %v872
    %v2941 = vunpack.c.l.b16 %v873
    %v2942 = vunpack.c.h.b16 %v873
    %v2943 = vunpack.c.l.b16 %v874
    %v2944 = vunpack.c.h.b16 %v874
    %v2945 = vunpack.c.l.b16 %v875
    %v2946 = vunpack.c.h.b16 %v875
    %v2947 = vunpack.c.l.b16 %v876
    %v2948 = vunpack.c.h.b16 %v876
    %v2949 = vunpack.c.l.b16 %v877
    %v2950 = vunpack.c.h.b16 %v877
    %v2951 = vunpack.c.l.b16 %v878
    %v2952 = vunpack.c.h.b16 %v878
    %v2953 = vunpack.c.l.b16 %v879
    %v2954 = vunpack.c.h.b16 %v879
    %v2955 = vunpack.c.l.b16 %v880
    %v2956 = vunpack.c.h.b16 %v880
    %v2957 = vunpack.c.l.b16 %v881
    %v2958 = vunpack.c.h.b16 %v881
    %v2959 = vunpack.c.l.b16 %v882
    %v2960 = vunpack.c.h.b16 %v882
    %v2961 = vunpack.c.l.b16 %v883
    %v2962 = vunpack.c.h.b16 %v883
    %v2963 = vunpack.c.l.b16 %v884
    %v2964 = vunpack.c.h.b16 %v884
    %v2965 = vunpack.c.l.b16 %v885
    %v2966 = vunpack.c.h.b16 %v885
    %v2967 = vunpack.c.l.b16 %v886
    %v2968 = vunpack.c.h.b16 %v886
    %v2969 = vunpack.c.l.b16 %v887
    %v2970 = vunpack.c.h.b16 %v887
    %v2971 = vunpack.c.l.b16 %v888
    %v2972 = vunpack.c.h.b16 %v888
    %v2973 = vunpack.c.l.b16 %v889
    %v2974 = vunpack.c.h.b16 %v889
    %v2975 = vunpack.c.l.b16 %v890
    %v2976 = vunpack.c.h.b16 %v890
    %v2977 = vunpack.c.l.b16 %v891
    %v2978 = vunpack.c.h.b16 %v891
    %v2979 = vunpack.c.l.b16 %v892
    %v2980 = vunpack.c.h.b16 %v892
    %v2981 = vunpack.c.l.b16 %v893
    %v2982 = vunpack.c.h.b16 %v893
    %v2983 = vunpack.c.l.b16 %v894
    %v2984 = vunpack.c.h.b16 %v894
    %v2985 = vunpack.c.l.b16 %v895
    %v2986 = vunpack.c.h.b16 %v895
    %v2987 = vunpack.c.l.b16 %v896
    %v2988 = vunpack.c.h.b16 %v896
    %v2989 = vunpack.c.l.b16 %v897
    %v2990 = vunpack.c.h.b16 %v897
    %v2991 = vunpack.c.l.b16 %v898
    %v2992 = vunpack.c.h.b16 %v898
    %v2993 = vunpack.c.l.b16 %v899
    %v2994 = vunpack.c.h.b16 %v899
    %v2995 = vunpack.c.l.b16 %v900
    %v2996 = vunpack.c.h.b16 %v900
    %v2997 = vunpack.c.l.b16 %v901
    %v2998 = vunpack.c.h.b16 %v901
    %v2999 = vunpack.c.l.b16 %v902
    %v3000 = vunpack.c.h.b16 %v902
    %v3001 = vunpack.c.l.b16 %v903
    %v3002 = vunpack.c.h.b16 %v903
    %v3003 = vunpack.c.l.b16 %v904
    %v3004 = vunpack.c.h.b16 %v904
    %v3005 = vunpack.c.l.b16 %v905
    %v3006 = vunpack.c.h.b16 %v905
    %v3007 = vunpack.c.l.b16 %v906
    %v3008 = vunpack.c.h.b16 %v906
    %v3009 = vunpack.c.l.b16 %v907
    %v3010 = vunpack.c.h.b16 %v907
    %v3011 = vunpack.c.l.b16 %v908
    %v3012 = vunpack.c.h.b16 %v908
    %v3013 = vunpack.c.l.b16 %v909
    %v3014 = vunpack.c.h.b16 %v909
    %v3015 = vunpack.c.l.b16 %v910
    %v3016 = vunpack.c.h.b16 %v910
    %v3017 = vunpack.c.l.b16 %v911
    %v3018 = vunpack.c.h.b16 %v911
    %v3019 = vunpack.c.l.b16 %v912
    %v3020 = vunpack.c.h.b16 %v912
    %v3021 = vunpack.c.l.b16 %v913
    %v3022 = vunpack.c.h.b16 %v913
    %v3023 = vunpack.c.l.b16 %v914
    %v3024 = vunpack.c.h.b16 %v914
    %v3025 = vunpack.c.l.b16 %v915
    %v3026 = vunpack.c.h.b16 %v915
    %v3027 = vunpack.c.l.b16 %v916
    %v3028 = vunpack.c.h.b16 %v916
    %v3029 = vunpack.c.l.b16 %v917
    %v3030 = vunpack.c.h.b16 %v917
    %v3031 = vunpack.c.l.b16 %v918
    %v3032 = vunpack.c.h.b16 %v918
    %v3033 = vunpack.c.l.b16 %v919
    %v3034 = vunpack.c.h.b16 %v919
    %v3035 = vunpack.c.l.b16 %v920
    %v3036 = vunpack.c.h.b16 %v920
    %v3037 = vunpack.c.l.b16 %v921
    %v3038 = vunpack.c.h.b16 %v921
    %v3039 = vunpack.c.l.b16 %v922
    %v3040 = vunpack.c.h.b16 %v922
    %v3041 = vunpack.c.l.b16 %v923
    %v3042 = vunpack.c.h.b16 %v923
    %v3043 = vunpack.c.l.b16 %v924
    %v3044 = vunpack.c.h.b16 %v924
    %v3045 = vunpack.c.l.b16 %v925
    %v3046 = vunpack.c.h.b16 %v925
    %v3047 = vunpack.c.l.b16 %v926
    %v3048 = vunpack.c.h.b16 %v926
    %v3049 = vunpack.c.l.b16 %v927
    %v3050 = vunpack.c.h.b16 %v927
    %v3051 = vunpack.c.l.b16 %v928
    %v3052 = vunpack.c.h.b16 %v928
    %v3053 = vunpack.c.l.b16 %v929
    %v3054 = vunpack.c.h.b16 %v929
    %v3055 = vunpack.c.l.b16 %v930
    %v3056 = vunpack.c.h.b16 %v930
    %v3057 = vunpack.c.l.b16 %v931
    %v3058 = vunpack.c.h.b16 %v931
    %v3059 = vunpack.c.l.b16 %v932
    %v3060 = vunpack.c.h.b16 %v932
    %v3061 = vunpack.c.l.b16 %v933
    %v3062 = vunpack.c.h.b16 %v933
    %v3063 = vunpack.c.l.b16 %v934
    %v3064 = vunpack.c.h.b16 %v934
    %v3065 = vunpack.c.l.b16 %v935
    %v3066 = vunpack.c.h.b16 %v935
    %v3067 = vunpack.c.l.b16 %v936
    %v3068 = vunpack.c.h.b16 %v936
    %v3069 = vunpack.c.l.b16 %v937
    %v3070 = vunpack.c.h.b16 %v937
    %v3071 = vunpack.c.l.b16 %v938
    %v3072 = vunpack.c.h.b16 %v938
    %v3073 = vunpack.c.l.b16 %v939
    %v3074 = vunpack.c.h.b16 %v939
    %v3075 = vunpack.c.l.b16 %v940
    %v3076 = vunpack.c.h.b16 %v940
    %v3077 = vunpack.c.l.b16 %v941
    %v3078 = vunpack.c.h.b16 %v941
    %v3079 = vunpack.c.l.b16 %v942
    %v3080 = vunpack.c.h.b16 %v942
    %v3081 = vunpack.c.l.b16 %v943
    %v3082 = vunpack.c.h.b16 %v943
    %v3083 = vunpack.c.l.b16 %v944
    %v3084 = vunpack.c.h.b16 %v944
    %v3085 = vunpack.c.l.b16 %v945
    %v3086 = vunpack.c.h.b16 %v945
    %v3087 = vunpack.c.l.b16 %v946
    %v3088 = vunpack.c.h.b16 %v946
    %v3089 = vunpack.c.l.b16 %v947
    %v3090 = vunpack.c.h.b16 %v947
    %v3091 = vunpack.c.l.b16 %v948
    %v3092 = vunpack.c.h.b16 %v948
    %v3093 = vunpack.c.l.b16 %v949
    %v3094 = vunpack.c.h.b16 %v949
    %v3095 = vunpack.c.l.b16 %v950
    %v3096 = vunpack.c.h.b16 %v950
    %v3097 = vunpack.c.l.b16 %v951
    %v3098 = vunpack.c.h.b16 %v951
    %v3099 = vunpack.c.l.b16 %v952
    %v3100 = vunpack.c.h.b16 %v952
    %v3101 = vunpack.c.l.b16 %v953
    %v3102 = vunpack.c.h.b16 %v953
    %v3103 = vunpack.c.l.b16 %v954
    %v3104 = vunpack.c.h.b16 %v954
    %v3105 = vunpack.c.l.b16 %v955
    %v3106 = vunpack.c.h.b16 %v955
    %v3107 = vunpack.c.l.b16 %v956
    %v3108 = vunpack.c.h.b16 %v956
    %v3109 = vunpack.c.l.b16 %v957
    %v3110 = vunpack.c.h.b16 %v957
    %v3111 = vunpack.c.l.b16 %v958
    %v3112 = vunpack.c.h.b16 %v958
    %v3113 = vunpack.c.l.b16 %v959
    %v3114 = vunpack.c.h.b16 %v959
    %v3115 = vunpack.c.l.b16 %v960
    %v3116 = vunpack.c.h.b16 %v960
    %v3117 = vunpack.c.l.b16 %v961
    %v3118 = vunpack.c.h.b16 %v961
    %v3119 = vunpack.c.l.b16 %v962
    %v3120 = vunpack.c.h.b16 %v962
    %v3121 = vunpack.c.l.b16 %v963
    %v3122 = vunpack.c.h.b16 %v963
    %v3123 = vunpack.c.l.b16 %v964
    %v3124 = vunpack.c.h.b16 %v964
    %v3125 = vunpack.c.l.b16 %v965
    %v3126 = vunpack.c.h.b16 %v965
    %v3127 = vunpack.c.l.b16 %v966
    %v3128 = vunpack.c.h.b16 %v966
    %v3129 = vunpack.c.l.b16 %v967
    %v3130 = vunpack.c.h.b16 %v967
    %v3131 = vunpack.c.l.b16 %v968
    %v3132 = vunpack.c.h.b16 %v968
    %v3133 = vunpack.c.l.b16 %v969
    %v3134 = vunpack.c.h.b16 %v969
    %v3135 = vunpack.c.l.b16 %v970
    %v3136 = vunpack.c.h.b16 %v970
    %v3137 = vunpack.c.l.b16 %v971
    %v3138 = vunpack.c.h.b16 %v971
    %v3139 = vunpack.c.l.b16 %v972
    %v3140 = vunpack.c.h.b16 %v972
    %v3141 = vunpack.c.l.b16 %v973
    %v3142 = vunpack.c.h.b16 %v973
    %v3143 = vunpack.c.l.b16 %v974
    %v3144 = vunpack.c.h.b16 %v974
    %v3145 = vunpack.c.l.b16 %v975
    %v3146 = vunpack.c.h.b16 %v975
    %v3147 = vunpack.c.l.b16 %v976
    %v3148 = vunpack.c.h.b16 %v976
    %v3149 = vunpack.c.l.b16 %v977
    %v3150 = vunpack.c.h.b16 %v977
    %v3151 = vunpack.c.l.b16 %v978
    %v3152 = vunpack.c.h.b16 %v978
    %v3153 = vunpack.c.l.b16 %v979
    %v3154 = vunpack.c.h.b16 %v979
    %v3155 = vunpack.c.l.b16 %v980
    %v3156 = vunpack.c.h.b16 %v980
    %v3157 = vunpack.c.l.b16 %v981
    %v3158 = vunpack.c.h.b16 %v981
    %v3159 = vunpack.c.l.b16 %v982
    %v3160 = vunpack.c.h.b16 %v982
    %v3161 = vunpack.c.l.b16 %v983
    %v3162 = vunpack.c.h.b16 %v983
    %v3163 = vunpack.c.l.b16 %v984
    %v3164 = vunpack.c.h.b16 %v984
    %v3165 = vunpack.c.l.b16 %v985
    %v3166 = vunpack.c.h.b16 %v985
    %v3167 = vunpack.c.l.b16 %v986
    %v3168 = vunpack.c.h.b16 %v986
    %v3169 = vunpack.c.l.b16 %v987
    %v3170 = vunpack.c.h.b16 %v987
    %v3171 = vunpack.c.l.b16 %v988
    %v3172 = vunpack.c.h.b16 %v988
    %v3173 = vunpack.c.l.b16 %v989
    %v3174 = vunpack.c.h.b16 %v989
    %v3175 = vunpack.c.l.b16 %v990
    %v3176 = vunpack.c.h.b16 %v990
    %v3177 = vunpack.c.l.b16 %v991
    %v3178 = vunpack.c.h.b16 %v991
    %v3179 = vunpack.c.l.b16 %v992
    %v3180 = vunpack.c.h.b16 %v992
    %v3181 = vunpack.c.l.b16 %v993
    %v3182 = vunpack.c.h.b16 %v993
    %v3183 = vunpack.c.l.b16 %v994
    %v3184 = vunpack.c.h.b16 %v994
    %v3185 = vunpack.c.l.b16 %v995
    %v3186 = vunpack.c.h.b16 %v995
    %v3187 = vunpack.c.l.b16 %v996
    %v3188 = vunpack.c.h.b16 %v996
    %v3189 = vunpack.c.l.b16 %v997
    %v3190 = vunpack.c.h.b16 %v997
    %v3191 = vunpack.c.l.b16 %v998
    %v3192 = vunpack.c.h.b16 %v998
    %v3193 = vunpack.c.l.b16 %v999
    %v3194 = vunpack.c.h.b16 %v999
    %v3195 = vunpack.c.l.b16 %v1000
    %v3196 = vunpack.c.h.b16 %v1000
    %v3197 = vunpack.c.l.b16 %v1001
    %v3198 = vunpack.c.h.b16 %v1001
    %v3199 = vunpack.c.l.b16 %v1002
    %v3200 = vunpack.c.h.b16 %v1002
    %v3201 = vunpack.c.l.b16 %v1003
    %v3202 = vunpack.c.h.b16 %v1003
    %v3203 = vunpack.c.l.b16 %v1004
    %v3204 = vunpack.c.h.b16 %v1004
    %v3205 = vunpack.c.l.b16 %v1005
    %v3206 = vunpack.c.h.b16 %v1005
    %v3207 = vunpack.c.l.b16 %v1006
    %v3208 = vunpack.c.h.b16 %v1006
    %v3209 = vunpack.c.l.b16 %v1007
    %v3210 = vunpack.c.h.b16 %v1007
    %v3211 = vunpack.c.l.b16 %v1008
    %v3212 = vunpack.c.h.b16 %v1008
    %v3213 = vunpack.c.l.b16 %v1009
    %v3214 = vunpack.c.h.b16 %v1009
    %v3215 = vunpack.c.l.b16 %v1010
    %v3216 = vunpack.c.h.b16 %v1010
    %v3217 = vunpack.c.l.b16 %v1011
    %v3218 = vunpack.c.h.b16 %v1011
    %v3219 = vunpack.c.l.b16 %v1012
    %v3220 = vunpack.c.h.b16 %v1012
    %v3221 = vunpack.c.l.b16 %v1013
    %v3222 = vunpack.c.h.b16 %v1013
    %v3223 = vunpack.c.l.b16 %v1014
    %v3224 = vunpack.c.h.b16 %v1014
    %v3225 = vunpack.c.l.b16 %v1015
    %v3226 = vunpack.c.h.b16 %v1015
    %v3227 = vunpack.c.l.b16 %v1016
    %v3228 = vunpack.c.h.b16 %v1016
    %v3229 = vunpack.c.l.b16 %v1017
    %v3230 = vunpack.c.h.b16 %v1017
    %v3231 = vunpack.c.l.b16 %v1018
    %v3232 = vunpack.c.h.b16 %v1018
    %v3233 = vunpack.c.l.b16 %v1019
    %v3234 = vunpack.c.h.b16 %v1019
    %v3235 = vunpack.c.l.b16 %v1020
    %v3236 = vunpack.c.h.b16 %v1020
    %v3237 = vunpack.c.l.b16 %v1021
    %v3238 = vunpack.c.h.b16 %v1021
    %v3239 = vunpack.c.l.b16 %v1022
    %v3240 = vunpack.c.h.b16 %v1022
    %v3241 = vunpack.c.l.b16 %v1023
    %v3242 = vunpack.c.h.b16 %v1023
    %v3243 = vunpack.c.l.b16 %v1024
    %v3244 = vunpack.c.h.b16 %v1024
    %v3245 = vunpack.c.l.b16 %v1025
    %v3246 = vunpack.c.h.b16 %v1025
    %v3247 = vunpack.c.l.b16 %v1026
    %v3248 = vunpack.c.h.b16 %v1026
    %v3249 = vunpack.c.l.b16 %v1027
    %v3250 = vunpack.c.h.b16 %v1027
    %v3251 = vunpack.c.l.b16 %v1028
    %v3252 = vunpack.c.h.b16 %v1028
    %v3253 = vunpack.c.l.b16 %v1029
    %v3254 = vunpack.c.h.b16 %v1029
    %v3255 = vunpack.c.l.b16 %v1030
    %v3256 = vunpack.c.h.b16 %v1030
    %v3257 = vunpack.c.l.b16 %v1031
    %v3258 = vunpack.c.h.b16 %v1031
    %v3259 = vunpack.c.l.b16 %v1032
    %v3260 = vunpack.c.h.b16 %v1032
    %v3261 = vunpack.c.l.b16 %v1033
    %v3262 = vunpack.c.h.b16 %v1033
    %v3263 = vunpack.c.l.b16 %v1034
    %v3264 = vunpack.c.h.b16 %v1034
    %v3265 = vunpack.c.l.b16 %v1035
    %v3266 = vunpack.c.h.b16 %v1035
    %v3267 = vunpack.c.l.b16 %v1036
    %v3268 = vunpack.c.h.b16 %v1036
    %v3269 = vunpack.c.l.b16 %v1037
    %v3270 = vunpack.c.h.b16 %v1037
    %v3271 = vunpack.c.l.b16 %v1038
    %v3272 = vunpack.c.h.b16 %v1038
    %v3273 = vunpack.c.l.b16 %v1039
    %v3274 = vunpack.c.h.b16 %v1039
    %v3275 = vunpack.c.l.b16 %v1040
    %v3276 = vunpack.c.h.b16 %v1040
    %v3277 = vunpack.c.l.b16 %v1041
    %v3278 = vunpack.c.h.b16 %v1041
    %v3279 = vunpack.c.l.b16 %v1042
    %v3280 = vunpack.c.h.b16 %v1042
    %v3281 = vunpack.c.l.b16 %v1043
    %v3282 = vunpack.c.h.b16 %v1043
    %v3283 = vunpack.c.l.b16 %v1044
    %v3284 = vunpack.c.h.b16 %v1044
    %v3285 = vunpack.c.l.b16 %v1045
    %v3286 = vunpack.c.h.b16 %v1045
    %v3287 = vunpack.c.l.b16 %v1046
    %v3288 = vunpack.c.h.b16 %v1046
    %v3289 = vunpack.c.l.b16 %v1047
    %v3290 = vunpack.c.h.b16 %v1047
    %v3291 = vunpack.c.l.b16 %v1048
    %v3292 = vunpack.c.h.b16 %v1048
    %v3293 = vunpack.c.l.b16 %v1049
    %v3294 = vunpack.c.h.b16 %v1049
    %v3295 = vunpack.c.l.b16 %v1050
    %v3296 = vunpack.c.h.b16 %v1050
    %v3297 = vunpack.c.l.b16 %v1051
    %v3298 = vunpack.c.h.b16 %v1051
    %v3299 = vunpack.c.l.b16 %v1052
    %v3300 = vunpack.c.h.b16 %v1052
    %v3301 = vunpack.c.l.b16 %v1053
    %v3302 = vunpack.c.h.b16 %v1053
    %v3303 = vunpack.c.l.b16 %v1054
    %v3304 = vunpack.c.h.b16 %v1054
    %v3305 = vunpack.c.l.b16 %v1055
    %v3306 = vunpack.c.h.b16 %v1055
    %v3307 = vunpack.c.l.b16 %v1056
    %v3308 = vunpack.c.h.b16 %v1056
    %v3309 = vunpack.c.l.b16 %v1057
    %v3310 = vunpack.c.h.b16 %v1057
    %v3311 = vunpack.c.l.b16 %v1058
    %v3312 = vunpack.c.h.b16 %v1058
    %v3313 = vunpack.c.l.b16 %v1059
    %v3314 = vunpack.c.h.b16 %v1059
    %v3315 = vunpack.c.l.b16 %v1060
    %v3316 = vunpack.c.h.b16 %v1060
    %v3317 = vunpack.c.l.b16 %v1061
    %v3318 = vunpack.c.h.b16 %v1061
    %v3319 = vunpack.c.l.b16 %v1062
    %v3320 = vunpack.c.h.b16 %v1062
    %v3321 = vunpack.c.l.b16 %v1063
    %v3322 = vunpack.c.h.b16 %v1063
    %v3323 = vunpack.c.l.b16 %v1064
    %v3324 = vunpack.c.h.b16 %v1064
    %v3325 = vunpack.c.l.b16 %v1065
    %v3326 = vunpack.c.h.b16 %v1065
    %v3327 = vunpack.c.l.b16 %v1066
    %v3328 = vunpack.c.h.b16 %v1066
    %v3329 = vunpack.c.l.b16 %v1067
    %v3330 = vunpack.c.h.b16 %v1067
    %v3331 = vunpack.c.l.b16 %v1068
    %v3332 = vunpack.c.h.b16 %v1068
    %v3333 = vunpack.c.l.b16 %v1069
    %v3334 = vunpack.c.h.b16 %v1069
    %v3335 = vunpack.c.l.b16 %v1070
    %v3336 = vunpack.c.h.b16 %v1070
    %v3337 = vunpack.c.l.b16 %v1071
    %v3338 = vunpack.c.h.b16 %v1071
    %v3339 = vunpack.c.l.b16 %v1072
    %v3340 = vunpack.c.h.b16 %v1072
    %v3341 = vunpack.c.l.b16 %v1073
    %v3342 = vunpack.c.h.b16 %v1073
    %v3343 = vunpack.c.l.b16 %v1074
    %v3344 = vunpack.c.h.b16 %v1074
    %v3345 = vunpack.c.l.b16 %v1075
    %v3346 = vunpack.c.h.b16 %v1075
    %v3347 = vunpack.c.l.b16 %v1076
    %v3348 = vunpack.c.h.b16 %v1076
    %v3349 = vunpack.c.l.b16 %v1077
    %v3350 = vunpack.c.h.b16 %v1077
    %v3351 = vunpack.c.l.b16 %v1078
    %v3352 = vunpack.c.h.b16 %v1078
    %v3353 = vunpack.c.l.b16 %v1079
    %v3354 = vunpack.c.h.b16 %v1079
    %v3355 = vunpack.c.l.b16 %v1080
    %v3356 = vunpack.c.h.b16 %v1080
    %v3357 = vunpack.c.l.b16 %v1081
    %v3358 = vunpack.c.h.b16 %v1081
    %v3359 = vunpack.c.l.b16 %v1082
    %v3360 = vunpack.c.h.b16 %v1082
    %v3361 = vunpack.c.l.b16 %v1083
    %v3362 = vunpack.c.h.b16 %v1083
    %v3363 = vunpack.c.l.b16 %v1084
    %v3364 = vunpack.c.h.b16 %v1084
    %v3365 = vunpack.c.l.b16 %v1085
    %v3366 = vunpack.c.h.b16 %v1085
    %v3367 = vunpack.c.l.b16 %v1086
    %v3368 = vunpack.c.h.b16 %v1086
    %v3369 = vunpack.c.l.b16 %v1087
    %v3370 = vunpack.c.h.b16 %v1087
    %v3371 = vunpack.c.l.b16 %v1088
    %v3372 = vunpack.c.h.b16 %v1088
    %v3373 = vunpack.c.l.b16 %v1089
    %v3374 = vunpack.c.h.b16 %v1089
    %v3375 = vunpack.c.l.b16 %v1090
    %v3376 = vunpack.c.h.b16 %v1090
    %v3377 = vunpack.c.l.b16 %v1091
    %v3378 = vunpack.c.h.b16 %v1091
    %v3379 = vunpack.c.l.b16 %v1092
    %v3380 = vunpack.c.h.b16 %v1092
    %v3381 = vunpack.c.l.b16 %v1093
    %v3382 = vunpack.c.h.b16 %v1093
    %v3383 = vunpack.c.l.b16 %v1094
    %v3384 = vunpack.c.h.b16 %v1094
    %v3385 = vunpack.c.l.b16 %v1095
    %v3386 = vunpack.c.h.b16 %v1095
    %v3387 = vunpack.c.l.b16 %v1096
    %v3388 = vunpack.c.h.b16 %v1096
    %v3389 = vunpack.c.l.b16 %v1097
    %v3390 = vunpack.c.h.b16 %v1097
    %v3391 = vunpack.c.l.b16 %v1098
    %v3392 = vunpack.c.h.b16 %v1098
    %v3393 = vunpack.c.l.b16 %v1099
    %v3394 = vunpack.c.h.b16 %v1099
    %v3395 = vunpack.c.l.b16 %v1100
    %v3396 = vunpack.c.h.b16 %v1100
    %v3397 = vunpack.c.l.b16 %v1101
    %v3398 = vunpack.c.h.b16 %v1101
    %v3399 = vunpack.c.l.b16 %v1102
    %v3400 = vunpack.c.h.b16 %v1102
    %v3401 = vunpack.c.l.b16 %v1103
    %v3402 = vunpack.c.h.b16 %v1103
    %v3403 = vunpack.c.l.b16 %v1104
    %v3404 = vunpack.c.h.b16 %v1104
    %v3405 = vunpack.c.l.b16 %v1105
    %v3406 = vunpack.c.h.b16 %v1105
    %v3407 = vunpack.c.l.b16 %v1106
    %v3408 = vunpack.c.h.b16 %v1106
    %v3409 = vunpack.c.l.b16 %v1107
    %v3410 = vunpack.c.h.b16 %v1107
    %v3411 = vunpack.c.l.b16 %v1108
    %v3412 = vunpack.c.h.b16 %v1108
    %v3413 = vunpack.c.l.b16 %v1109
    %v3414 = vunpack.c.h.b16 %v1109
    %v3415 = vunpack.c.l.b16 %v1110
    %v3416 = vunpack.c.h.b16 %v1110
    %v3417 = vunpack.c.l.b16 %v1111
    %v3418 = vunpack.c.h.b16 %v1111
    %v3419 = vunpack.c.l.b16 %v1112
    %v3420 = vunpack.c.h.b16 %v1112
    %v3421 = vunpack.c.l.b16 %v1113
    %v3422 = vunpack.c.h.b16 %v1113
    %v3423 = vunpack.c.l.b16 %v1114
    %v3424 = vunpack.c.h.b16 %v1114
    %v3425 = vunpack.c.l.b16 %v1115
    %v3426 = vunpack.c.h.b16 %v1115
    %v3427 = vunpack.c.l.b16 %v1116
    %v3428 = vunpack.c.h.b16 %v1116
    %v3429 = vunpack.c.l.b16 %v1117
    %v3430 = vunpack.c.h.b16 %v1117
    %v3431 = vunpack.c.l.b16 %v1118
    %v3432 = vunpack.c.h.b16 %v1118
    %v3433 = vunpack.c.l.b16 %v1119
    %v3434 = vunpack.c.h.b16 %v1119
    %v3435 = vunpack.c.l.b16 %v1120
    %v3436 = vunpack.c.h.b16 %v1120
    %v3437 = vunpack.c.l.b16 %v1121
    %v3438 = vunpack.c.h.b16 %v1121
    %v3439 = vunpack.c.l.b16 %v1122
    %v3440 = vunpack.c.h.b16 %v1122
    %v3441 = vunpack.c.l.b16 %v1123
    %v3442 = vunpack.c.h.b16 %v1123
    %v3443 = vunpack.c.l.b16 %v1124
    %v3444 = vunpack.c.h.b16 %v1124
    %v3445 = vunpack.c.l.b16 %v1125
    %v3446 = vunpack.c.h.b16 %v1125
    %v3447 = vunpack.c.l.b16 %v1126
    %v3448 = vunpack.c.h.b16 %v1126
    %v3449 = vunpack.c.l.b16 %v1127
    %v3450 = vunpack.c.h.b16 %v1127
    %v3451 = vunpack.c.l.b16 %v1128
    %v3452 = vunpack.c.h.b16 %v1128
    %v3453 = vunpack.c.l.b16 %v1129
    %v3454 = vunpack.c.h.b16 %v1129
    %v3455 = vunpack.c.l.b16 %v1130
    %v3456 = vunpack.c.h.b16 %v1130
    %v3457 = vunpack.c.l.b16 %v1131
    %v3458 = vunpack.c.h.b16 %v1131
    %v3459 = vunpack.c.l.b16 %v1132
    %v3460 = vunpack.c.h.b16 %v1132
    %v3461 = vunpack.c.l.b16 %v1133
    %v3462 = vunpack.c.h.b16 %v1133
    %v3463 = vunpack.c.l.b16 %v1134
    %v3464 = vunpack.c.h.b16 %v1134
    %v3465 = vunpack.c.l.b16 %v1135
    %v3466 = vunpack.c.h.b16 %v1135
    %v3467 = vunpack.c.l.b16 %v1136
    %v3468 = vunpack.c.h.b16 %v1136
    %v3469 = vunpack.c.l.b16 %v1137
    %v3470 = vunpack.c.h.b16 %v1137
    %v3471 = vunpack.c.l.b16 %v1138
    %v3472 = vunpack.c.h.b16 %v1138
    %v3473 = vunpack.c.l.b16 %v1139
    %v3474 = vunpack.c.h.b16 %v1139
    %v3475 = vunpack.c.l.b16 %v1140
    %v3476 = vunpack.c.h.b16 %v1140
    %v3477 = vunpack.c.l.b16 %v1141
    %v3478 = vunpack.c.h.b16 %v1141
    %v3479 = vunpack.c.l.b16 %v1142
    %v3480 = vunpack.c.h.b16 %v1142
    %v3481 = vunpack.c.l.b16 %v1143
    %v3482 = vunpack.c.h.b16 %v1143
    %v3483 = vunpack.c.l.b16 %v1144
    %v3484 = vunpack.c.h.b16 %v1144
    %v3485 = vunpack.c.l.b16 %v1145
    %v3486 = vunpack.c.h.b16 %v1145
    %v3487 = vunpack.c.l.b16 %v1146
    %v3488 = vunpack.c.h.b16 %v1146
    %v3489 = vunpack.c.l.b16 %v1147
    %v3490 = vunpack.c.h.b16 %v1147
    %v3491 = vunpack.c.l.b16 %v1148
    %v3492 = vunpack.c.h.b16 %v1148
    %v3493 = vunpack.c.l.b16 %v1149
    %v3494 = vunpack.c.h.b16 %v1149
    %v3495 = vunpack.c.l.b16 %v1150
    %v3496 = vunpack.c.h.b16 %v1150
    %v3497 = vunpack.c.l.b16 %v1151
    %v3498 = vunpack.c.h.b16 %v1151
    %v3499 = vunpack.c.l.b16 %v1152
    %v3500 = vunpack.c.h.b16 %v1152
    %v3501 = vunpack.c.l.b16 %v1153
    %v3502 = vunpack.c.h.b16 %v1153
    %v3503 = vunpack.c.l.b16 %v1154
    %v3504 = vunpack.c.h.b16 %v1154
    %v3505 = vunpack.c.l.b16 %v1155
    %v3506 = vunpack.c.h.b16 %v1155
    %v3507 = vunpack.c.l.b16 %v1156
    %v3508 = vunpack.c.h.b16 %v1156
    %v3509 = vunpack.c.l.b16 %v1157
    %v3510 = vunpack.c.h.b16 %v1157
    %v3511 = vunpack.c.l.b16 %v1158
    %v3512 = vunpack.c.h.b16 %v1158
    %v3513 = vunpack.c.l.b16 %v1159
    %v3514 = vunpack.c.h.b16 %v1159
    %v3515 = vunpack.c.l.b16 %v1160
    %v3516 = vunpack.c.h.b16 %v1160
    %v3517 = vunpack.c.l.b16 %v1161
    %v3518 = vunpack.c.h.b16 %v1161
    %v3519 = vunpack.c.l.b16 %v1162
    %v3520 = vunpack.c.h.b16 %v1162
    %v3521 = vunpack.c.l.b16 %v1163
    %v3522 = vunpack.c.h.b16 %v1163
    %v3523 = vunpack.c.l.b16 %v1164
    %v3524 = vunpack.c.h.b16 %v1164
    %v3525 = vunpack.c.l.b16 %v1165
    %v3526 = vunpack.c.h.b16 %v1165
    %v3527 = vunpack.c.l.b16 %v1166
    %v3528 = vunpack.c.h.b16 %v1166
    %v3529 = vunpack.c.l.b16 %v1167
    %v3530 = vunpack.c.h.b16 %v1167
    %v3531 = vunpack.c.l.b16 %v1168
    %v3532 = vunpack.c.h.b16 %v1168
    %v3533 = vunpack.c.l.b16 %v1169
    %v3534 = vunpack.c.h.b16 %v1169
    %v3535 = vunpack.c.l.b16 %v1170
    %v3536 = vunpack.c.h.b16 %v1170
    %v3537 = vunpack.c.l.b16 %v1171
    %v3538 = vunpack.c.h.b16 %v1171
    %v3539 = vunpack.c.l.b16 %v1172
    %v3540 = vunpack.c.h.b16 %v1172
    %v3541 = vunpack.c.l.b16 %v1173
    %v3542 = vunpack.c.h.b16 %v1173
    %v3543 = vunpack.c.l.b16 %v1174
    %v3544 = vunpack.c.h.b16 %v1174
    %v3545 = vunpack.c.l.b16 %v1175
    %v3546 = vunpack.c.h.b16 %v1175
    %v3547 = vunpack.c.l.b16 %v1176
    %v3548 = vunpack.c.h.b16 %v1176
    %v3549 = vunpack.c.l.b16 %v1177
    %v3550 = vunpack.c.h.b16 %v1177
    %v3551 = vunpack.c.l.b16 %v1178
    %v3552 = vunpack.c.h.b16 %v1178
    %v3553 = vunpack.c.l.b16 %v1179
    %v3554 = vunpack.c.h.b16 %v1179
    %v3555 = vunpack.c.l.b16 %v1180
    %v3556 = vunpack.c.h.b16 %v1180
    %v3557 = vunpack.c.l.b16 %v1181
    %v3558 = vunpack.c.h.b16 %v1181
    %v3559 = vunpack.c.l.b16 %v1182
    %v3560 = vunpack.c.h.b16 %v1182
    %v3561 = vunpack.c.l.b16 %v1183
    %v3562 = vunpack.c.h.b16 %v1183
    %v3563 = vunpack.c.l.b16 %v1184
    %v3564 = vunpack.c.h.b16 %v1184
    %v3565 = vunpack.c.l.b16 %v1185
    %v3566 = vunpack.c.h.b16 %v1185
    %v3567 = vunpack.c.l.b16 %v1186
    %v3568 = vunpack.c.h.b16 %v1186
    %v3569 = vunpack.c.l.b16 %v1187
    %v3570 = vunpack.c.h.b16 %v1187
    %v3571 = vunpack.c.l.b16 %v1188
    %v3572 = vunpack.c.h.b16 %v1188
    %v3573 = vunpack.c.l.b16 %v1189
    %v3574 = vunpack.c.h.b16 %v1189
    %v3575 = vunpack.c.l.b16 %v1190
    %v3576 = vunpack.c.h.b16 %v1190
    %v3577 = vunpack.c.l.b16 %v1191
    %v3578 = vunpack.c.h.b16 %v1191
    %v3579 = vunpack.c.l.b16 %v1192
    %v3580 = vunpack.c.h.b16 %v1192
    %v3581 = vunpack.c.l.b16 %v1193
    %v3582 = vunpack.c.h.b16 %v1193
    %v3583 = vunpack.c.l.b16 %v1194
    %v3584 = vunpack.c.h.b16 %v1194
    %v3585 = vunpack.c.l.b16 %v1195
    %v3586 = vunpack.c.h.b16 %v1195
    %v3587 = vunpack.c.l.b16 %v1196
    %v3588 = vunpack.c.h.b16 %v1196
    %v3589 = vunpack.c.l.b16 %v1197
    %v3590 = vunpack.c.h.b16 %v1197
    %v3591 = vunpack.c.l.b16 %v1198
    %v3592 = vunpack.c.h.b16 %v1198
    %v3593 = vunpack.c.l.b16 %v1199
    %v3594 = vunpack.c.h.b16 %v1199
    %v3595 = vunpack.c.l.b16 %v1200
    %v3596 = vunpack.c.h.b16 %v1200
    %v3597 = vunpack.c.l.b16 %v1201
    %v3598 = vunpack.c.h.b16 %v1201
    %v3599 = vunpack.c.l.b16 %v1202
    %v3600 = vunpack.c.h.b16 %v1202
    %v3601 = vunpack.c.l.b16 %v1203
    %v3602 = vunpack.c.h.b16 %v1203
    %v3603 = vunpack.c.l.b16 %v1204
    %v3604 = vunpack.c.h.b16 %v1204
    %v3605 = vunpack.c.l.b16 %v1205
    %v3606 = vunpack.c.h.b16 %v1205
    %v3607 = vunpack.c.l.b16 %v1206
    %v3608 = vunpack.c.h.b16 %v1206
    %v3609 = vunpack.c.l.b16 %v1207
    %v3610 = vunpack.c.h.b16 %v1207
    %v3611 = vunpack.c.l.b16 %v1208
    %v3612 = vunpack.c.h.b16 %v1208
    %v3613 = vunpack.c.l.b16 %v1209
    %v3614 = vunpack.c.h.b16 %v1209
    %v3615 = vunpack.c.l.b16 %v1210
    %v3616 = vunpack.c.h.b16 %v1210
    %v3617 = vunpack.c.l.b16 %v1211
    %v3618 = vunpack.c.h.b16 %v1211
    %v3619 = vunpack.c.l.b16 %v1212
    %v3620 = vunpack.c.h.b16 %v1212
    %v3621 = vunpack.c.l.b16 %v1213
    %v3622 = vunpack.c.h.b16 %v1213
    %v3623 = vunpack.c.l.b16 %v1214
    %v3624 = vunpack.c.h.b16 %v1214
    %v3625 = vunpack.c.l.b16 %v1215
    %v3626 = vunpack.c.h.b16 %v1215
    %v3627 = vunpack.c.l.b16 %v1216
    %v3628 = vunpack.c.h.b16 %v1216
    %v3629 = vunpack.c.l.b16 %v1217
    %v3630 = vunpack.c.h.b16 %v1217
    %v3631 = vunpack.c.l.b16 %v1218
    %v3632 = vunpack.c.h.b16 %v1218
    %v3633 = vunpack.c.l.b16 %v1219
    %v3634 = vunpack.c.h.b16 %v1219
    %v3635 = vunpack.c.l.b16 %v1220
    %v3636 = vunpack.c.h.b16 %v1220
    %v3637 = vunpack.c.l.b16 %v1221
    %v3638 = vunpack.c.h.b16 %v1221
    %v3639 = vunpack.c.l.b16 %v1222
    %v3640 = vunpack.c.h.b16 %v1222
    %v3641 = vunpack.c.l.b16 %v1223
    %v3642 = vunpack.c.h.b16 %v1223
    %v3643 = vunpack.c.l.b16 %v1224
    %v3644 = vunpack.c.h.b16 %v1224
    %v3645 = vunpack.c.l.b16 %v1225
    %v3646 = vunpack.c.h.b16 %v1225
    %v3647 = vunpack.c.l.b16 %v1226
    %v3648 = vunpack.c.h.b16 %v1226
    %v3649 = vunpack.c.l.b16 %v1227
    %v3650 = vunpack.c.h.b16 %v1227
    %v3651 = vunpack.c.l.b16 %v1228
    %v3652 = vunpack.c.h.b16 %v1228
    %v3653 = vunpack.c.l.b16 %v1229
    %v3654 = vunpack.c.h.b16 %v1229
    %v3655 = vunpack.c.l.b16 %v1230
    %v3656 = vunpack.c.h.b16 %v1230
    %v3657 = vunpack.c.l.b16 %v1231
    %v3658 = vunpack.c.h.b16 %v1231
    %v3659 = vunpack.c.l.b16 %v1232
    %v3660 = vunpack.c.h.b16 %v1232
    %v3661 = vunpack.c.l.b16 %v1233
    %v3662 = vunpack.c.h.b16 %v1233
    %v3663 = vunpack.c.l.b16 %v1234
    %v3664 = vunpack.c.h.b16 %v1234
    %v3665 = vunpack.c.l.b16 %v1235
    %v3666 = vunpack.c.h.b16 %v1235
    %v3667 = vunpack.c.l.b16 %v1236
    %v3668 = vunpack.c.h.b16 %v1236
    %v3669 = vunpack.c.l.b16 %v1237
    %v3670 = vunpack.c.h.b16 %v1237
    %v3671 = vunpack.c.l.b16 %v1238
    %v3672 = vunpack.c.h.b16 %v1238
    %v3673 = vunpack.c.l.b16 %v1239
    %v3674 = vunpack.c.h.b16 %v1239
    %v3675 = vunpack.c.l.b16 %v1240
    %v3676 = vunpack.c.h.b16 %v1240
    %v3677 = vunpack.c.l.b16 %v1241
    %v3678 = vunpack.c.h.b16 %v1241
    %v3679 = vunpack.c.l.b16 %v1242
    %v3680 = vunpack.c.h.b16 %v1242
    %v3681 = vunpack.c.l.b16 %v1243
    %v3682 = vunpack.c.h.b16 %v1243
    %v3683 = vunpack.c.l.b16 %v1244
    %v3684 = vunpack.c.h.b16 %v1244
    %v3685 = vunpack.c.l.b16 %v1245
    %v3686 = vunpack.c.h.b16 %v1245
    %v3687 = vunpack.c.l.b16 %v1246
    %v3688 = vunpack.c.h.b16 %v1246
    %v3689 = vunpack.c.l.b16 %v1247
    %v3690 = vunpack.c.h.b16 %v1247
    %v3691 = vunpack.c.l.b16 %v1248
    %v3692 = vunpack.c.h.b16 %v1248
    %v3693 = vunpack.c.l.b16 %v1249
    %v3694 = vunpack.c.h.b16 %v1249
    %v3695 = vunpack.c.l.b16 %v1250
    %v3696 = vunpack.c.h.b16 %v1250
    %v3697 = vunpack.c.l.b16 %v1251
    %v3698 = vunpack.c.h.b16 %v1251
    %v3699 = vunpack.c.l.b16 %v1252
    %v3700 = vunpack.c.h.b16 %v1252
    %v3701 = vunpack.c.l.b16 %v1253
    %v3702 = vunpack.c.h.b16 %v1253
    %v3703 = vunpack.c.l.b16 %v1254
    %v3704 = vunpack.c.h.b16 %v1254
    %v3705 = vunpack.c.l.b16 %v1255
    %v3706 = vunpack.c.h.b16 %v1255
    %v3707 = vunpack.c.l.b16 %v1256
    %v3708 = vunpack.c.h.b16 %v1256
    %v3709 = vunpack.c.l.b16 %v1257
    %v3710 = vunpack.c.h.b16 %v1257
    %v3711 = vunpack.c.l.b16 %v1258
    %v3712 = vunpack.c.h.b16 %v1258
    %v3713 = vpack.c.b16 %v2123, %v2113
    %v3714 = vpack.c.b16 %v2124, %v2114
    %v3715 = vpack.c.b16 %v2125, %v2115
    %v3716 = vpack.c.b16 %v2126, %v2116
    %v3717 = vpack.c.b16 %v2127, %v2117
    %v3718 = vpack.c.b16 %v2128, %v2118
    %v3719 = vpack.c.b16 %v2129, %v2119
    %v3720 = vpack.c.b16 %v2130, %v2120
    %v3721 = vpack.c.b16 %v2131, %v2121
    %v3722 = vpack.c.b16 %v2132, %v2122
    %v3723 = vpack.c.b16 %v2143, %v2133
    %v3724 = vpack.c.b16 %v2144, %v2134
    %v3725 = vpack.c.b16 %v2145, %v2135
    %v3726 = vpack.c.b16 %v2146, %v2136
    %v3727 = vpack.c.b16 %v2147, %v2137
    %v3728 = vpack.c.b16 %v2148, %v2138
    %v3729 = vpack.c.b16 %v2149, %v2139
    %v3730 = vpack.c.b16 %v2150, %v2140
    %v3731 = vpack.c.b16 %v2151, %v2141
    %v3732 = vpack.c.b16 %v2152, %v2142
    %v3733 = vpack.c.b16 %v2163, %v2153
    %v3734 = vpack.c.b16 %v2164, %v2154
    %v3735 = vpack.c.b16 %v2165, %v2155
    %v3736 = vpack.c.b16 %v2166, %v2156
    %v3737 = vpack.c.b16 %v2167, %v2157
    %v3738 = vpack.c.b16 %v2168, %v2158
    %v3739 = vpack.c.b16 %v2169, %v2159
    %v3740 = vpack.c.b16 %v2170, %v2160
    %v3741 = vpack.c.b16 %v2171, %v2161
    %v3742 = vpack.c.b16 %v2172, %v2162
    %v3743 = vpack.c.b16 %v2183, %v2173
    %v3744 = vpack.c.b16 %v2184, %v2174
    %v3745 = vpack.c.b16 %v2185, %v2175
    %v3746 = vpack.c.b16 %v2186, %v2176
    %v3747 = vpack.c.b16 %v2187, %v2177
    %v3748 = vpack.c.b16 %v2188, %v2178
    %v3749 = vpack.c.b16 %v2189, %v2179
    %v3750 = vpack.c.b16 %v2190, %v2180
    %v3751 = vpack.c.b16 %v2191, %v2181
    %v3752 = vpack.c.b16 %v2192, %v2182
    %v3753 = vpack.c.b16 %v2203, %v2193
    %v3754 = vpack.c.b16 %v2204, %v2194
    %v3755 = vpack.c.b16 %v2205, %v2195
    %v3756 = vpack.c.b16 %v2206, %v2196
    %v3757 = vpack.c.b16 %v2207, %v2197
    %v3758 = vpack.c.b16 %v2208, %v2198
    %v3759 = vpack.c.b16 %v2209, %v2199
    %v3760 = vpack.c.b16 %v2210, %v2200
    %v3761 = vpack.c.b16 %v2211, %v2201
    %v3762 = vpack.c.b16 %v2212, %v2202
    %v3763 = vpack.c.b16 %v2223, %v2213
    %v3764 = vpack.c.b16 %v2224, %v2214
    %v3765 = vpack.c.b16 %v2225, %v2215
    %v3766 = vpack.c.b16 %v2226, %v2216
    %v3767 = vpack.c.b16 %v2227, %v2217
    %v3768 = vpack.c.b16 %v2228, %v2218
    %v3769 = vpack.c.b16 %v2229, %v2219
    %v3770 = vpack.c.b16 %v2230, %v2220
    %v3771 = vpack.c.b16 %v2231, %v2221
    %v3772 = vpack.c.b16 %v2232, %v2222
    %v3773 = vpack.c.b16 %v2243, %v2233
    %v3774 = vpack.c.b16 %v2244, %v2234
    %v3775 = vpack.c.b16 %v2245, %v2235
    %v3776 = vpack.c.b16 %v2246, %v2236
    %v3777 = vpack.c.b16 %v2247, %v2237
    %v3778 = vpack.c.b16 %v2248, %v2238
    %v3779 = vpack.c.b16 %v2249, %v2239
    %v3780 = vpack.c.b16 %v2250, %v2240
    %v3781 = vpack.c.b16 %v2251, %v2241
    %v3782 = vpack.c.b16 %v2252, %v2242
    %v3783 = vpack.c.b16 %v2263, %v2253
    %v3784 = vpack.c.b16 %v2264, %v2254
    %v3785 = vpack.c.b16 %v2265, %v2255
    %v3786 = vpack.c.b16 %v2266, %v2256
    %v3787 = vpack.c.b16 %v2267, %v2257
    %v3788 = vpack.c.b16 %v2268, %v2258
    %v3789 = vpack.c.b16 %v2269, %v2259
    %v3790 = vpack.c.b16 %v2270, %v2260
    %v3791 = vpack.c.b16 %v2271, %v2261
    %v3792 = vpack.c.b16 %v2272, %v2262
    %v3793 = vpack.c.b16 %v2283, %v2273
    %v3794 = vpack.c.b16 %v2284, %v2274
    %v3795 = vpack.c.b16 %v2285, %v2275
    %v3796 = vpack.c.b16 %v2286, %v2276
    %v3797 = vpack.c.b16 %v2287, %v2277
    %v3798 = vpack.c.b16 %v2288, %v2278
    %v3799 = vpack.c.b16 %v2289, %v2279
    %v3800 = vpack.c.b16 %v2290, %v2280
    %v3801 = vpack.c.b16 %v2291, %v2281
    %v3802 = vpack.c.b16 %v2292, %v2282
    %v3803 = vpack.c.b16 %v2303, %v2293
    %v3804 = vpack.c.b16 %v2304, %v2294
    %v3805 = vpack.c.b16 %v2305, %v2295
    %v3806 = vpack.c.b16 %v2306, %v2296
    %v3807 = vpack.c.b16 %v2307, %v2297
    %v3808 = vpack.c.b16 %v2308, %v2298
    %v3809 = vpack.c.b16 %v2309, %v2299
    %v3810 = vpack.c.b16 %v2310, %v2300
    %v3811 = vpack.c.b16 %v2311, %v2301
    %v3812 = vpack.c.b16 %v2312, %v2302
    %v3813 = vpack.c.b16 %v2323, %v2313
    %v3814 = vpack.c.b16 %v2324, %v2314
    %v3815 = vpack.c.b16 %v2325, %v2315
    %v3816 = vpack.c.b16 %v2326, %v2316
    %v3817 = vpack.c.b16 %v2327, %v2317
    %v3818 = vpack.c.b16 %v2328, %v2318
    %v3819 = vpack.c.b16 %v2329, %v2319
    %v3820 = vpack.c.b16 %v2330, %v2320
    %v3821 = vpack.c.b16 %v2331, %v2321
    %v3822 = vpack.c.b16 %v2332, %v2322
    %v3823 = vpack.c.b16 %v2343, %v2333
    %v3824 = vpack.c.b16 %v2344, %v2334
    %v3825 = vpack.c.b16 %v2345, %v2335
    %v3826 = vpack.c.b16 %v2346, %v2336
    %v3827 = vpack.c.b16 %v2347, %v2337
    %v3828 = vpack.c.b16 %v2348, %v2338
    %v3829 = vpack.c.b16 %v2349, %v2339
    %v3830 = vpack.c.b16 %v2350, %v2340
    %v3831 = vpack.c.b16 %v2351, %v2341
    %v3832 = vpack.c.b16 %v2352, %v2342
    %v3833 = vpack.c.b16 %v2363, %v2353
    %v3834 = vpack.c.b16 %v2364, %v2354
    %v3835 = vpack.c.b16 %v2365, %v2355
    %v3836 = vpack.c.b16 %v2366, %v2356
    %v3837 = vpack.c.b16 %v2367, %v2357
    %v3838 = vpack.c.b16 %v2368, %v2358
    %v3839 = vpack.c.b16 %v2369, %v2359
    %v3840 = vpack.c.b16 %v2370, %v2360
    %v3841 = vpack.c.b16 %v2371, %v2361
    %v3842 = vpack.c.b16 %v2372, %v2362
    %v3843 = vpack.c.b16 %v2383, %v2373
    %v3844 = vpack.c.b16 %v2384, %v2374
    %v3845 = vpack.c.b16 %v2385, %v2375
    %v3846 = vpack.c.b16 %v2386, %v2376
    %v3847 = vpack.c.b16 %v2387, %v2377
    %v3848 = vpack.c.b16 %v2388, %v2378
    %v3849 = vpack.c.b16 %v2389, %v2379
    %v3850 = vpack.c.b16 %v2390, %v2380
    %v3851 = vpack.c.b16 %v2391, %v2381
    %v3852 = vpack.c.b16 %v2392, %v2382
    %v3853 = vpack.c.b16 %v2403, %v2393
    %v3854 = vpack.c.b16 %v2404, %v2394
    %v3855 = vpack.c.b16 %v2405, %v2395
    %v3856 = vpack.c.b16 %v2406, %v2396
    %v3857 = vpack.c.b16 %v2407, %v2397
    %v3858 = vpack.c.b16 %v2408, %v2398
    %v3859 = vpack.c.b16 %v2409, %v2399
    %v3860 = vpack.c.b16 %v2410, %v2400
    %v3861 = vpack.c.b16 %v2411, %v2401
    %v3862 = vpack.c.b16 %v2412, %v2402
    %v3863 = vpack.c.b16 %v2423, %v2413
    %v3864 = vpack.c.b16 %v2424, %v2414
    %v3865 = vpack.c.b16 %v2425, %v2415
    %v3866 = vpack.c.b16 %v2426, %v2416
    %v3867 = vpack.c.b16 %v2427, %v2417
    %v3868 = vpack.c.b16 %v2428, %v2418
    %v3869 = vpack.c.b16 %v2429, %v2419
    %v3870 = vpack.c.b16 %v2430, %v2420
    %v3871 = vpack.c.b16 %v2431, %v2421
    %v3872 = vpack.c.b16 %v2432, %v2422
    %v3873 = vpack.c.b16 %v2443, %v2433
    %v3874 = vpack.c.b16 %v2444, %v2434
    %v3875 = vpack.c.b16 %v2445, %v2435
    %v3876 = vpack.c.b16 %v2446, %v2436
    %v3877 = vpack.c.b16 %v2447, %v2437
    %v3878 = vpack.c.b16 %v2448, %v2438
    %v3879 = vpack.c.b16 %v2449, %v2439
    %v3880 = vpack.c.b16 %v2450, %v2440
    %v3881 = vpack.c.b16 %v2451, %v2441
    %v3882 = vpack.c.b16 %v2452, %v2442
    %v3883 = vpack.c.b16 %v2463, %v2453
    %v3884 = vpack.c.b16 %v2464, %v2454
    %v3885 = vpack.c.b16 %v2465, %v2455
    %v3886 = vpack.c.b16 %v2466, %v2456
    %v3887 = vpack.c.b16 %v2467, %v2457
    %v3888 = vpack.c.b16 %v2468, %v2458
    %v3889 = vpack.c.b16 %v2469, %v2459
    %v3890 = vpack.c.b16 %v2470, %v2460
    %v3891 = vpack.c.b16 %v2471, %v2461
    %v3892 = vpack.c.b16 %v2472, %v2462
    %v3893 = vpack.c.b16 %v2483, %v2473
    %v3894 = vpack.c.b16 %v2484, %v2474
    %v3895 = vpack.c.b16 %v2485, %v2475
    %v3896 = vpack.c.b16 %v2486, %v2476
    %v3897 = vpack.c.b16 %v2487, %v2477
    %v3898 = vpack.c.b16 %v2488, %v2478
    %v3899 = vpack.c.b16 %v2489, %v2479
    %v3900 = vpack.c.b16 %v2490, %v2480
    %v3901 = vpack.c.b16 %v2491, %v2481
    %v3902 = vpack.c.b16 %v2492, %v2482
    %v3903 = vpack.c.b16 %v2503, %v2493
    %v3904 = vpack.c.b16 %v2504, %v2494
    %v3905 = vpack.c.b16 %v2505, %v2495
    %v3906 = vpack.c.b16 %v2506, %v2496
    %v3907 = vpack.c.b16 %v2507, %v2497
    %v3908 = vpack.c.b16 %v2508, %v2498
    %v3909 = vpack.c.b16 %v2509, %v2499
    %v3910 = vpack.c.b16 %v2510, %v2500
    %v3911 = vpack.c.b16 %v2511, %v2501
    %v3912 = vpack.c.b16 %v2512, %v2502
    %v3913 = vpack.c.b16 %v2523, %v2513
    %v3914 = vpack.c.b16 %v2524, %v2514
    %v3915 = vpack.c.b16 %v2525, %v2515
    %v3916 = vpack.c.b16 %v2526, %v2516
    %v3917 = vpack.c.b16 %v2527, %v2517
    %v3918 = vpack.c.b16 %v2528, %v2518
    %v3919 = vpack.c.b16 %v2529, %v2519
    %v3920 = vpack.c.b16 %v2530, %v2520
    %v3921 = vpack.c.b16 %v2531, %v2521
    %v3922 = vpack.c.b16 %v2532, %v2522
    %v3923 = vpack.c.b16 %v2543, %v2533
    %v3924 = vpack.c.b16 %v2544, %v2534
    %v3925 = vpack.c.b16 %v2545, %v2535
    %v3926 = vpack.c.b16 %v2546, %v2536
    %v3927 = vpack.c.b16 %v2547, %v2537
    %v3928 = vpack.c.b16 %v2548, %v2538
    %v3929 = vpack.c.b16 %v2549, %v2539
    %v3930 = vpack.c.b16 %v2550, %v2540
    %v3931 = vpack.c.b16 %v2551, %v2541
    %v3932 = vpack.c.b16 %v2552, %v2542
    %v3933 = vpack.c.b16 %v2563, %v2553
    %v3934 = vpack.c.b16 %v2564, %v2554
    %v3935 = vpack.c.b16 %v2565, %v2555
    %v3936 = vpack.c.b16 %v2566, %v2556
    %v3937 = vpack.c.b16 %v2567, %v2557
    %v3938 = vpack.c.b16 %v2568, %v2558
    %v3939 = vpack.c.b16 %v2569, %v2559
    %v3940 = vpack.c.b16 %v2570, %v2560
    %v3941 = vpack.c.b16 %v2571, %v2561
    %v3942 = vpack.c.b16 %v2572, %v2562
    %v3943 = vpack.c.b16 %v2583, %v2573
    %v3944 = vpack.c.b16 %v2584, %v2574
    %v3945 = vpack.c.b16 %v2585, %v2575
    %v3946 = vpack.c.b16 %v2586, %v2576
    %v3947 = vpack.c.b16 %v2587, %v2577
    %v3948 = vpack.c.b16 %v2588, %v2578
    %v3949 = vpack.c.b16 %v2589, %v2579
    %v3950 = vpack.c.b16 %v2590, %v2580
    %v3951 = vpack.c.b16 %v2591, %v2581
    %v3952 = vpack.c.b16 %v2592, %v2582
    %v3953 = vpack.c.b16 %v2603, %v2593
    %v3954 = vpack.c.b16 %v2604, %v2594
    %v3955 = vpack.c.b16 %v2605, %v2595
    %v3956 = vpack.c.b16 %v2606, %v2596
    %v3957 = vpack.c.b16 %v2607, %v2597
    %v3958 = vpack.c.b16 %v2608, %v2598
    %v3959 = vpack.c.b16 %v2609, %v2599
    %v3960 = vpack.c.b16 %v2610, %v2600
    %v3961 = vpack.c.b16 %v2611, %v2601
    %v3962 = vpack.c.b16 %v2612, %v2602
    %v3963 = vpack.c.b16 %v2623, %v2613
    %v3964 = vpack.c.b16 %v2624, %v2614
    %v3965 = vpack.c.b16 %v2625, %v2615
    %v3966 = vpack.c.b16 %v2626, %v2616
    %v3967 = vpack.c.b16 %v2627, %v2617
    %v3968 = vpack.c.b16 %v2628, %v2618
    %v3969 = vpack.c.b16 %v2629, %v2619
    %v3970 = vpack.c.b16 %v2630, %v2620
    %v3971 = vpack.c.b16 %v2631, %v2621
    %v3972 = vpack.c.b16 %v2632, %v2622
    %v3973 = vpack.c.b16 %v2643, %v2633
    %v3974 = vpack.c.b16 %v2644, %v2634
    %v3975 = vpack.c.b16 %v2645, %v2635
    %v3976 = vpack.c.b16 %v2646, %v2636
    %v3977 = vpack.c.b16 %v2647, %v2637
    %v3978 = vpack.c.b16 %v2648, %v2638
    %v3979 = vpack.c.b16 %v2649, %v2639
    %v3980 = vpack.c.b16 %v2650, %v2640
    %v3981 = vpack.c.b16 %v2651, %v2641
    %v3982 = vpack.c.b16 %v2652, %v2642
    %v3983 = vpack.c.b16 %v2663, %v2653
    %v3984 = vpack.c.b16 %v2664, %v2654
    %v3985 = vpack.c.b16 %v2665, %v2655
    %v3986 = vpack.c.b16 %v2666, %v2656
    %v3987 = vpack.c.b16 %v2667, %v2657
    %v3988 = vpack.c.b16 %v2668, %v2658
    %v3989 = vpack.c.b16 %v2669, %v2659
    %v3990 = vpack.c.b16 %v2670, %v2660
    %v3991 = vpack.c.b16 %v2671, %v2661
    %v3992 = vpack.c.b16 %v2672, %v2662
    %v3993 = vpack.c.b16 %v2683, %v2673
    %v3994 = vpack.c.b16 %v2684, %v2674
    %v3995 = vpack.c.b16 %v2685, %v2675
    %v3996 = vpack.c.b16 %v2686, %v2676
    %v3997 = vpack.c.b16 %v2687, %v2677
    %v3998 = vpack.c.b16 %v2688, %v2678
    %v3999 = vpack.c.b16 %v2689, %v2679
    %v4000 = vpack.c.b16 %v2690, %v2680
    %v4001 = vpack.c.b16 %v2691, %v2681
    %v4002 = vpack.c.b16 %v2692, %v2682
    %v4003 = vpack.c.b16 %v2703, %v2693
    %v4004 = vpack.c.b16 %v2704, %v2694
    %v4005 = vpack.c.b16 %v2705, %v2695
    %v4006 = vpack.c.b16 %v2706, %v2696
    %v4007 = vpack.c.b16 %v2707, %v2697
    %v4008 = vpack.c.b16 %v2708, %v2698
    %v4009 = vpack.c.b16 %v2709, %v2699
    %v4010 = vpack.c.b16 %v2710, %v2700
    %v4011 = vpack.c.b16 %v2711, %v2701
    %v4012 = vpack.c.b16 %v2712, %v2702
    %v4013 = vpack.c.b16 %v2723, %v2713
    %v4014 = vpack.c.b16 %v2724, %v2714
    %v4015 = vpack.c.b16 %v2725, %v2715
    %v4016 = vpack.c.b16 %v2726, %v2716
    %v4017 = vpack.c.b16 %v2727, %v2717
    %v4018 = vpack.c.b16 %v2728, %v2718
    %v4019 = vpack.c.b16 %v2729, %v2719
    %v4020 = vpack.c.b16 %v2730, %v2720
    %v4021 = vpack.c.b16 %v2731, %v2721
    %v4022 = vpack.c.b16 %v2732, %v2722
    %v4023 = vpack.c.b16 %v2743, %v2733
    %v4024 = vpack.c.b16 %v2744, %v2734
    %v4025 = vpack.c.b16 %v2745, %v2735
    %v4026 = vpack.c.b16 %v2746, %v2736
    %v4027 = vpack.c.b16 %v2747, %v2737
    %v4028 = vpack.c.b16 %v2748, %v2738
    %v4029 = vpack.c.b16 %v2749, %v2739
    %v4030 = vpack.c.b16 %v2750, %v2740
    %v4031 = vpack.c.b16 %v2751, %v2741
    %v4032 = vpack.c.b16 %v2752, %v2742
    %v4033 = vpack.c.b16 %v2763, %v2753
    %v4034 = vpack.c.b16 %v2764, %v2754
    %v4035 = vpack.c.b16 %v2765, %v2755
    %v4036 = vpack.c.b16 %v2766, %v2756
    %v4037 = vpack.c.b16 %v2767, %v2757
    %v4038 = vpack.c.b16 %v2768, %v2758
    %v4039 = vpack.c.b16 %v2769, %v2759
    %v4040 = vpack.c.b16 %v2770, %v2760
    %v4041 = vpack.c.b16 %v2771, %v2761
    %v4042 = vpack.c.b16 %v2772, %v2762
    %v4043 = vpack.c.b16 %v2783, %v2773
    %v4044 = vpack.c.b16 %v2784, %v2774
    %v4045 = vpack.c.b16 %v2785, %v2775
    %v4046 = vpack.c.b16 %v2786, %v2776
    %v4047 = vpack.c.b16 %v2787, %v2777
    %v4048 = vpack.c.b16 %v2788, %v2778
    %v4049 = vpack.c.b16 %v2789, %v2779
    %v4050 = vpack.c.b16 %v2790, %v2780
    %v4051 = vpack.c.b16 %v2791, %v2781
    %v4052 = vpack.c.b16 %v2792, %v2782
    %v4053 = vpack.c.b16 %v2803, %v2793
    %v4054 = vpack.c.b16 %v2804, %v2794
    %v4055 = vpack.c.b16 %v2805, %v2795
    %v4056 = vpack.c.b16 %v2806, %v2796
    %v4057 = vpack.c.b16 %v2807, %v2797
    %v4058 = vpack.c.b16 %v2808, %v2798
    %v4059 = vpack.c.b16 %v2809, %v2799
    %v4060 = vpack.c.b16 %v2810, %v2800
    %v4061 = vpack.c.b16 %v2811, %v2801
    %v4062 = vpack.c.b16 %v2812, %v2802
    %v4063 = vpack.c.b16 %v2823, %v2813
    %v4064 = vpack.c.b16 %v2824, %v2814
    %v4065 = vpack.c.b16 %v2825, %v2815
    %v4066 = vpack.c.b16 %v2826, %v2816
    %v4067 = vpack.c.b16 %v2827, %v2817
    %v4068 = vpack.c.b16 %v2828, %v2818
    %v4069 = vpack.c.b16 %v2829, %v2819
    %v4070 = vpack.c.b16 %v2830, %v2820
    %v4071 = vpack.c.b16 %v2831, %v2821
    %v4072 = vpack.c.b16 %v2832, %v2822
    %v4073 = vpack.c.b16 %v2843, %v2833
    %v4074 = vpack.c.b16 %v2844, %v2834
    %v4075 = vpack.c.b16 %v2845, %v2835
    %v4076 = vpack.c.b16 %v2846, %v2836
    %v4077 = vpack.c.b16 %v2847, %v2837
    %v4078 = vpack.c.b16 %v2848, %v2838
    %v4079 = vpack.c.b16 %v2849, %v2839
    %v4080 = vpack.c.b16 %v2850, %v2840
    %v4081 = vpack.c.b16 %v2851, %v2841
    %v4082 = vpack.c.b16 %v2852, %v2842
    %v4083 = vpack.c.b16 %v2863, %v2853
    %v4084 = vpack.c.b16 %v2864, %v2854
    %v4085 = vpack.c.b16 %v2865, %v2855
    %v4086 = vpack.c.b16 %v2866, %v2856
    %v4087 = vpack.c.b16 %v2867, %v2857
    %v4088 = vpack.c.b16 %v2868, %v2858
    %v4089 = vpack.c.b16 %v2869, %v2859
    %v4090 = vpack.c.b16 %v2870, %v2860
    %v4091 = vpack.c.b16 %v2871, %v2861
    %v4092 = vpack.c.b16 %v2872, %v2862
    %v4093 = vpack.c.b16 %v2883, %v2873
    %v4094 = vpack.c.b16 %v2884, %v2874
    %v4095 = vpack.c.b16 %v2885, %v2875
    %v4096 = vpack.c.b16 %v2886, %v2876
    %v4097 = vpack.c.b16 %v2887, %v2877
    %v4098 = vpack.c.b16 %v2888, %v2878
    %v4099 = vpack.c.b16 %v2889, %v2879
    %v4100 = vpack.c.b16 %v2890, %v2880
    %v4101 = vpack.c.b16 %v2891, %v2881
    %v4102 = vpack.c.b16 %v2892, %v2882
    %v4103 = vpack.c.b16 %v2903, %v2893
    %v4104 = vpack.c.b16 %v2904, %v2894
    %v4105 = vpack.c.b16 %v2905, %v2895
    %v4106 = vpack.c.b16 %v2906, %v2896
    %v4107 = vpack.c.b16 %v2907, %v2897
    %v4108 = vpack.c.b16 %v2908, %v2898
    %v4109 = vpack.c.b16 %v2909, %v2899
    %v4110 = vpack.c.b16 %v2910, %v2900
    %v4111 = vpack.c.b16 %v2911, %v2901
    %v4112 = vpack.c.b16 %v2912, %v2902
    %v4113 = vpack.c.b16 %v2923, %v2913
    %v4114 = vpack.c.b16 %v2924, %v2914
    %v4115 = vpack.c.b16 %v2925, %v2915
    %v4116 = vpack.c.b16 %v2926, %v2916
    %v4117 = vpack.c.b16 %v2927, %v2917
    %v4118 = vpack.c.b16 %v2928, %v2918
    %v4119 = vpack.c.b16 %v2929, %v2919
    %v4120 = vpack.c.b16 %v2930, %v2920
    %v4121 = vpack.c.b16 %v2931, %v2921
    %v4122 = vpack.c.b16 %v2932, %v2922
    %v4123 = vpack.c.b16 %v2943, %v2933
    %v4124 = vpack.c.b16 %v2944, %v2934
    %v4125 = vpack.c.b16 %v2945, %v2935
    %v4126 = vpack.c.b16 %v2946, %v2936
    %v4127 = vpack.c.b16 %v2947, %v2937
    %v4128 = vpack.c.b16 %v2948, %v2938
    %v4129 = vpack.c.b16 %v2949, %v2939
    %v4130 = vpack.c.b16 %v2950, %v2940
    %v4131 = vpack.c.b16 %v2951, %v2941
    %v4132 = vpack.c.b16 %v2952, %v2942
    %v4133 = vpack.c.b16 %v2963, %v2953
    %v4134 = vpack.c.b16 %v2964, %v2954
    %v4135 = vpack.c.b16 %v2965, %v2955
    %v4136 = vpack.c.b16 %v2966, %v2956
    %v4137 = vpack.c.b16 %v2967, %v2957
    %v4138 = vpack.c.b16 %v2968, %v2958
    %v4139 = vpack.c.b16 %v2969, %v2959
    %v4140 = vpack.c.b16 %v2970, %v2960
    %v4141 = vpack.c.b16 %v2971, %v2961
    %v4142 = vpack.c.b16 %v2972, %v2962
    %v4143 = vpack.c.b16 %v2983, %v2973
    %v4144 = vpack.c.b16 %v2984, %v2974
    %v4145 = vpack.c.b16 %v2985, %v2975
    %v4146 = vpack.c.b16 %v2986, %v2976
    %v4147 = vpack.c.b16 %v2987, %v2977
    %v4148 = vpack.c.b16 %v2988, %v2978
    %v4149 = vpack.c.b16 %v2989, %v2979
    %v4150 = vpack.c.b16 %v2990, %v2980
    %v4151 = vpack.c.b16 %v2991, %v2981
    %v4152 = vpack.c.b16 %v2992, %v2982
    %v4153 = vpack.c.b16 %v3003, %v2993
    %v4154 = vpack.c.b16 %v3004, %v2994
    %v4155 = vpack.c.b16 %v3005, %v2995
    %v4156 = vpack.c.b16 %v3006, %v2996
    %v4157 = vpack.c.b16 %v3007, %v2997
    %v4158 = vpack.c.b16 %v3008, %v2998
    %v4159 = vpack.c.b16 %v3009, %v2999
    %v4160 = vpack.c.b16 %v3010, %v3000
    %v4161 = vpack.c.b16 %v3011, %v3001
    %v4162 = vpack.c.b16 %v3012, %v3002
    %v4163 = vpack.c.b16 %v3023, %v3013
    %v4164 = vpack.c.b16 %v3024, %v3014
    %v4165 = vpack.c.b16 %v3025, %v3015
    %v4166 = vpack.c.b16 %v3026, %v3016
    %v4167 = vpack.c.b16 %v3027, %v3017
    %v4168 = vpack.c.b16 %v3028, %v3018
    %v4169 = vpack.c.b16 %v3029, %v3019
    %v4170 = vpack.c.b16 %v3030, %v3020
    %v4171 = vpack.c.b16 %v3031, %v3021
    %v4172 = vpack.c.b16 %v3032, %v3022
    %v4173 = vpack.c.b16 %v3043, %v3033
    %v4174 = vpack.c.b16 %v3044, %v3034
    %v4175 = vpack.c.b16 %v3045, %v3035
    %v4176 = vpack.c.b16 %v3046, %v3036
    %v4177 = vpack.c.b16 %v3047, %v3037
    %v4178 = vpack.c.b16 %v3048, %v3038
    %v4179 = vpack.c.b16 %v3049, %v3039
    %v4180 = vpack.c.b16 %v3050, %v3040
    %v4181 = vpack.c.b16 %v3051, %v3041
    %v4182 = vpack.c.b16 %v3052, %v3042
    %v4183 = vpack.c.b16 %v3063, %v3053
    %v4184 = vpack.c.b16 %v3064, %v3054
    %v4185 = vpack.c.b16 %v3065, %v3055
    %v4186 = vpack.c.b16 %v3066, %v3056
    %v4187 = vpack.c.b16 %v3067, %v3057
    %v4188 = vpack.c.b16 %v3068, %v3058
    %v4189 = vpack.c.b16 %v3069, %v3059
    %v4190 = vpack.c.b16 %v3070, %v3060
    %v4191 = vpack.c.b16 %v3071, %v3061
    %v4192 = vpack.c.b16 %v3072, %v3062
    %v4193 = vpack.c.b16 %v3083, %v3073
    %v4194 = vpack.c.b16 %v3084, %v3074
    %v4195 = vpack.c.b16 %v3085, %v3075
    %v4196 = vpack.c.b16 %v3086, %v3076
    %v4197 = vpack.c.b16 %v3087, %v3077
    %v4198 = vpack.c.b16 %v3088, %v3078
    %v4199 = vpack.c.b16 %v3089, %v3079
    %v4200 = vpack.c.b16 %v3090, %v3080
    %v4201 = vpack.c.b16 %v3091, %v3081
    %v4202 = vpack.c.b16 %v3092, %v3082
    %v4203 = vpack.c.b16 %v3103, %v3093
    %v4204 = vpack.c.b16 %v3104, %v3094
    %v4205 = vpack.c.b16 %v3105, %v3095
    %v4206 = vpack.c.b16 %v3106, %v3096
    %v4207 = vpack.c.b16 %v3107, %v3097
    %v4208 = vpack.c.b16 %v3108, %v3098
    %v4209 = vpack.c.b16 %v3109, %v3099
    %v4210 = vpack.c.b16 %v3110, %v3100
    %v4211 = vpack.c.b16 %v3111, %v3101
    %v4212 = vpack.c.b16 %v3112, %v3102
    %v4213 = vpack.c.b16 %v3123, %v3113
    %v4214 = vpack.c.b16 %v3124, %v3114
    %v4215 = vpack.c.b16 %v3125, %v3115
    %v4216 = vpack.c.b16 %v3126, %v3116
    %v4217 = vpack.c.b16 %v3127, %v3117
    %v4218 = vpack.c.b16 %v3128, %v3118
    %v4219 = vpack.c.b16 %v3129, %v3119
    %v4220 = vpack.c.b16 %v3130, %v3120
    %v4221 = vpack.c.b16 %v3131, %v3121
    %v4222 = vpack.c.b16 %v3132, %v3122
    %v4223 = vpack.c.b16 %v3143, %v3133
    %v4224 = vpack.c.b16 %v3144, %v3134
    %v4225 = vpack.c.b16 %v3145, %v3135
    %v4226 = vpack.c.b16 %v3146, %v3136
    %v4227 = vpack.c.b16 %v3147, %v3137
    %v4228 = vpack.c.b16 %v3148, %v3138
    %v4229 = vpack.c.b16 %v3149, %v3139
    %v4230 = vpack.c.b16 %v3150, %v3140
    %v4231 = vpack.c.b16 %v3151, %v3141
    %v4232 = vpack.c.b16 %v3152, %v3142
    %v4233 = vpack.c.b16 %v3163, %v3153
    %v4234 = vpack.c.b16 %v3164, %v3154
    %v4235 = vpack.c.b16 %v3165, %v3155
    %v4236 = vpack.c.b16 %v3166, %v3156
    %v4237 = vpack.c.b16 %v3167, %v3157
    %v4238 = vpack.c.b16 %v3168, %v3158
    %v4239 = vpack.c.b16 %v3169, %v3159
    %v4240 = vpack.c.b16 %v3170, %v3160
    %v4241 = vpack.c.b16 %v3171, %v3161
    %v4242 = vpack.c.b16 %v3172, %v3162
    %v4243 = vpack.c.b16 %v3183, %v3173
    %v4244 = vpack.c.b16 %v3184, %v3174
    %v4245 = vpack.c.b16 %v3185, %v3175
    %v4246 = vpack.c.b16 %v3186, %v3176
    %v4247 = vpack.c.b16 %v3187, %v3177
    %v4248 = vpack.c.b16 %v3188, %v3178
    %v4249 = vpack.c.b16 %v3189, %v3179
    %v4250 = vpack.c.b16 %v3190, %v3180
    %v4251 = vpack.c.b16 %v3191, %v3181
    %v4252 = vpack.c.b16 %v3192, %v3182
    %v4253 = vpack.c.b16 %v3203, %v3193
    %v4254 = vpack.c.b16 %v3204, %v3194
    %v4255 = vpack.c.b16 %v3205, %v3195
    %v4256 = vpack.c.b16 %v3206, %v3196
    %v4257 = vpack.c.b16 %v3207, %v3197
    %v4258 = vpack.c.b16 %v3208, %v3198
    %v4259 = vpack.c.b16 %v3209, %v3199
    %v4260 = vpack.c.b16 %v3210, %v3200
    %v4261 = vpack.c.b16 %v3211, %v3201
    %v4262 = vpack.c.b16 %v3212, %v3202
    %v4263 = vpack.c.b16 %v3223, %v3213
    %v4264 = vpack.c.b16 %v3224, %v3214
    %v4265 = vpack.c.b16 %v3225, %v3215
    %v4266 = vpack.c.b16 %v3226, %v3216
    %v4267 = vpack.c.b16 %v3227, %v3217
    %v4268 = vpack.c.b16 %v3228, %v3218
    %v4269 = vpack.c.b16 %v3229, %v3219
    %v4270 = vpack.c.b16 %v3230, %v3220
    %v4271 = vpack.c.b16 %v3231, %v3221
    %v4272 = vpack.c.b16 %v3232, %v3222
    %v4273 = vpack.c.b16 %v3243, %v3233
    %v4274 = vpack.c.b16 %v3244, %v3234
    %v4275 = vpack.c.b16 %v3245, %v3235
    %v4276 = vpack.c.b16 %v3246, %v3236
    %v4277 = vpack.c.b16 %v3247, %v3237
    %v4278 = vpack.c.b16 %v3248, %v3238
    %v4279 = vpack.c.b16 %v3249, %v3239
    %v4280 = vpack.c.b16 %v3250, %v3240
    %v4281 = vpack.c.b16 %v3251, %v3241
    %v4282 = vpack.c.b16 %v3252, %v3242
    %v4283 = vpack.c.b16 %v3263, %v3253
    %v4284 = vpack.c.b16 %v3264, %v3254
    %v4285 = vpack.c.b16 %v3265, %v3255
    %v4286 = vpack.c.b16 %v3266, %v3256
    %v4287 = vpack.c.b16 %v3267, %v3257
    %v4288 = vpack.c.b16 %v3268, %v3258
    %v4289 = vpack.c.b16 %v3269, %v3259
    %v4290 = vpack.c.b16 %v3270, %v3260
    %v4291 = vpack.c.b16 %v3271, %v3261
    %v4292 = vpack.c.b16 %v3272, %v3262
    %v4293 = vpack.c.b16 %v3283, %v3273
    %v4294 = vpack.c.b16 %v3284, %v3274
    %v4295 = vpack.c.b16 %v3285, %v3275
    %v4296 = vpack.c.b16 %v3286, %v3276
    %v4297 = vpack.c.b16 %v3287, %v3277
    %v4298 = vpack.c.b16 %v3288, %v3278
    %v4299 = vpack.c.b16 %v3289, %v3279
    %v4300 = vpack.c.b16 %v3290, %v3280
    %v4301 = vpack.c.b16 %v3291, %v3281
    %v4302 = vpack.c.b16 %v3292, %v3282
    %v4303 = vpack.c.b16 %v3303, %v3293
    %v4304 = vpack.c.b16 %v3304, %v3294
    %v4305 = vpack.c.b16 %v3305, %v3295
    %v4306 = vpack.c.b16 %v3306, %v3296
    %v4307 = vpack.c.b16 %v3307, %v3297
    %v4308 = vpack.c.b16 %v3308, %v3298
    %v4309 = vpack.c.b16 %v3309, %v3299
    %v4310 = vpack.c.b16 %v3310, %v3300
    %v4311 = vpack.c.b16 %v3311, %v3301
    %v4312 = vpack.c.b16 %v3312, %v3302
    %v4313 = vpack.c.b16 %v3323, %v3313
    %v4314 = vpack.c.b16 %v3324, %v3314
    %v4315 = vpack.c.b16 %v3325, %v3315
    %v4316 = vpack.c.b16 %v3326, %v3316
    %v4317 = vpack.c.b16 %v3327, %v3317
    %v4318 = vpack.c.b16 %v3328, %v3318
    %v4319 = vpack.c.b16 %v3329, %v3319
    %v4320 = vpack.c.b16 %v3330, %v3320
    %v4321 = vpack.c.b16 %v3331, %v3321
    %v4322 = vpack.c.b16 %v3332, %v3322
    %v4323 = vpack.c.b16 %v3343, %v3333
    %v4324 = vpack.c.b16 %v3344, %v3334
    %v4325 = vpack.c.b16 %v3345, %v3335
    %v4326 = vpack.c.b16 %v3346, %v3336
    %v4327 = vpack.c.b16 %v3347, %v3337
    %v4328 = vpack.c.b16 %v3348, %v3338
    %v4329 = vpack.c.b16 %v3349, %v3339
    %v4330 = vpack.c.b16 %v3350, %v3340
    %v4331 = vpack.c.b16 %v3351, %v3341
    %v4332 = vpack.c.b16 %v3352, %v3342
    %v4333 = vpack.c.b16 %v3363, %v3353
    %v4334 = vpack.c.b16 %v3364, %v3354
    %v4335 = vpack.c.b16 %v3365, %v3355
    %v4336 = vpack.c.b16 %v3366, %v3356
    %v4337 = vpack.c.b16 %v3367, %v3357
    %v4338 = vpack.c.b16 %v3368, %v3358
    %v4339 = vpack.c.b16 %v3369, %v3359
    %v4340 = vpack.c.b16 %v3370, %v3360
    %v4341 = vpack.c.b16 %v3371, %v3361
    %v4342 = vpack.c.b16 %v3372, %v3362
    %v4343 = vpack.c.b16 %v3383, %v3373
    %v4344 = vpack.c.b16 %v3384, %v3374
    %v4345 = vpack.c.b16 %v3385, %v3375
    %v4346 = vpack.c.b16 %v3386, %v3376
    %v4347 = vpack.c.b16 %v3387, %v3377
    %v4348 = vpack.c.b16 %v3388, %v3378
    %v4349 = vpack.c.b16 %v3389, %v3379
    %v4350 = vpack.c.b16 %v3390, %v3380
    %v4351 = vpack.c.b16 %v3391, %v3381
    %v4352 = vpack.c.b16 %v3392, %v3382
    %v4353 = vpack.c.b16 %v3403, %v3393
    %v4354 = vpack.c.b16 %v3404, %v3394
    %v4355 = vpack.c.b16 %v3405, %v3395
    %v4356 = vpack.c.b16 %v3406, %v3396
    %v4357 = vpack.c.b16 %v3407, %v3397
    %v4358 = vpack.c.b16 %v3408, %v3398
    %v4359 = vpack.c.b16 %v3409, %v3399
    %v4360 = vpack.c.b16 %v3410, %v3400
    %v4361 = vpack.c.b16 %v3411, %v3401
    %v4362 = vpack.c.b16 %v3412, %v3402
    %v4363 = vpack.c.b16 %v3423, %v3413
    %v4364 = vpack.c.b16 %v3424, %v3414
    %v4365 = vpack.c.b16 %v3425, %v3415
    %v4366 = vpack.c.b16 %v3426, %v3416
    %v4367 = vpack.c.b16 %v3427, %v3417
    %v4368 = vpack.c.b16 %v3428, %v3418
    %v4369 = vpack.c.b16 %v3429, %v3419
    %v4370 = vpack.c.b16 %v3430, %v3420
    %v4371 = vpack.c.b16 %v3431, %v3421
    %v4372 = vpack.c.b16 %v3432, %v3422
    %v4373 = vpack.c.b16 %v3443, %v3433
    %v4374 = vpack.c.b16 %v3444, %v3434
    %v4375 = vpack.c.b16 %v3445, %v3435
    %v4376 = vpack.c.b16 %v3446, %v3436
    %v4377 = vpack.c.b16 %v3447, %v3437
    %v4378 = vpack.c.b16 %v3448, %v3438
    %v4379 = vpack.c.b16 %v3449, %v3439
    %v4380 = vpack.c.b16 %v3450, %v3440
    %v4381 = vpack.c.b16 %v3451, %v3441
    %v4382 = vpack.c.b16 %v3452, %v3442
    %v4383 = vpack.c.b16 %v3463, %v3453
    %v4384 = vpack.c.b16 %v3464, %v3454
    %v4385 = vpack.c.b16 %v3465, %v3455
    %v4386 = vpack.c.b16 %v3466, %v3456
    %v4387 = vpack.c.b16 %v3467, %v3457
    %v4388 = vpack.c.b16 %v3468, %v3458
    %v4389 = vpack.c.b16 %v3469, %v3459
    %v4390 = vpack.c.b16 %v3470, %v3460
    %v4391 = vpack.c.b16 %v3471, %v3461
    %v4392 = vpack.c.b16 %v3472, %v3462
    %v4393 = vpack.c.b16 %v3483, %v3473
    %v4394 = vpack.c.b16 %v3484, %v3474
    %v4395 = vpack.c.b16 %v3485, %v3475
    %v4396 = vpack.c.b16 %v3486, %v3476
    %v4397 = vpack.c.b16 %v3487, %v3477
    %v4398 = vpack.c.b16 %v3488, %v3478
    %v4399 = vpack.c.b16 %v3489, %v3479
    %v4400 = vpack.c.b16 %v3490, %v3480
    %v4401 = vpack.c.b16 %v3491, %v3481
    %v4402 = vpack.c.b16 %v3492, %v3482
    %v4403 = vpack.c.b16 %v3503, %v3493
    %v4404 = vpack.c.b16 %v3504, %v3494
    %v4405 = vpack.c.b16 %v3505, %v3495
    %v4406 = vpack.c.b16 %v3506, %v3496
    %v4407 = vpack.c.b16 %v3507, %v3497
    %v4408 = vpack.c.b16 %v3508, %v3498
    %v4409 = vpack.c.b16 %v3509, %v3499
    %v4410 = vpack.c.b16 %v3510, %v3500
    %v4411 = vpack.c.b16 %v3511, %v3501
    %v4412 = vpack.c.b16 %v3512, %v3502
    %v4413 = vpack.c.b16 %v3523, %v3513
    %v4414 = vpack.c.b16 %v3524, %v3514
    %v4415 = vpack.c.b16 %v3525, %v3515
    %v4416 = vpack.c.b16 %v3526, %v3516
    %v4417 = vpack.c.b16 %v3527, %v3517
    %v4418 = vpack.c.b16 %v3528, %v3518
    %v4419 = vpack.c.b16 %v3529, %v3519
    %v4420 = vpack.c.b16 %v3530, %v3520
    %v4421 = vpack.c.b16 %v3531, %v3521
    %v4422 = vpack.c.b16 %v3532, %v3522
    %v4423 = vpack.c.b16 %v3543, %v3533
    %v4424 = vpack.c.b16 %v3544, %v3534
    %v4425 = vpack.c.b16 %v3545, %v3535
    %v4426 = vpack.c.b16 %v3546, %v3536
    %v4427 = vpack.c.b16 %v3547, %v3537
    %v4428 = vpack.c.b16 %v3548, %v3538
    %v4429 = vpack.c.b16 %v3549, %v3539
    %v4430 = vpack.c.b16 %v3550, %v3540
    %v4431 = vpack.c.b16 %v3551, %v3541
    %v4432 = vpack.c.b16 %v3552, %v3542
    %v4433 = vpack.c.b16 %v3563, %v3553
    %v4434 = vpack.c.b16 %v3564, %v3554
    %v4435 = vpack.c.b16 %v3565, %v3555
    %v4436 = vpack.c.b16 %v3566, %v3556
    %v4437 = vpack.c.b16 %v3567, %v3557
    %v4438 = vpack.c.b16 %v3568, %v3558
    %v4439 = vpack.c.b16 %v3569, %v3559
    %v4440 = vpack.c.b16 %v3570, %v3560
    %v4441 = vpack.c.b16 %v3571, %v3561
    %v4442 = vpack.c.b16 %v3572, %v3562
    %v4443 = vpack.c.b16 %v3583, %v3573
    %v4444 = vpack.c.b16 %v3584, %v3574
    %v4445 = vpack.c.b16 %v3585, %v3575
    %v4446 = vpack.c.b16 %v3586, %v3576
    %v4447 = vpack.c.b16 %v3587, %v3577
    %v4448 = vpack.c.b16 %v3588, %v3578
    %v4449 = vpack.c.b16 %v3589, %v3579
    %v4450 = vpack.c.b16 %v3590, %v3580
    %v4451 = vpack.c.b16 %v3591, %v3581
    %v4452 = vpack.c.b16 %v3592, %v3582
    %v4453 = vpack.c.b16 %v3603, %v3593
    %v4454 = vpack.c.b16 %v3604, %v3594
    %v4455 = vpack.c.b16 %v3605, %v3595
    %v4456 = vpack.c.b16 %v3606, %v3596
    %v4457 = vpack.c.b16 %v3607, %v3597
    %v4458 = vpack.c.b16 %v3608, %v3598
    %v4459 = vpack.c.b16 %v3609, %v3599
    %v4460 = vpack.c.b16 %v3610, %v3600
    %v4461 = vpack.c.b16 %v3611, %v3601
    %v4462 = vpack.c.b16 %v3612, %v3602
    %v4463 = vpack.c.b16 %v3623, %v3613
    %v4464 = vpack.c.b16 %v3624, %v3614
    %v4465 = vpack.c.b16 %v3625, %v3615
    %v4466 = vpack.c.b16 %v3626, %v3616
    %v4467 = vpack.c.b16 %v3627, %v3617
    %v4468 = vpack.c.b16 %v3628, %v3618
    %v4469 = vpack.c.b16 %v3629, %v3619
    %v4470 = vpack.c.b16 %v3630, %v3620
    %v4471 = vpack.c.b16 %v3631, %v3621
    %v4472 = vpack.c.b16 %v3632, %v3622
    %v4473 = vpack.c.b16 %v3643, %v3633
    %v4474 = vpack.c.b16 %v3644, %v3634
    %v4475 = vpack.c.b16 %v3645, %v3635
    %v4476 = vpack.c.b16 %v3646, %v3636
    %v4477 = vpack.c.b16 %v3647, %v3637
    %v4478 = vpack.c.b16 %v3648, %v3638
    %v4479 = vpack.c.b16 %v3649, %v3639
    %v4480 = vpack.c.b16 %v3650, %v3640
    %v4481 = vpack.c.b16 %v3651, %v3641
    %v4482 = vpack.c.b16 %v3652, %v3642
    %v4483 = vpack.c.b16 %v3663, %v3653
    %v4484 = vpack.c.b16 %v3664, %v3654
    %v4485 = vpack.c.b16 %v3665, %v3655
    %v4486 = vpack.c.b16 %v3666, %v3656
    %v4487 = vpack.c.b16 %v3667, %v3657
    %v4488 = vpack.c.b16 %v3668, %v3658
    %v4489 = vpack.c.b16 %v3669, %v3659
    %v4490 = vpack.c.b16 %v3670, %v3660
    %v4491 = vpack.c.b16 %v3671, %v3661
    %v4492 = vpack.c.b16 %v3672, %v3662
    %v4493 = vpack.c.b16 %v3683, %v3673
    %v4494 = vpack.c.b16 %v3684, %v3674
    %v4495 = vpack.c.b16 %v3685, %v3675
    %v4496 = vpack.c.b16 %v3686, %v3676
    %v4497 = vpack.c.b16 %v3687, %v3677
    %v4498 = vpack.c.b16 %v3688, %v3678
    %v4499 = vpack.c.b16 %v3689, %v3679
    %v4500 = vpack.c.b16 %v3690, %v3680
    %v4501 = vpack.c.b16 %v3691, %v3681
    %v4502 = vpack.c.b16 %v3692, %v3682
    %v4503 = vpack.c.b16 %v3703, %v3693
    %v4504 = vpack.c.b16 %v3704, %v3694
    %v4505 = vpack.c.b16 %v3705, %v3695
    %v4506 = vpack.c.b16 %v3706, %v3696
    %v4507 = vpack.c.b16 %v3707, %v3697
    %v4508 = vpack.c.b16 %v3708, %v3698
    %v4509 = vpack.c.b16 %v3709, %v3699
    %v4510 = vpack.c.b16 %v3710, %v3700
    %v4511 = vpack.c.b16 %v3711, %v3701
    %v4512 = vpack.c.b16 %v3712, %v3702
    %5313 = vmatprep.subr.bf16.mxu0 %v3714
    %5314 = vmatpush1.bf16.msra.mxu0 %v3713
    %5315 = vmatprep.subr.bf16.mxu0 %v3724
    %5316 = vmatpush1.bf16.msra.mxu0 %v3723
    %5317 = vmatprep.subr.bf16.mxu0 %v3734
    %5318 = vmatpush1.bf16.msra.mxu0 %v3733
    %5319 = vmatprep.subr.bf16.mxu0 %v3744
    %5320 = vmatpush1.bf16.msra.mxu0 %v3743
    %5321 = vmatprep.subr.bf16.mxu0 %v3754
    %5322 = vmatpush1.bf16.msra.mxu0 %v3753
    %5323 = vmatprep.subr.bf16.mxu0 %v3764
    %5324 = vmatpush1.bf16.msra.mxu0 %v3763
    %5325 = vmatprep.subr.bf16.mxu0 %v3774
    %5326 = vmatpush1.bf16.msra.mxu0 %v3773
    %5327 = vmatprep.subr.bf16.mxu0 %v3784
    %5328 = vmatpush1.bf16.msra.mxu0 %v3783
    %5329 = vmatprep.subr.bf16.mxu0 %v3794
    %5330 = vmatpush1.bf16.msra.mxu0 %v3793
    %5331 = vmatprep.subr.bf16.mxu0 %v3804
    %5332 = vmatpush1.bf16.msra.mxu0 %v3803
    %5333 = vmatprep.subr.bf16.mxu0 %v3814
    %5334 = vmatpush1.bf16.msra.mxu0 %v3813
    %5335 = vmatprep.subr.bf16.mxu0 %v3824
    %5336 = vmatpush1.bf16.msra.mxu0 %v3823
    %5337 = vmatprep.subr.bf16.mxu0 %v3834
    %5338 = vmatpush1.bf16.msra.mxu0 %v3833
    %5339 = vmatprep.subr.bf16.mxu0 %v3844
    %5340 = vmatpush1.bf16.msra.mxu0 %v3843
    %5341 = vmatprep.subr.bf16.mxu0 %v3854
    %5342 = vmatpush1.bf16.msra.mxu0 %v3853
    %5343 = vmatprep.subr.bf16.mxu0 %v3864
    %5344 = vmatpush1.bf16.msra.mxu0 %v3863
    %5345 = vmatprep.mubr.bf16.mxu0 %v450
    %5346 = vmatmul.mubr.bf16.gmra.mrb[0].mxu0 %v449
    %v5347 = vpop.f32.mrb[0].mxu0
    %v5348 = vadd.f32 %v1266, %v5347
    %v5349 = vpop.f32.mrb[0].mxu0
    %v5350 = vadd.f32 %v1270, %v5349
    %v5351 = vpop.f32.mrb[0].mxu0
    %v5352 = vpop.f32.mrb[0].mxu0
    %5353 = vdwg.mxu0
    %5354 = vmatprep.subr.bf16.mxu0 %v3874
    %5355 = vmatpush1.bf16.msra.mxu0 %v3873
    %5356 = vmatprep.subr.bf16.mxu0 %v3884
    %5357 = vmatpush1.bf16.msra.mxu0 %v3883
    %5358 = vmatprep.subr.bf16.mxu0 %v3894
    %5359 = vmatpush1.bf16.msra.mxu0 %v3893
    %5360 = vmatprep.subr.bf16.mxu0 %v3904
    %5361 = vmatpush1.bf16.msra.mxu0 %v3903
    %5362 = vmatprep.subr.bf16.mxu0 %v3914
    %5363 = vmatpush1.bf16.msra.mxu0 %v3913
    %5364 = vmatprep.subr.bf16.mxu0 %v3924
    %5365 = vmatpush1.bf16.msra.mxu0 %v3923
    %5366 = vmatprep.subr.bf16.mxu0 %v3934
    %5367 = vmatpush1.bf16.msra.mxu0 %v3933
    %5368 = vmatprep.subr.bf16.mxu0 %v3944
    %5369 = vmatpush1.bf16.msra.mxu0 %v3943
    %5370 = vmatprep.subr.bf16.mxu0 %v3954
    %5371 = vmatpush1.bf16.msra.mxu0 %v3953
    %5372 = vmatprep.subr.bf16.mxu0 %v3964
    %5373 = vmatpush1.bf16.msra.mxu0 %v3963
    %5374 = vmatprep.subr.bf16.mxu0 %v3974
    %5375 = vmatpush1.bf16.msra.mxu0 %v3973
    %5376 = vmatprep.subr.bf16.mxu0 %v3984
    %5377 = vmatpush1.bf16.msra.mxu0 %v3983
    %5378 = vmatprep.subr.bf16.mxu0 %v3994
    %5379 = vmatpush1.bf16.msra.mxu0 %v3993
    %5380 = vmatprep.subr.bf16.mxu0 %v4004
    %5381 = vmatpush1.bf16.msra.mxu0 %v4003
    %5382 = vmatprep.subr.bf16.mxu0 %v4014
    %5383 = vmatpush1.bf16.msra.mxu0 %v4013
    %5384 = vmatprep.subr.bf16.mxu0 %v4024
    %5385 = vmatpush1.bf16.msra.mxu0 %v4023
    %5386 = vmatprep.mubr.bf16.mxu0 %v452
    %5387 = vmatmul.mubr.bf16.gmra.mrb[0].mxu0 %v451
    %v5388 = vpop.f32.mrb[0].mxu0
    %v5389 = vadd.f32 %v5348, %v5388
    %v5390 = vpop.f32.mrb[0].mxu0
    %v5391 = vadd.f32 %v5350, %v5390
    %v5392 = vpop.f32.mrb[0].mxu0
    %v5393 = vpop.f32.mrb[0].mxu0
    %5394 = vdwg.mxu0
    %5395 = vmatprep.subr.bf16.mxu0 %v4034
    %5396 = vmatpush1.bf16.msra.mxu0 %v4033
    %5397 = vmatprep.subr.bf16.mxu0 %v4044
    %5398 = vmatpush1.bf16.msra.mxu0 %v4043
    %5399 = vmatprep.subr.bf16.mxu0 %v4054
    %5400 = vmatpush1.bf16.msra.mxu0 %v4053
    %5401 = vmatprep.subr.bf16.mxu0 %v4064
    %5402 = vmatpush1.bf16.msra.mxu0 %v4063
    %5403 = vmatprep.subr.bf16.mxu0 %v4074
    %5404 = vmatpush1.bf16.msra.mxu0 %v4073
    %5405 = vmatprep.subr.bf16.mxu0 %v4084
    %5406 = vmatpush1.bf16.msra.mxu0 %v4083
    %5407 = vmatprep.subr.bf16.mxu0 %v4094
    %5408 = vmatpush1.bf16.msra.mxu0 %v4093
    %5409 = vmatprep.subr.bf16.mxu0 %v4104
    %5410 = vmatpush1.bf16.msra.mxu0 %v4103
    %5411 = vmatprep.subr.bf16.mxu0 %v4114
    %5412 = vmatpush1.bf16.msra.mxu0 %v4113
    %5413 = vmatprep.subr.bf16.mxu0 %v4124
    %5414 = vmatpush1.bf16.msra.mxu0 %v4123
    %5415 = vmatprep.subr.bf16.mxu0 %v4134
    %5416 = vmatpush1.bf16.msra.mxu0 %v4133
    %5417 = vmatprep.subr.bf16.mxu0 %v4144
    %5418 = vmatpush1.bf16.msra.mxu0 %v4143
    %5419 = vmatprep.subr.bf16.mxu0 %v4154
    %5420 = vmatpush1.bf16.msra.mxu0 %v4153
    %5421 = vmatprep.subr.bf16.mxu0 %v4164
    %5422 = vmatpush1.bf16.msra.mxu0 %v4163
    %5423 = vmatprep.subr.bf16.mxu0 %v4174
    %5424 = vmatpush1.bf16.msra.mxu0 %v4173
    %5425 = vmatprep.subr.bf16.mxu0 %v4184
    %5426 = vmatpush1.bf16.msra.mxu0 %v4183
    %5427 = vmatprep.mubr.bf16.mxu0 %v454
    %5428 = vmatmul.mubr.bf16.gmra.mrb[0].mxu0 %v453
    %v5429 = vpop.f32.mrb[0].mxu0
    %v5430 = vadd.f32 %v5389, %v5429
    %v5431 = vpop.f32.mrb[0].mxu0
    %v5432 = vadd.f32 %v5391, %v5431
    %v5433 = vpop.f32.mrb[0].mxu0
    %v5434 = vpop.f32.mrb[0].mxu0
    %5435 = vdwg.mxu0
    %5436 = vmatprep.subr.bf16.mxu0 %v4194
    %5437 = vmatpush1.bf16.msra.mxu0 %v4193
    %5438 = vmatprep.subr.bf16.mxu0 %v4204
    %5439 = vmatpush1.bf16.msra.mxu0 %v4203
    %5440 = vmatprep.subr.bf16.mxu0 %v4214
    %5441 = vmatpush1.bf16.msra.mxu0 %v4213
    %5442 = vmatprep.subr.bf16.mxu0 %v4224
    %5443 = vmatpush1.bf16.msra.mxu0 %v4223
    %5444 = vmatprep.subr.bf16.mxu0 %v4234
    %5445 = vmatpush1.bf16.msra.mxu0 %v4233
    %5446 = vmatprep.subr.bf16.mxu0 %v4244
    %5447 = vmatpush1.bf16.msra.mxu0 %v4243
    %5448 = vmatprep.subr.bf16.mxu0 %v4254
    %5449 = vmatpush1.bf16.msra.mxu0 %v4253
    %5450 = vmatprep.subr.bf16.mxu0 %v4264
    %5451 = vmatpush1.bf16.msra.mxu0 %v4263
    %5452 = vmatprep.subr.bf16.mxu0 %v4274
    %5453 = vmatpush1.bf16.msra.mxu0 %v4273
    %5454 = vmatprep.subr.bf16.mxu0 %v4284
    %5455 = vmatpush1.bf16.msra.mxu0 %v4283
    %5456 = vmatprep.subr.bf16.mxu0 %v4294
    %5457 = vmatpush1.bf16.msra.mxu0 %v4293
    %5458 = vmatprep.subr.bf16.mxu0 %v4304
    %5459 = vmatpush1.bf16.msra.mxu0 %v4303
    %5460 = vmatprep.subr.bf16.mxu0 %v4314
    %5461 = vmatpush1.bf16.msra.mxu0 %v4313
    %5462 = vmatprep.subr.bf16.mxu0 %v4324
    %5463 = vmatpush1.bf16.msra.mxu0 %v4323
    %5464 = vmatprep.subr.bf16.mxu0 %v4334
    %5465 = vmatpush1.bf16.msra.mxu0 %v4333
    %5466 = vmatprep.subr.bf16.mxu0 %v4344
    %5467 = vmatpush1.bf16.msra.mxu0 %v4343
    %5468 = vmatprep.mubr.bf16.mxu0 %v456
    %5469 = vmatmul.mubr.bf16.gmra.mrb[0].mxu0 %v455
    %v5470 = vpop.f32.mrb[0].mxu0
    %v5471 = vadd.f32 %v5430, %v5470
    %v5472 = vpop.f32.mrb[0].mxu0
    %v5473 = vadd.f32 %v5432, %v5472
    %v5474 = vpop.f32.mrb[0].mxu0
    %v5475 = vpop.f32.mrb[0].mxu0
    %5476 = vdwg.mxu0
    %5477 = vmatprep.subr.bf16.mxu0 %v4354
    %5478 = vmatpush1.bf16.msra.mxu0 %v4353
    %5479 = vmatprep.subr.bf16.mxu0 %v4364
    %5480 = vmatpush1.bf16.msra.mxu0 %v4363
    %5481 = vmatprep.subr.bf16.mxu0 %v4374
    %5482 = vmatpush1.bf16.msra.mxu0 %v4373
    %5483 = vmatprep.subr.bf16.mxu0 %v4384
    %5484 = vmatpush1.bf16.msra.mxu0 %v4383
    %5485 = vmatprep.subr.bf16.mxu0 %v4394
    %5486 = vmatpush1.bf16.msra.mxu0 %v4393
    %5487 = vmatprep.subr.bf16.mxu0 %v4404
    %5488 = vmatpush1.bf16.msra.mxu0 %v4403
    %5489 = vmatprep.subr.bf16.mxu0 %v4414
    %5490 = vmatpush1.bf16.msra.mxu0 %v4413
    %5491 = vmatprep.subr.bf16.mxu0 %v4424
    %5492 = vmatpush1.bf16.msra.mxu0 %v4423
    %5493 = vmatprep.subr.bf16.mxu0 %v4434
    %5494 = vmatpush1.bf16.msra.mxu0 %v4433
    %5495 = vmatprep.subr.bf16.mxu0 %v4444
    %5496 = vmatpush1.bf16.msra.mxu0 %v4443
    %5497 = vmatprep.subr.bf16.mxu0 %v4454
    %5498 = vmatpush1.bf16.msra.mxu0 %v4453
    %5499 = vmatprep.subr.bf16.mxu0 %v4464
    %5500 = vmatpush1.bf16.msra.mxu0 %v4463
    %5501 = vmatprep.subr.bf16.mxu0 %v4474
    %5502 = vmatpush1.bf16.msra.mxu0 %v4473
    %5503 = vmatprep.subr.bf16.mxu0 %v4484
    %5504 = vmatpush1.bf16.msra.mxu0 %v4483
    %5505 = vmatprep.subr.bf16.mxu0 %v4494
    %5506 = vmatpush1.bf16.msra.mxu0 %v4493
    %5507 = vmatprep.subr.bf16.mxu0 %v4504
    %5508 = vmatpush1.bf16.msra.mxu0 %v4503
    %5509 = vmatprep.mubr.bf16.mxu0 %v458
    %5510 = vmatmul.mubr.bf16.gmra.mrb[0].mxu0 %v457
    %v5511 = vpop.f32.mrb[0].mxu0
    %v5512 = vadd.f32 %v5471, %v5511
    %v5513 = vpop.f32.mrb[0].mxu0
    %v5514 = vadd.f32 %v5473, %v5513
    %v5515 = vpop.f32.mrb[0].mxu0
    %v5516 = vpop.f32.mrb[0].mxu0
    %5517 = vdwg.mxu0
    %5518 = vmatprep.subr.bf16.mxu0 %v3716
    %5519 = vmatpush1.bf16.msra.mxu0 %v3715
    %5520 = vmatprep.subr.bf16.mxu0 %v3726
    %5521 = vmatpush1.bf16.msra.mxu0 %v3725
    %5522 = vmatprep.subr.bf16.mxu0 %v3736
    %5523 = vmatpush1.bf16.msra.mxu0 %v3735
    %5524 = vmatprep.subr.bf16.mxu0 %v3746
    %5525 = vmatpush1.bf16.msra.mxu0 %v3745
    %5526 = vmatprep.subr.bf16.mxu0 %v3756
    %5527 = vmatpush1.bf16.msra.mxu0 %v3755
    %5528 = vmatprep.subr.bf16.mxu0 %v3766
    %5529 = vmatpush1.bf16.msra.mxu0 %v3765
    %5530 = vmatprep.subr.bf16.mxu0 %v3776
    %5531 = vmatpush1.bf16.msra.mxu0 %v3775
    %5532 = vmatprep.subr.bf16.mxu0 %v3786
    %5533 = vmatpush1.bf16.msra.mxu0 %v3785
    %5534 = vmatprep.subr.bf16.mxu0 %v3796
    %5535 = vmatpush1.bf16.msra.mxu0 %v3795
    %5536 = vmatprep.subr.bf16.mxu0 %v3806
    %5537 = vmatpush1.bf16.msra.mxu0 %v3805
    %5538 = vmatprep.subr.bf16.mxu0 %v3816
    %5539 = vmatpush1.bf16.msra.mxu0 %v3815
    %5540 = vmatprep.subr.bf16.mxu0 %v3826
    %5541 = vmatpush1.bf16.msra.mxu0 %v3825
    %5542 = vmatprep.subr.bf16.mxu0 %v3836
    %5543 = vmatpush1.bf16.msra.mxu0 %v3835
    %5544 = vmatprep.subr.bf16.mxu0 %v3846
    %5545 = vmatpush1.bf16.msra.mxu0 %v3845
    %5546 = vmatprep.subr.bf16.mxu0 %v3856
    %5547 = vmatpush1.bf16.msra.mxu0 %v3855
    %5548 = vmatprep.subr.bf16.mxu0 %v3866
    %5549 = vmatpush1.bf16.msra.mxu0 %v3865
    %5550 = vmatprep.mubr.bf16.mxu0 %v450
    %5551 = vmatmul.mubr.bf16.gmra.mrb[0].mxu0 %v449
    %v5552 = vpop.f32.mrb[0].mxu0
    %v5553 = vadd.f32 %v1274, %v5552
    %v5554 = vpop.f32.mrb[0].mxu0
    %v5555 = vadd.f32 %v1278, %v5554
    %v5556 = vpop.f32.mrb[0].mxu0
    %v5557 = vpop.f32.mrb[0].mxu0
    %5558 = vdwg.mxu0
    %5559 = vmatprep.subr.bf16.mxu0 %v3876
    %5560 = vmatpush1.bf16.msra.mxu0 %v3875
    %5561 = vmatprep.subr.bf16.mxu0 %v3886
    %5562 = vmatpush1.bf16.msra.mxu0 %v3885
    %5563 = vmatprep.subr.bf16.mxu0 %v3896
    %5564 = vmatpush1.bf16.msra.mxu0 %v3895
    %5565 = vmatprep.subr.bf16.mxu0 %v3906
    %5566 = vmatpush1.bf16.msra.mxu0 %v3905
    %5567 = vmatprep.subr.bf16.mxu0 %v3916
    %5568 = vmatpush1.bf16.msra.mxu0 %v3915
    %5569 = vmatprep.subr.bf16.mxu0 %v3926
    %5570 = vmatpush1.bf16.msra.mxu0 %v3925
    %5571 = vmatprep.subr.bf16.mxu0 %v3936
    %5572 = vmatpush1.bf16.msra.mxu0 %v3935
    %5573 = vmatprep.subr.bf16.mxu0 %v3946
    %5574 = vmatpush1.bf16.msra.mxu0 %v3945
    %5575 = vmatprep.subr.bf16.mxu0 %v3956
    %5576 = vmatpush1.bf16.msra.mxu0 %v3955
    %5577 = vmatprep.subr.bf16.mxu0 %v3966
    %5578 = vmatpush1.bf16.msra.mxu0 %v3965
    %5579 = vmatprep.subr.bf16.mxu0 %v3976
    %5580 = vmatpush1.bf16.msra.mxu0 %v3975
    %5581 = vmatprep.subr.bf16.mxu0 %v3986
    %5582 = vmatpush1.bf16.msra.mxu0 %v3985
    %5583 = vmatprep.subr.bf16.mxu0 %v3996
    %5584 = vmatpush1.bf16.msra.mxu0 %v3995
    %5585 = vmatprep.subr.bf16.mxu0 %v4006
    %5586 = vmatpush1.bf16.msra.mxu0 %v4005
    %5587 = vmatprep.subr.bf16.mxu0 %v4016
    %5588 = vmatpush1.bf16.msra.mxu0 %v4015
    %5589 = vmatprep.subr.bf16.mxu0 %v4026
    %5590 = vmatpush1.bf16.msra.mxu0 %v4025
    %5591 = vmatprep.mubr.bf16.mxu0 %v452
    %5592 = vmatmul.mubr.bf16.gmra.mrb[0].mxu0 %v451
    %v5593 = vpop.f32.mrb[0].mxu0
    %v5594 = vadd.f32 %v5553, %v5593
    %v5595 = vpop.f32.mrb[0].mxu0
    %v5596 = vadd.f32 %v5555, %v5595
    %v5597 = vpop.f32.mrb[0].mxu0
    %v5598 = vpop.f32.mrb[0].mxu0
    %5599 = vdwg.mxu0
    %5600 = vmatprep.subr.bf16.mxu0 %v4036
    %5601 = vmatpush1.bf16.msra.mxu0 %v4035
    %5602 = vmatprep.subr.bf16.mxu0 %v4046
    %5603 = vmatpush1.bf16.msra.mxu0 %v4045
    %5604 = vmatprep.subr.bf16.mxu0 %v4056
    %5605 = vmatpush1.bf16.msra.mxu0 %v4055
    %5606 = vmatprep.subr.bf16.mxu0 %v4066
    %5607 = vmatpush1.bf16.msra.mxu0 %v4065
    %5608 = vmatprep.subr.bf16.mxu0 %v4076
    %5609 = vmatpush1.bf16.msra.mxu0 %v4075
    %5610 = vmatprep.subr.bf16.mxu0 %v4086
    %5611 = vmatpush1.bf16.msra.mxu0 %v4085
    %5612 = vmatprep.subr.bf16.mxu0 %v4096
    %5613 = vmatpush1.bf16.msra.mxu0 %v4095
    %5614 = vmatprep.subr.bf16.mxu0 %v4106
    %5615 = vmatpush1.bf16.msra.mxu0 %v4105
    %5616 = vmatprep.subr.bf16.mxu0 %v4116
    %5617 = vmatpush1.bf16.msra.mxu0 %v4115
    %5618 = vmatprep.subr.bf16.mxu0 %v4126
    %5619 = vmatpush1.bf16.msra.mxu0 %v4125
    %5620 = vmatprep.subr.bf16.mxu0 %v4136
    %5621 = vmatpush1.bf16.msra.mxu0 %v4135
    %5622 = vmatprep.subr.bf16.mxu0 %v4146
    %5623 = vmatpush1.bf16.msra.mxu0 %v4145
    %5624 = vmatprep.subr.bf16.mxu0 %v4156
    %5625 = vmatpush1.bf16.msra.mxu0 %v4155
    %5626 = vmatprep.subr.bf16.mxu0 %v4166
    %5627 = vmatpush1.bf16.msra.mxu0 %v4165
    %5628 = vmatprep.subr.bf16.mxu0 %v4176
    %5629 = vmatpush1.bf16.msra.mxu0 %v4175
    %5630 = vmatprep.subr.bf16.mxu0 %v4186
    %5631 = vmatpush1.bf16.msra.mxu0 %v4185
    %5632 = vmatprep.mubr.bf16.mxu0 %v454
    %5633 = vmatmul.mubr.bf16.gmra.mrb[0].mxu0 %v453
    %v5634 = vpop.f32.mrb[0].mxu0
    %v5635 = vadd.f32 %v5594, %v5634
    %v5636 = vpop.f32.mrb[0].mxu0
    %v5637 = vadd.f32 %v5596, %v5636
    %v5638 = vpop.f32.mrb[0].mxu0
    %v5639 = vpop.f32.mrb[0].mxu0
    %5640 = vdwg.mxu0
    %5641 = vmatprep.subr.bf16.mxu0 %v4196
    %5642 = vmatpush1.bf16.msra.mxu0 %v4195
    %5643 = vmatprep.subr.bf16.mxu0 %v4206
    %5644 = vmatpush1.bf16.msra.mxu0 %v4205
    %5645 = vmatprep.subr.bf16.mxu0 %v4216
    %5646 = vmatpush1.bf16.msra.mxu0 %v4215
    %5647 = vmatprep.subr.bf16.mxu0 %v4226
    %5648 = vmatpush1.bf16.msra.mxu0 %v4225
    %5649 = vmatprep.subr.bf16.mxu0 %v4236
    %5650 = vmatpush1.bf16.msra.mxu0 %v4235
    %5651 = vmatprep.subr.bf16.mxu0 %v4246
    %5652 = vmatpush1.bf16.msra.mxu0 %v4245
    %5653 = vmatprep.subr.bf16.mxu0 %v4256
    %5654 = vmatpush1.bf16.msra.mxu0 %v4255
    %5655 = vmatprep.subr.bf16.mxu0 %v4266
    %5656 = vmatpush1.bf16.msra.mxu0 %v4265
    %5657 = vmatprep.subr.bf16.mxu0 %v4276
    %5658 = vmatpush1.bf16.msra.mxu0 %v4275
    %5659 = vmatprep.subr.bf16.mxu0 %v4286
    %5660 = vmatpush1.bf16.msra.mxu0 %v4285
    %5661 = vmatprep.subr.bf16.mxu0 %v4296
    %5662 = vmatpush1.bf16.msra.mxu0 %v4295
    %5663 = vmatprep.subr.bf16.mxu0 %v4306
    %5664 = vmatpush1.bf16.msra.mxu0 %v4305
    %5665 = vmatprep.subr.bf16.mxu0 %v4316
    %5666 = vmatpush1.bf16.msra.mxu0 %v4315
    %5667 = vmatprep.subr.bf16.mxu0 %v4326
    %5668 = vmatpush1.bf16.msra.mxu0 %v4325
    %5669 = vmatprep.subr.bf16.mxu0 %v4336
    %5670 = vmatpush1.bf16.msra.mxu0 %v4335
    %5671 = vmatprep.subr.bf16.mxu0 %v4346
    %5672 = vmatpush1.bf16.msra.mxu0 %v4345
    %5673 = vmatprep.mubr.bf16.mxu0 %v456
    %5674 = vmatmul.mubr.bf16.gmra.mrb[0].mxu0 %v455
    %v5675 = vpop.f32.mrb[0].mxu0
    %v5676 = vadd.f32 %v5635, %v5675
    %v5677 = vpop.f32.mrb[0].mxu0
    %v5678 = vadd.f32 %v5637, %v5677
    %v5679 = vpop.f32.mrb[0].mxu0
    %v5680 = vpop.f32.mrb[0].mxu0
    %5681 = vdwg.mxu0
    %5682 = vmatprep.subr.bf16.mxu0 %v4356
    %5683 = vmatpush1.bf16.msra.mxu0 %v4355
    %5684 = vmatprep.subr.bf16.mxu0 %v4366
    %5685 = vmatpush1.bf16.msra.mxu0 %v4365
    %5686 = vmatprep.subr.bf16.mxu0 %v4376
    %5687 = vmatpush1.bf16.msra.mxu0 %v4375
    %5688 = vmatprep.subr.bf16.mxu0 %v4386
    %5689 = vmatpush1.bf16.msra.mxu0 %v4385
    %5690 = vmatprep.subr.bf16.mxu0 %v4396
    %5691 = vmatpush1.bf16.msra.mxu0 %v4395
    %5692 = vmatprep.subr.bf16.mxu0 %v4406
    %5693 = vmatpush1.bf16.msra.mxu0 %v4405
    %5694 = vmatprep.subr.bf16.mxu0 %v4416
    %5695 = vmatpush1.bf16.msra.mxu0 %v4415
    %5696 = vmatprep.subr.bf16.mxu0 %v4426
    %5697 = vmatpush1.bf16.msra.mxu0 %v4425
    %5698 = vmatprep.subr.bf16.mxu0 %v4436
    %5699 = vmatpush1.bf16.msra.mxu0 %v4435
    %5700 = vmatprep.subr.bf16.mxu0 %v4446
    %5701 = vmatpush1.bf16.msra.mxu0 %v4445
    %5702 = vmatprep.subr.bf16.mxu0 %v4456
    %5703 = vmatpush1.bf16.msra.mxu0 %v4455
    %5704 = vmatprep.subr.bf16.mxu0 %v4466
    %5705 = vmatpush1.bf16.msra.mxu0 %v4465
    %5706 = vmatprep.subr.bf16.mxu0 %v4476
    %5707 = vmatpush1.bf16.msra.mxu0 %v4475
    %5708 = vmatprep.subr.bf16.mxu0 %v4486
    %5709 = vmatpush1.bf16.msra.mxu0 %v4485
    %5710 = vmatprep.subr.bf16.mxu0 %v4496
    %5711 = vmatpush1.bf16.msra.mxu0 %v4495
    %5712 = vmatprep.subr.bf16.mxu0 %v4506
    %5713 = vmatpush1.bf16.msra.mxu0 %v4505
    %5714 = vmatprep.mubr.bf16.mxu0 %v458
    %5715 = vmatmul.mubr.bf16.gmra.mrb[0].mxu0 %v457
    %v5716 = vpop.f32.mrb[0].mxu0
    %v5717 = vadd.f32 %v5676, %v5716
    %v5718 = vpop.f32.mrb[0].mxu0
    %v5719 = vadd.f32 %v5678, %v5718
    %v5720 = vpop.f32.mrb[0].mxu0
    %v5721 = vpop.f32.mrb[0].mxu0
    %5722 = vdwg.mxu0
    %5723 = vmatprep.subr.bf16.mxu0 %v3718
    %5724 = vmatpush1.bf16.msra.mxu0 %v3717
    %5725 = vmatprep.subr.bf16.mxu0 %v3728
    %5726 = vmatpush1.bf16.msra.mxu0 %v3727
    %5727 = vmatprep.subr.bf16.mxu0 %v3738
    %5728 = vmatpush1.bf16.msra.mxu0 %v3737
    %5729 = vmatprep.subr.bf16.mxu0 %v3748
    %5730 = vmatpush1.bf16.msra.mxu0 %v3747
    %5731 = vmatprep.subr.bf16.mxu0 %v3758
    %5732 = vmatpush1.bf16.msra.mxu0 %v3757
    %5733 = vmatprep.subr.bf16.mxu0 %v3768
    %5734 = vmatpush1.bf16.msra.mxu0 %v3767
    %5735 = vmatprep.subr.bf16.mxu0 %v3778
    %5736 = vmatpush1.bf16.msra.mxu0 %v3777
    %5737 = vmatprep.subr.bf16.mxu0 %v3788
    %5738 = vmatpush1.bf16.msra.mxu0 %v3787
    %5739 = vmatprep.subr.bf16.mxu0 %v3798
    %5740 = vmatpush1.bf16.msra.mxu0 %v3797
    %5741 = vmatprep.subr.bf16.mxu0 %v3808
    %5742 = vmatpush1.bf16.msra.mxu0 %v3807
    %5743 = vmatprep.subr.bf16.mxu0 %v3818
    %5744 = vmatpush1.bf16.msra.mxu0 %v3817
    %5745 = vmatprep.subr.bf16.mxu0 %v3828
    %5746 = vmatpush1.bf16.msra.mxu0 %v3827
    %5747 = vmatprep.subr.bf16.mxu0 %v3838
    %5748 = vmatpush1.bf16.msra.mxu0 %v3837
    %5749 = vmatprep.subr.bf16.mxu0 %v3848
    %5750 = vmatpush1.bf16.msra.mxu0 %v3847
    %5751 = vmatprep.subr.bf16.mxu0 %v3858
    %5752 = vmatpush1.bf16.msra.mxu0 %v3857
    %5753 = vmatprep.subr.bf16.mxu0 %v3868
    %5754 = vmatpush1.bf16.msra.mxu0 %v3867
    %5755 = vmatprep.mubr.bf16.mxu0 %v450
    %5756 = vmatmul.mubr.bf16.gmra.mrb[0].mxu0 %v449
    %v5757 = vpop.f32.mrb[0].mxu0
    %v5758 = vadd.f32 %v1282, %v5757
    %v5759 = vpop.f32.mrb[0].mxu0
    %v5760 = vadd.f32 %v1286, %v5759
    %v5761 = vpop.f32.mrb[0].mxu0
    %v5762 = vpop.f32.mrb[0].mxu0
    %5763 = vdwg.mxu0
    %5764 = vmatprep.subr.bf16.mxu0 %v3878
    %5765 = vmatpush1.bf16.msra.mxu0 %v3877
    %5766 = vmatprep.subr.bf16.mxu0 %v3888
    %5767 = vmatpush1.bf16.msra.mxu0 %v3887
    %5768 = vmatprep.subr.bf16.mxu0 %v3898
    %5769 = vmatpush1.bf16.msra.mxu0 %v3897
    %5770 = vmatprep.subr.bf16.mxu0 %v3908
    %5771 = vmatpush1.bf16.msra.mxu0 %v3907
    %5772 = vmatprep.subr.bf16.mxu0 %v3918
    %5773 = vmatpush1.bf16.msra.mxu0 %v3917
    %5774 = vmatprep.subr.bf16.mxu0 %v3928
    %5775 = vmatpush1.bf16.msra.mxu0 %v3927
    %5776 = vmatprep.subr.bf16.mxu0 %v3938
    %5777 = vmatpush1.bf16.msra.mxu0 %v3937
    %5778 = vmatprep.subr.bf16.mxu0 %v3948
    %5779 = vmatpush1.bf16.msra.mxu0 %v3947
    %5780 = vmatprep.subr.bf16.mxu0 %v3958
    %5781 = vmatpush1.bf16.msra.mxu0 %v3957
    %5782 = vmatprep.subr.bf16.mxu0 %v3968
    %5783 = vmatpush1.bf16.msra.mxu0 %v3967
    %5784 = vmatprep.subr.bf16.mxu0 %v3978
    %5785 = vmatpush1.bf16.msra.mxu0 %v3977
    %5786 = vmatprep.subr.bf16.mxu0 %v3988
    %5787 = vmatpush1.bf16.msra.mxu0 %v3987
    %5788 = vmatprep.subr.bf16.mxu0 %v3998
    %5789 = vmatpush1.bf16.msra.mxu0 %v3997
    %5790 = vmatprep.subr.bf16.mxu0 %v4008
    %5791 = vmatpush1.bf16.msra.mxu0 %v4007
    %5792 = vmatprep.subr.bf16.mxu0 %v4018
    %5793 = vmatpush1.bf16.msra.mxu0 %v4017
    %5794 = vmatprep.subr.bf16.mxu0 %v4028
    %5795 = vmatpush1.bf16.msra.mxu0 %v4027
    %5796 = vmatprep.mubr.bf16.mxu0 %v452
    %5797 = vmatmul.mubr.bf16.gmra.mrb[0].mxu0 %v451
    %v5798 = vpop.f32.mrb[0].mxu0
    %v5799 = vadd.f32 %v5758, %v5798
    %v5800 = vpop.f32.mrb[0].mxu0
    %v5801 = vadd.f32 %v5760, %v5800
    %v5802 = vpop.f32.mrb[0].mxu0
    %v5803 = vpop.f32.mrb[0].mxu0
    %5804 = vdwg.mxu0
    %5805 = vmatprep.subr.bf16.mxu0 %v4038
    %5806 = vmatpush1.bf16.msra.mxu0 %v4037
    %5807 = vmatprep.subr.bf16.mxu0 %v4048
    %5808 = vmatpush1.bf16.msra.mxu0 %v4047
    %5809 = vmatprep.subr.bf16.mxu0 %v4058
    %5810 = vmatpush1.bf16.msra.mxu0 %v4057
    %5811 = vmatprep.subr.bf16.mxu0 %v4068
    %5812 = vmatpush1.bf16.msra.mxu0 %v4067
    %5813 = vmatprep.subr.bf16.mxu0 %v4078
    %5814 = vmatpush1.bf16.msra.mxu0 %v4077
    %5815 = vmatprep.subr.bf16.mxu0 %v4088
    %5816 = vmatpush1.bf16.msra.mxu0 %v4087
    %5817 = vmatprep.subr.bf16.mxu0 %v4098
    %5818 = vmatpush1.bf16.msra.mxu0 %v4097
    %5819 = vmatprep.subr.bf16.mxu0 %v4108
    %5820 = vmatpush1.bf16.msra.mxu0 %v4107
    %5821 = vmatprep.subr.bf16.mxu0 %v4118
    %5822 = vmatpush1.bf16.msra.mxu0 %v4117
    %5823 = vmatprep.subr.bf16.mxu0 %v4128
    %5824 = vmatpush1.bf16.msra.mxu0 %v4127
    %5825 = vmatprep.subr.bf16.mxu0 %v4138
    %5826 = vmatpush1.bf16.msra.mxu0 %v4137
    %5827 = vmatprep.subr.bf16.mxu0 %v4148
    %5828 = vmatpush1.bf16.msra.mxu0 %v4147
    %5829 = vmatprep.subr.bf16.mxu0 %v4158
    %5830 = vmatpush1.bf16.msra.mxu0 %v4157
    %5831 = vmatprep.subr.bf16.mxu0 %v4168
    %5832 = vmatpush1.bf16.msra.mxu0 %v4167
    %5833 = vmatprep.subr.bf16.mxu0 %v4178
    %5834 = vmatpush1.bf16.msra.mxu0 %v4177
    %5835 = vmatprep.subr.bf16.mxu0 %v4188
    %5836 = vmatpush1.bf16.msra.mxu0 %v4187
    %5837 = vmatprep.mubr.bf16.mxu0 %v454
    %5838 = vmatmul.mubr.bf16.gmra.mrb[0].mxu0 %v453
    %v5839 = vpop.f32.mrb[0].mxu0
    %v5840 = vadd.f32 %v5799, %v5839
    %v5841 = vpop.f32.mrb[0].mxu0
    %v5842 = vadd.f32 %v5801, %v5841
    %v5843 = vpop.f32.mrb[0].mxu0
    %v5844 = vpop.f32.mrb[0].mxu0
    %5845 = vdwg.mxu0
    %5846 = vmatprep.subr.bf16.mxu0 %v4198
    %5847 = vmatpush1.bf16.msra.mxu0 %v4197
    %5848 = vmatprep.subr.bf16.mxu0 %v4208
    %5849 = vmatpush1.bf16.msra.mxu0 %v4207
    %5850 = vmatprep.subr.bf16.mxu0 %v4218
    %5851 = vmatpush1.bf16.msra.mxu0 %v4217
    %5852 = vmatprep.subr.bf16.mxu0 %v4228
    %5853 = vmatpush1.bf16.msra.mxu0 %v4227
    %5854 = vmatprep.subr.bf16.mxu0 %v4238
    %5855 = vmatpush1.bf16.msra.mxu0 %v4237
    %5856 = vmatprep.subr.bf16.mxu0 %v4248
    %5857 = vmatpush1.bf16.msra.mxu0 %v4247
    %5858 = vmatprep.subr.bf16.mxu0 %v4258
    %5859 = vmatpush1.bf16.msra.mxu0 %v4257
    %5860 = vmatprep.subr.bf16.mxu0 %v4268
    %5861 = vmatpush1.bf16.msra.mxu0 %v4267
    %5862 = vmatprep.subr.bf16.mxu0 %v4278
    %5863 = vmatpush1.bf16.msra.mxu0 %v4277
    %5864 = vmatprep.subr.bf16.mxu0 %v4288
    %5865 = vmatpush1.bf16.msra.mxu0 %v4287
    %5866 = vmatprep.subr.bf16.mxu0 %v4298
    %5867 = vmatpush1.bf16.msra.mxu0 %v4297
    %5868 = vmatprep.subr.bf16.mxu0 %v4308
    %5869 = vmatpush1.bf16.msra.mxu0 %v4307
    %5870 = vmatprep.subr.bf16.mxu0 %v4318
    %5871 = vmatpush1.bf16.msra.mxu0 %v4317
    %5872 = vmatprep.subr.bf16.mxu0 %v4328
    %5873 = vmatpush1.bf16.msra.mxu0 %v4327
    %5874 = vmatprep.subr.bf16.mxu0 %v4338
    %5875 = vmatpush1.bf16.msra.mxu0 %v4337
    %5876 = vmatprep.subr.bf16.mxu0 %v4348
    %5877 = vmatpush1.bf16.msra.mxu0 %v4347
    %5878 = vmatprep.mubr.bf16.mxu0 %v456
    %5879 = vmatmul.mubr.bf16.gmra.mrb[0].mxu0 %v455
    %v5880 = vpop.f32.mrb[0].mxu0
    %v5881 = vadd.f32 %v5840, %v5880
    %v5882 = vpop.f32.mrb[0].mxu0
    %v5883 = vadd.f32 %v5842, %v5882
    %v5884 = vpop.f32.mrb[0].mxu0
    %v5885 = vpop.f32.mrb[0].mxu0
    %5886 = vdwg.mxu0
    %5887 = vmatprep.subr.bf16.mxu0 %v4358
    %5888 = vmatpush1.bf16.msra.mxu0 %v4357
    %5889 = vmatprep.subr.bf16.mxu0 %v4368
    %5890 = vmatpush1.bf16.msra.mxu0 %v4367
    %5891 = vmatprep.subr.bf16.mxu0 %v4378
    %5892 = vmatpush1.bf16.msra.mxu0 %v4377
    %5893 = vmatprep.subr.bf16.mxu0 %v4388
    %5894 = vmatpush1.bf16.msra.mxu0 %v4387
    %5895 = vmatprep.subr.bf16.mxu0 %v4398
    %5896 = vmatpush1.bf16.msra.mxu0 %v4397
    %5897 = vmatprep.subr.bf16.mxu0 %v4408
    %5898 = vmatpush1.bf16.msra.mxu0 %v4407
    %5899 = vmatprep.subr.bf16.mxu0 %v4418
    %5900 = vmatpush1.bf16.msra.mxu0 %v4417
    %5901 = vmatprep.subr.bf16.mxu0 %v4428
    %5902 = vmatpush1.bf16.msra.mxu0 %v4427
    %5903 = vmatprep.subr.bf16.mxu0 %v4438
    %5904 = vmatpush1.bf16.msra.mxu0 %v4437
    %5905 = vmatprep.subr.bf16.mxu0 %v4448
    %5906 = vmatpush1.bf16.msra.mxu0 %v4447
    %5907 = vmatprep.subr.bf16.mxu0 %v4458
    %5908 = vmatpush1.bf16.msra.mxu0 %v4457
    %5909 = vmatprep.subr.bf16.mxu0 %v4468
    %5910 = vmatpush1.bf16.msra.mxu0 %v4467
    %5911 = vmatprep.subr.bf16.mxu0 %v4478
    %5912 = vmatpush1.bf16.msra.mxu0 %v4477
    %5913 = vmatprep.subr.bf16.mxu0 %v4488
    %5914 = vmatpush1.bf16.msra.mxu0 %v4487
    %5915 = vmatprep.subr.bf16.mxu0 %v4498
    %5916 = vmatpush1.bf16.msra.mxu0 %v4497
    %5917 = vmatprep.subr.bf16.mxu0 %v4508
    %5918 = vmatpush1.bf16.msra.mxu0 %v4507
    %5919 = vmatprep.mubr.bf16.mxu0 %v458
    %5920 = vmatmul.mubr.bf16.gmra.mrb[0].mxu0 %v457
    %v5921 = vpop.f32.mrb[0].mxu0
    %v5922 = vadd.f32 %v5881, %v5921
    %v5923 = vpop.f32.mrb[0].mxu0
    %v5924 = vadd.f32 %v5883, %v5923
    %v5925 = vpop.f32.mrb[0].mxu0
    %v5926 = vpop.f32.mrb[0].mxu0
    %5927 = vdwg.mxu0
    %5928 = vmatprep.subr.bf16.mxu0 %v3720
    %5929 = vmatpush1.bf16.msra.mxu0 %v3719
    %5930 = vmatprep.subr.bf16.mxu0 %v3730
    %5931 = vmatpush1.bf16.msra.mxu0 %v3729
    %5932 = vmatprep.subr.bf16.mxu0 %v3740
    %5933 = vmatpush1.bf16.msra.mxu0 %v3739
    %5934 = vmatprep.subr.bf16.mxu0 %v3750
    %5935 = vmatpush1.bf16.msra.mxu0 %v3749
    %5936 = vmatprep.subr.bf16.mxu0 %v3760
    %5937 = vmatpush1.bf16.msra.mxu0 %v3759
    %5938 = vmatprep.subr.bf16.mxu0 %v3770
    %5939 = vmatpush1.bf16.msra.mxu0 %v3769
    %5940 = vmatprep.subr.bf16.mxu0 %v3780
    %5941 = vmatpush1.bf16.msra.mxu0 %v3779
    %5942 = vmatprep.subr.bf16.mxu0 %v3790
    %5943 = vmatpush1.bf16.msra.mxu0 %v3789
    %5944 = vmatprep.subr.bf16.mxu0 %v3800
    %5945 = vmatpush1.bf16.msra.mxu0 %v3799
    %5946 = vmatprep.subr.bf16.mxu0 %v3810
    %5947 = vmatpush1.bf16.msra.mxu0 %v3809
    %5948 = vmatprep.subr.bf16.mxu0 %v3820
    %5949 = vmatpush1.bf16.msra.mxu0 %v3819
    %5950 = vmatprep.subr.bf16.mxu0 %v3830
    %5951 = vmatpush1.bf16.msra.mxu0 %v3829
    %5952 = vmatprep.subr.bf16.mxu0 %v3840
    %5953 = vmatpush1.bf16.msra.mxu0 %v3839
    %5954 = vmatprep.subr.bf16.mxu0 %v3850
    %5955 = vmatpush1.bf16.msra.mxu0 %v3849
    %5956 = vmatprep.subr.bf16.mxu0 %v3860
    %5957 = vmatpush1.bf16.msra.mxu0 %v3859
    %5958 = vmatprep.subr.bf16.mxu0 %v3870
    %5959 = vmatpush1.bf16.msra.mxu0 %v3869
    %5960 = vmatprep.mubr.bf16.mxu0 %v450
    %5961 = vmatmul.mubr.bf16.gmra.mrb[0].mxu0 %v449
    %v5962 = vpop.f32.mrb[0].mxu0
    %v5963 = vadd.f32 %v1290, %v5962
    %v5964 = vpop.f32.mrb[0].mxu0
    %v5965 = vadd.f32 %v1294, %v5964
    %v5966 = vpop.f32.mrb[0].mxu0
    %v5967 = vpop.f32.mrb[0].mxu0
    %5968 = vdwg.mxu0
    %5969 = vmatprep.subr.bf16.mxu0 %v3880
    %5970 = vmatpush1.bf16.msra.mxu0 %v3879
    %5971 = vmatprep.subr.bf16.mxu0 %v3890
    %5972 = vmatpush1.bf16.msra.mxu0 %v3889
    %5973 = vmatprep.subr.bf16.mxu0 %v3900
    %5974 = vmatpush1.bf16.msra.mxu0 %v3899
    %5975 = vmatprep.subr.bf16.mxu0 %v3910
    %5976 = vmatpush1.bf16.msra.mxu0 %v3909
    %5977 = vmatprep.subr.bf16.mxu0 %v3920
    %5978 = vmatpush1.bf16.msra.mxu0 %v3919
    %5979 = vmatprep.subr.bf16.mxu0 %v3930
    %5980 = vmatpush1.bf16.msra.mxu0 %v3929
    %5981 = vmatprep.subr.bf16.mxu0 %v3940
    %5982 = vmatpush1.bf16.msra.mxu0 %v3939
    %5983 = vmatprep.subr.bf16.mxu0 %v3950
    %5984 = vmatpush1.bf16.msra.mxu0 %v3949
    %5985 = vmatprep.subr.bf16.mxu0 %v3960
    %5986 = vmatpush1.bf16.msra.mxu0 %v3959
    %5987 = vmatprep.subr.bf16.mxu0 %v3970
    %5988 = vmatpush1.bf16.msra.mxu0 %v3969
    %5989 = vmatprep.subr.bf16.mxu0 %v3980
    %5990 = vmatpush1.bf16.msra.mxu0 %v3979
    %5991 = vmatprep.subr.bf16.mxu0 %v3990
    %5992 = vmatpush1.bf16.msra.mxu0 %v3989
    %5993 = vmatprep.subr.bf16.mxu0 %v4000
    %5994 = vmatpush1.bf16.msra.mxu0 %v3999
    %5995 = vmatprep.subr.bf16.mxu0 %v4010
    %5996 = vmatpush1.bf16.msra.mxu0 %v4009
    %5997 = vmatprep.subr.bf16.mxu0 %v4020
    %5998 = vmatpush1.bf16.msra.mxu0 %v4019
    %5999 = vmatprep.subr.bf16.mxu0 %v4030
    %6000 = vmatpush1.bf16.msra.mxu0 %v4029
    %6001 = vmatprep.mubr.bf16.mxu0 %v452
    %6002 = vmatmul.mubr.bf16.gmra.mrb[0].mxu0 %v451
    %v6003 = vpop.f32.mrb[0].mxu0
    %v6004 = vadd.f32 %v5963, %v6003
    %v6005 = vpop.f32.mrb[0].mxu0
    %v6006 = vadd.f32 %v5965, %v6005
    %v6007 = vpop.f32.mrb[0].mxu0
    %v6008 = vpop.f32.mrb[0].mxu0
    %6009 = vdwg.mxu0
    %6010 = vmatprep.subr.bf16.mxu0 %v4040
    %6011 = vmatpush1.bf16.msra.mxu0 %v4039
    %6012 = vmatprep.subr.bf16.mxu0 %v4050
    %6013 = vmatpush1.bf16.msra.mxu0 %v4049
    %6014 = vmatprep.subr.bf16.mxu0 %v4060
    %6015 = vmatpush1.bf16.msra.mxu0 %v4059
    %6016 = vmatprep.subr.bf16.mxu0 %v4070
    %6017 = vmatpush1.bf16.msra.mxu0 %v4069
    %6018 = vmatprep.subr.bf16.mxu0 %v4080
    %6019 = vmatpush1.bf16.msra.mxu0 %v4079
    %6020 = vmatprep.subr.bf16.mxu0 %v4090
    %6021 = vmatpush1.bf16.msra.mxu0 %v4089
    %6022 = vmatprep.subr.bf16.mxu0 %v4100
    %6023 = vmatpush1.bf16.msra.mxu0 %v4099
    %6024 = vmatprep.subr.bf16.mxu0 %v4110
    %6025 = vmatpush1.bf16.msra.mxu0 %v4109
    %6026 = vmatprep.subr.bf16.mxu0 %v4120
    %6027 = vmatpush1.bf16.msra.mxu0 %v4119
    %6028 = vmatprep.subr.bf16.mxu0 %v4130
    %6029 = vmatpush1.bf16.msra.mxu0 %v4129
    %6030 = vmatprep.subr.bf16.mxu0 %v4140
    %6031 = vmatpush1.bf16.msra.mxu0 %v4139
    %6032 = vmatprep.subr.bf16.mxu0 %v4150
    %6033 = vmatpush1.bf16.msra.mxu0 %v4149
    %6034 = vmatprep.subr.bf16.mxu0 %v4160
    %6035 = vmatpush1.bf16.msra.mxu0 %v4159
    %6036 = vmatprep.subr.bf16.mxu0 %v4170
    %6037 = vmatpush1.bf16.msra.mxu0 %v4169
    %6038 = vmatprep.subr.bf16.mxu0 %v4180
    %6039 = vmatpush1.bf16.msra.mxu0 %v4179
    %6040 = vmatprep.subr.bf16.mxu0 %v4190
    %6041 = vmatpush1.bf16.msra.mxu0 %v4189
    %6042 = vmatprep.mubr.bf16.mxu0 %v454
    %6043 = vmatmul.mubr.bf16.gmra.mrb[0].mxu0 %v453
    %v6044 = vpop.f32.mrb[0].mxu0
    %v6045 = vadd.f32 %v6004, %v6044
    %v6046 = vpop.f32.mrb[0].mxu0
    %v6047 = vadd.f32 %v6006, %v6046
    %v6048 = vpop.f32.mrb[0].mxu0
    %v6049 = vpop.f32.mrb[0].mxu0
    %6050 = vdwg.mxu0
    %6051 = vmatprep.subr.bf16.mxu0 %v4200
    %6052 = vmatpush1.bf16.msra.mxu0 %v4199
    %6053 = vmatprep.subr.bf16.mxu0 %v4210
    %6054 = vmatpush1.bf16.msra.mxu0 %v4209
    %6055 = vmatprep.subr.bf16.mxu0 %v4220
    %6056 = vmatpush1.bf16.msra.mxu0 %v4219
    %6057 = vmatprep.subr.bf16.mxu0 %v4230
    %6058 = vmatpush1.bf16.msra.mxu0 %v4229
    %6059 = vmatprep.subr.bf16.mxu0 %v4240
    %6060 = vmatpush1.bf16.msra.mxu0 %v4239
    %6061 = vmatprep.subr.bf16.mxu0 %v4250
    %6062 = vmatpush1.bf16.msra.mxu0 %v4249
    %6063 = vmatprep.subr.bf16.mxu0 %v4260
    %6064 = vmatpush1.bf16.msra.mxu0 %v4259
    %6065 = vmatprep.subr.bf16.mxu0 %v4270
    %6066 = vmatpush1.bf16.msra.mxu0 %v4269
    %6067 = vmatprep.subr.bf16.mxu0 %v4280
    %6068 = vmatpush1.bf16.msra.mxu0 %v4279
    %6069 = vmatprep.subr.bf16.mxu0 %v4290
    %6070 = vmatpush1.bf16.msra.mxu0 %v4289
    %6071 = vmatprep.subr.bf16.mxu0 %v4300
    %6072 = vmatpush1.bf16.msra.mxu0 %v4299
    %6073 = vmatprep.subr.bf16.mxu0 %v4310
    %6074 = vmatpush1.bf16.msra.mxu0 %v4309
    %6075 = vmatprep.subr.bf16.mxu0 %v4320
    %6076 = vmatpush1.bf16.msra.mxu0 %v4319
    %6077 = vmatprep.subr.bf16.mxu0 %v4330
    %6078 = vmatpush1.bf16.msra.mxu0 %v4329
    %6079 = vmatprep.subr.bf16.mxu0 %v4340
    %6080 = vmatpush1.bf16.msra.mxu0 %v4339
    %6081 = vmatprep.subr.bf16.mxu0 %v4350
    %6082 = vmatpush1.bf16.msra.mxu0 %v4349
    %6083 = vmatprep.mubr.bf16.mxu0 %v456
    %6084 = vmatmul.mubr.bf16.gmra.mrb[0].mxu0 %v455
    %v6085 = vpop.f32.mrb[0].mxu0
    %v6086 = vadd.f32 %v6045, %v6085
    %v6087 = vpop.f32.mrb[0].mxu0
    %v6088 = vadd.f32 %v6047, %v6087
    %v6089 = vpop.f32.mrb[0].mxu0
    %v6090 = vpop.f32.mrb[0].mxu0
    %6091 = vdwg.mxu0
    %6092 = vmatprep.subr.bf16.mxu0 %v4360
    %6093 = vmatpush1.bf16.msra.mxu0 %v4359
    %6094 = vmatprep.subr.bf16.mxu0 %v4370
    %6095 = vmatpush1.bf16.msra.mxu0 %v4369
    %6096 = vmatprep.subr.bf16.mxu0 %v4380
    %6097 = vmatpush1.bf16.msra.mxu0 %v4379
    %6098 = vmatprep.subr.bf16.mxu0 %v4390
    %6099 = vmatpush1.bf16.msra.mxu0 %v4389
    %6100 = vmatprep.subr.bf16.mxu0 %v4400
    %6101 = vmatpush1.bf16.msra.mxu0 %v4399
    %6102 = vmatprep.subr.bf16.mxu0 %v4410
    %6103 = vmatpush1.bf16.msra.mxu0 %v4409
    %6104 = vmatprep.subr.bf16.mxu0 %v4420
    %6105 = vmatpush1.bf16.msra.mxu0 %v4419
    %6106 = vmatprep.subr.bf16.mxu0 %v4430
    %6107 = vmatpush1.bf16.msra.mxu0 %v4429
    %6108 = vmatprep.subr.bf16.mxu0 %v4440
    %6109 = vmatpush1.bf16.msra.mxu0 %v4439
    %6110 = vmatprep.subr.bf16.mxu0 %v4450
    %6111 = vmatpush1.bf16.msra.mxu0 %v4449
    %6112 = vmatprep.subr.bf16.mxu0 %v4460
    %6113 = vmatpush1.bf16.msra.mxu0 %v4459
    %6114 = vmatprep.subr.bf16.mxu0 %v4470
    %6115 = vmatpush1.bf16.msra.mxu0 %v4469
    %6116 = vmatprep.subr.bf16.mxu0 %v4480
    %6117 = vmatpush1.bf16.msra.mxu0 %v4479
    %6118 = vmatprep.subr.bf16.mxu0 %v4490
    %6119 = vmatpush1.bf16.msra.mxu0 %v4489
    %6120 = vmatprep.subr.bf16.mxu0 %v4500
    %6121 = vmatpush1.bf16.msra.mxu0 %v4499
    %6122 = vmatprep.subr.bf16.mxu0 %v4510
    %6123 = vmatpush1.bf16.msra.mxu0 %v4509
    %6124 = vmatprep.mubr.bf16.mxu0 %v458
    %6125 = vmatmul.mubr.bf16.gmra.mrb[0].mxu0 %v457
    %v6126 = vpop.f32.mrb[0].mxu0
    %v6127 = vadd.f32 %v6086, %v6126
    %v6128 = vpop.f32.mrb[0].mxu0
    %v6129 = vadd.f32 %v6088, %v6128
    %v6130 = vpop.f32.mrb[0].mxu0
    %v6131 = vpop.f32.mrb[0].mxu0
    %6132 = vdwg.mxu0
    %6133 = vmatprep.subr.bf16.mxu0 %v3722
    %6134 = vmatpush1.bf16.msra.mxu0 %v3721
    %6135 = vmatprep.subr.bf16.mxu0 %v3732
    %6136 = vmatpush1.bf16.msra.mxu0 %v3731
    %6137 = vmatprep.subr.bf16.mxu0 %v3742
    %6138 = vmatpush1.bf16.msra.mxu0 %v3741
    %6139 = vmatprep.subr.bf16.mxu0 %v3752
    %6140 = vmatpush1.bf16.msra.mxu0 %v3751
    %6141 = vmatprep.subr.bf16.mxu0 %v3762
    %6142 = vmatpush1.bf16.msra.mxu0 %v3761
    %6143 = vmatprep.subr.bf16.mxu0 %v3772
    %6144 = vmatpush1.bf16.msra.mxu0 %v3771
    %6145 = vmatprep.subr.bf16.mxu0 %v3782
    %6146 = vmatpush1.bf16.msra.mxu0 %v3781
    %6147 = vmatprep.subr.bf16.mxu0 %v3792
    %6148 = vmatpush1.bf16.msra.mxu0 %v3791
    %6149 = vmatprep.subr.bf16.mxu0 %v3802
    %6150 = vmatpush1.bf16.msra.mxu0 %v3801
    %6151 = vmatprep.subr.bf16.mxu0 %v3812
    %6152 = vmatpush1.bf16.msra.mxu0 %v3811
    %6153 = vmatprep.subr.bf16.mxu0 %v3822
    %6154 = vmatpush1.bf16.msra.mxu0 %v3821
    %6155 = vmatprep.subr.bf16.mxu0 %v3832
    %6156 = vmatpush1.bf16.msra.mxu0 %v3831
    %6157 = vmatprep.subr.bf16.mxu0 %v3842
    %6158 = vmatpush1.bf16.msra.mxu0 %v3841
    %6159 = vmatprep.subr.bf16.mxu0 %v3852
    %6160 = vmatpush1.bf16.msra.mxu0 %v3851
    %6161 = vmatprep.subr.bf16.mxu0 %v3862
    %6162 = vmatpush1.bf16.msra.mxu0 %v3861
    %6163 = vmatprep.subr.bf16.mxu0 %v3872
    %6164 = vmatpush1.bf16.msra.mxu0 %v3871
    %6165 = vmatprep.mubr.bf16.mxu0 %v450
    %6166 = vmatmul.mubr.bf16.gmra.mrb[0].mxu0 %v449
    %v6167 = vpop.f32.mrb[0].mxu0
    %v6168 = vadd.f32 %v1298, %v6167
    %v6169 = vpop.f32.mrb[0].mxu0
    %v6170 = vadd.f32 %v1302, %v6169
    %v6171 = vpop.f32.mrb[0].mxu0
    %v6172 = vpop.f32.mrb[0].mxu0
    %6173 = vdwg.mxu0
    %6174 = vmatprep.subr.bf16.mxu0 %v3882
    %6175 = vmatpush1.bf16.msra.mxu0 %v3881
    %6176 = vmatprep.subr.bf16.mxu0 %v3892
    %6177 = vmatpush1.bf16.msra.mxu0 %v3891
    %6178 = vmatprep.subr.bf16.mxu0 %v3902
    %6179 = vmatpush1.bf16.msra.mxu0 %v3901
    %6180 = vmatprep.subr.bf16.mxu0 %v3912
    %6181 = vmatpush1.bf16.msra.mxu0 %v3911
    %6182 = vmatprep.subr.bf16.mxu0 %v3922
    %6183 = vmatpush1.bf16.msra.mxu0 %v3921
    %6184 = vmatprep.subr.bf16.mxu0 %v3932
    %6185 = vmatpush1.bf16.msra.mxu0 %v3931
    %6186 = vmatprep.subr.bf16.mxu0 %v3942
    %6187 = vmatpush1.bf16.msra.mxu0 %v3941
    %6188 = vmatprep.subr.bf16.mxu0 %v3952
    %6189 = vmatpush1.bf16.msra.mxu0 %v3951
    %6190 = vmatprep.subr.bf16.mxu0 %v3962
    %6191 = vmatpush1.bf16.msra.mxu0 %v3961
    %6192 = vmatprep.subr.bf16.mxu0 %v3972
    %6193 = vmatpush1.bf16.msra.mxu0 %v3971
    %6194 = vmatprep.subr.bf16.mxu0 %v3982
    %6195 = vmatpush1.bf16.msra.mxu0 %v3981
    %6196 = vmatprep.subr.bf16.mxu0 %v3992
    %6197 = vmatpush1.bf16.msra.mxu0 %v3991
    %6198 = vmatprep.subr.bf16.mxu0 %v4002
    %6199 = vmatpush1.bf16.msra.mxu0 %v4001
    %6200 = vmatprep.subr.bf16.mxu0 %v4012
    %6201 = vmatpush1.bf16.msra.mxu0 %v4011
    %6202 = vmatprep.subr.bf16.mxu0 %v4022
    %6203 = vmatpush1.bf16.msra.mxu0 %v4021
    %6204 = vmatprep.subr.bf16.mxu0 %v4032
    %6205 = vmatpush1.bf16.msra.mxu0 %v4031
    %6206 = vmatprep.mubr.bf16.mxu0 %v452
    %6207 = vmatmul.mubr.bf16.gmra.mrb[0].mxu0 %v451
    %v6208 = vpop.f32.mrb[0].mxu0
    %v6209 = vadd.f32 %v6168, %v6208
    %v6210 = vpop.f32.mrb[0].mxu0
    %v6211 = vadd.f32 %v6170, %v6210
    %v6212 = vpop.f32.mrb[0].mxu0
    %v6213 = vpop.f32.mrb[0].mxu0
    %6214 = vdwg.mxu0
    %6215 = vmatprep.subr.bf16.mxu0 %v4042
    %6216 = vmatpush1.bf16.msra.mxu0 %v4041
    %6217 = vmatprep.subr.bf16.mxu0 %v4052
    %6218 = vmatpush1.bf16.msra.mxu0 %v4051
    %6219 = vmatprep.subr.bf16.mxu0 %v4062
    %6220 = vmatpush1.bf16.msra.mxu0 %v4061
    %6221 = vmatprep.subr.bf16.mxu0 %v4072
    %6222 = vmatpush1.bf16.msra.mxu0 %v4071
    %6223 = vmatprep.subr.bf16.mxu0 %v4082
    %6224 = vmatpush1.bf16.msra.mxu0 %v4081
    %6225 = vmatprep.subr.bf16.mxu0 %v4092
    %6226 = vmatpush1.bf16.msra.mxu0 %v4091
    %6227 = vmatprep.subr.bf16.mxu0 %v4102
    %6228 = vmatpush1.bf16.msra.mxu0 %v4101
    %6229 = vmatprep.subr.bf16.mxu0 %v4112
    %6230 = vmatpush1.bf16.msra.mxu0 %v4111
    %6231 = vmatprep.subr.bf16.mxu0 %v4122
    %6232 = vmatpush1.bf16.msra.mxu0 %v4121
    %6233 = vmatprep.subr.bf16.mxu0 %v4132
    %6234 = vmatpush1.bf16.msra.mxu0 %v4131
    %6235 = vmatprep.subr.bf16.mxu0 %v4142
    %6236 = vmatpush1.bf16.msra.mxu0 %v4141
    %6237 = vmatprep.subr.bf16.mxu0 %v4152
    %6238 = vmatpush1.bf16.msra.mxu0 %v4151
    %6239 = vmatprep.subr.bf16.mxu0 %v4162
    %6240 = vmatpush1.bf16.msra.mxu0 %v4161
    %6241 = vmatprep.subr.bf16.mxu0 %v4172
    %6242 = vmatpush1.bf16.msra.mxu0 %v4171
    %6243 = vmatprep.subr.bf16.mxu0 %v4182
    %6244 = vmatpush1.bf16.msra.mxu0 %v4181
    %6245 = vmatprep.subr.bf16.mxu0 %v4192
    %6246 = vmatpush1.bf16.msra.mxu0 %v4191
    %6247 = vmatprep.mubr.bf16.mxu0 %v454
    %6248 = vmatmul.mubr.bf16.gmra.mrb[0].mxu0 %v453
    %v6249 = vpop.f32.mrb[0].mxu0
    %v6250 = vadd.f32 %v6209, %v6249
    %v6251 = vpop.f32.mrb[0].mxu0
    %v6252 = vadd.f32 %v6211, %v6251
    %v6253 = vpop.f32.mrb[0].mxu0
    %v6254 = vpop.f32.mrb[0].mxu0
    %6255 = vdwg.mxu0
    %6256 = vmatprep.subr.bf16.mxu0 %v4202
    %6257 = vmatpush1.bf16.msra.mxu0 %v4201
    %6258 = vmatprep.subr.bf16.mxu0 %v4212
    %6259 = vmatpush1.bf16.msra.mxu0 %v4211
    %6260 = vmatprep.subr.bf16.mxu0 %v4222
    %6261 = vmatpush1.bf16.msra.mxu0 %v4221
    %6262 = vmatprep.subr.bf16.mxu0 %v4232
    %6263 = vmatpush1.bf16.msra.mxu0 %v4231
    %6264 = vmatprep.subr.bf16.mxu0 %v4242
    %6265 = vmatpush1.bf16.msra.mxu0 %v4241
    %6266 = vmatprep.subr.bf16.mxu0 %v4252
    %6267 = vmatpush1.bf16.msra.mxu0 %v4251
    %6268 = vmatprep.subr.bf16.mxu0 %v4262
    %6269 = vmatpush1.bf16.msra.mxu0 %v4261
    %6270 = vmatprep.subr.bf16.mxu0 %v4272
    %6271 = vmatpush1.bf16.msra.mxu0 %v4271
    %6272 = vmatprep.subr.bf16.mxu0 %v4282
    %6273 = vmatpush1.bf16.msra.mxu0 %v4281
    %6274 = vmatprep.subr.bf16.mxu0 %v4292
    %6275 = vmatpush1.bf16.msra.mxu0 %v4291
    %6276 = vmatprep.subr.bf16.mxu0 %v4302
    %6277 = vmatpush1.bf16.msra.mxu0 %v4301
    %6278 = vmatprep.subr.bf16.mxu0 %v4312
    %6279 = vmatpush1.bf16.msra.mxu0 %v4311
    %6280 = vmatprep.subr.bf16.mxu0 %v4322
    %6281 = vmatpush1.bf16.msra.mxu0 %v4321
    %6282 = vmatprep.subr.bf16.mxu0 %v4332
    %6283 = vmatpush1.bf16.msra.mxu0 %v4331
    %6284 = vmatprep.subr.bf16.mxu0 %v4342
    %6285 = vmatpush1.bf16.msra.mxu0 %v4341
    %6286 = vmatprep.subr.bf16.mxu0 %v4352
    %6287 = vmatpush1.bf16.msra.mxu0 %v4351
    %6288 = vmatprep.mubr.bf16.mxu0 %v456
    %6289 = vmatmul.mubr.bf16.gmra.mrb[0].mxu0 %v455
    %v6290 = vpop.f32.mrb[0].mxu0
    %v6291 = vadd.f32 %v6250, %v6290
    %v6292 = vpop.f32.mrb[0].mxu0
    %v6293 = vadd.f32 %v6252, %v6292
    %v6294 = vpop.f32.mrb[0].mxu0
    %v6295 = vpop.f32.mrb[0].mxu0
    %6296 = vdwg.mxu0
    %6297 = vmatprep.subr.bf16.mxu0 %v4362
    %6298 = vmatpush1.bf16.msra.mxu0 %v4361
    %6299 = vmatprep.subr.bf16.mxu0 %v4372
    %6300 = vmatpush1.bf16.msra.mxu0 %v4371
    %6301 = vmatprep.subr.bf16.mxu0 %v4382
    %6302 = vmatpush1.bf16.msra.mxu0 %v4381
    %6303 = vmatprep.subr.bf16.mxu0 %v4392
    %6304 = vmatpush1.bf16.msra.mxu0 %v4391
    %6305 = vmatprep.subr.bf16.mxu0 %v4402
    %6306 = vmatpush1.bf16.msra.mxu0 %v4401
    %6307 = vmatprep.subr.bf16.mxu0 %v4412
    %6308 = vmatpush1.bf16.msra.mxu0 %v4411
    %6309 = vmatprep.subr.bf16.mxu0 %v4422
    %6310 = vmatpush1.bf16.msra.mxu0 %v4421
    %6311 = vmatprep.subr.bf16.mxu0 %v4432
    %6312 = vmatpush1.bf16.msra.mxu0 %v4431
    %6313 = vmatprep.subr.bf16.mxu0 %v4442
    %6314 = vmatpush1.bf16.msra.mxu0 %v4441
    %6315 = vmatprep.subr.bf16.mxu0 %v4452
    %6316 = vmatpush1.bf16.msra.mxu0 %v4451
    %6317 = vmatprep.subr.bf16.mxu0 %v4462
    %6318 = vmatpush1.bf16.msra.mxu0 %v4461
    %6319 = vmatprep.subr.bf16.mxu0 %v4472
    %6320 = vmatpush1.bf16.msra.mxu0 %v4471
    %6321 = vmatprep.subr.bf16.mxu0 %v4482
    %6322 = vmatpush1.bf16.msra.mxu0 %v4481
    %6323 = vmatprep.subr.bf16.mxu0 %v4492
    %6324 = vmatpush1.bf16.msra.mxu0 %v4491
    %6325 = vmatprep.subr.bf16.mxu0 %v4502
    %6326 = vmatpush1.bf16.msra.mxu0 %v4501
    %6327 = vmatprep.subr.bf16.mxu0 %v4512
    %6328 = vmatpush1.bf16.msra.mxu0 %v4511
    %6329 = vmatprep.mubr.bf16.mxu0 %v458
    %6330 = vmatmul.mubr.bf16.gmra.mrb[0].mxu0 %v457
    %v6331 = vpop.f32.mrb[0].mxu0
    %v6332 = vadd.f32 %v6291, %v6331
    %v6333 = vpop.f32.mrb[0].mxu0
    %v6334 = vadd.f32 %v6293, %v6333
    %v6335 = vpop.f32.mrb[0].mxu0
    %v6336 = vpop.f32.mrb[0].mxu0
    %6337 = vdwg.mxu0
    %v6338 = vmax.f32 %v5512, 0.0
    %v6339 = vmax.f32 %v5514, 0.0
    %v6340 = vmax.f32 %v5717, 0.0
    %v6341 = vmax.f32 %v5719, 0.0
    %v6342 = vmax.f32 %v5922, 0.0
    %v6343 = vmax.f32 %v5924, 0.0
    %v6344 = vmax.f32 %v6127, 0.0
    %v6345 = vmax.f32 %v6129, 0.0
    %v6346 = vmax.f32 %v6332, 0.0
    %v6347 = vmax.f32 %v6334, 0.0
    %v6348 = vpack.c.bf16 %v6338, %v6338
    %v6349 = vpack.c.bf16 %v6339, %v6339
    %v6350 = vpack.c.bf16 %v6340, %v6340
    %v6351 = vpack.c.bf16 %v6341, %v6341
    %v6352 = vpack.c.bf16 %v6342, %v6342
    %v6353 = vpack.c.bf16 %v6343, %v6343
    %v6354 = vpack.c.bf16 %v6344, %v6344
    %v6355 = vpack.c.bf16 %v6345, %v6345
    %v6356 = vpack.c.bf16 %v6346, %v6346
    %v6357 = vpack.c.bf16 %v6347, %v6347
    %v6358 = vld [vmem:[#allocation11] sm:$0xf]
    %v6359 = vld [vmem:[#allocation11 + $0x4] sm:$0xf]
    %v6360 = vld [vmem:[#allocation11 + $0x8] sm:$0xf]
    %v6361 = vld [vmem:[#allocation11 + $0xc] sm:$0xf]
    %v6362 = vld [vmem:[#allocation11 + $0x10] sm:$0xf]
    %v6363 = vld [vmem:[#allocation11 + $0x14] sm:$0xf]
    %v6364 = vld [vmem:[#allocation11 + $0x18] sm:$0xf]
    %v6365 = vld [vmem:[#allocation11 + $0x1c] sm:$0xf]
    %v6366 = vld [vmem:[#allocation11 + $0x20] sm:$0xf]
    %v6367 = vld [vmem:[#allocation11 + $0x24] sm:$0xf]
    %v6368 = vld [vmem:[#allocation11 + $0x28] sm:$0xf]
    %v6369 = vld [vmem:[#allocation11 + $0x2c] sm:$0xf]
    %v6370 = vld [vmem:[#allocation11 + $0x30] sm:$0xf]
    %v6371 = vld [vmem:[#allocation11 + $0x34] sm:$0xf]
    %v6372 = vld [vmem:[#allocation11 + $0x38] sm:$0xf]
    %v6373 = vld [vmem:[#allocation11 + $0x3c] sm:$0xf]
    %v6374 = vld [vmem:[#allocation11 + $0x40] sm:$0xf]
    %v6375 = vld [vmem:[#allocation11 + $0x44] sm:$0xf]
    %v6376 = vld [vmem:[#allocation11 + $0x48] sm:$0xf]
    %v6377 = vld [vmem:[#allocation11 + $0x4c] sm:$0xf]
    %v6378 = vld [vmem:[#allocation11 + $0x50] sm:$0xf]
    %v6379 = vld [vmem:[#allocation11 + $0x54] sm:$0xf]
    %v6380 = vld [vmem:[#allocation11 + $0x58] sm:$0xf]
    %v6381 = vld [vmem:[#allocation11 + $0x5c] sm:$0xf]
    %v6382 = vld [vmem:[#allocation11 + $0x60] sm:$0xf]
    %v6383 = vld [vmem:[#allocation11 + $0x64] sm:$0xf]
    %v6384 = vld [vmem:[#allocation11 + $0x68] sm:$0xf]
    %v6385 = vld [vmem:[#allocation11 + $0x6c] sm:$0xf]
    %v6386 = vld [vmem:[#allocation11 + $0x70] sm:$0xf]
    %v6387 = vld [vmem:[#allocation11 + $0x74] sm:$0xf]
    %v6388 = vld [vmem:[#allocation11 + $0x78] sm:$0xf]
    %v6389 = vld [vmem:[#allocation11 + $0x7c] sm:$0xf]
    %v6390 = vld [vmem:[#allocation11 + $0x80] sm:$0xf]
    %v6391 = vld [vmem:[#allocation11 + $0x84] sm:$0xf]
    %v6392 = vld [vmem:[#allocation11 + $0x88] sm:$0xf]
    %v6393 = vld [vmem:[#allocation11 + $0x8c] sm:$0xf]
    %v6394 = vld [vmem:[#allocation11 + $0x90] sm:$0xf]
    %v6395 = vld [vmem:[#allocation11 + $0x94] sm:$0xf]
    %v6396 = vld [vmem:[#allocation11 + $0x98] sm:$0xf]
    %v6397 = vld [vmem:[#allocation11 + $0x9c] sm:$0xf]
    %v6398 = vld [vmem:[#allocation11 + $0xa0] sm:$0xf]
    %v6399 = vld [vmem:[#allocation11 + $0xa4] sm:$0xf]
    %v6400 = vld [vmem:[#allocation11 + $0xa8] sm:$0xf]
    %v6401 = vld [vmem:[#allocation11 + $0xac] sm:$0xf]
    %v6402 = vld [vmem:[#allocation11 + $0xb0] sm:$0xf]
    %v6403 = vld [vmem:[#allocation11 + $0xb4] sm:$0xf]
    %v6404 = vld [vmem:[#allocation11 + $0xb8] sm:$0xf]
    %v6405 = vld [vmem:[#allocation11 + $0xbc] sm:$0xf]
    %v6406 = vld [vmem:[#allocation11 + $0xc0] sm:$0xf]
    %v6407 = vld [vmem:[#allocation11 + $0xc4] sm:$0xf]
    %v6408 = vld [vmem:[#allocation11 + $0xc8] sm:$0xf]
    %v6409 = vld [vmem:[#allocation11 + $0xcc] sm:$0xf]
    %v6410 = vld [vmem:[#allocation11 + $0xd0] sm:$0xf]
    %v6411 = vld [vmem:[#allocation11 + $0xd4] sm:$0xf]
    %v6412 = vld [vmem:[#allocation11 + $0xd8] sm:$0xf]
    %v6413 = vld [vmem:[#allocation11 + $0xdc] sm:$0xf]
    %v6414 = vld [vmem:[#allocation11 + $0xe0] sm:$0xf]
    %v6415 = vld [vmem:[#allocation11 + $0xe4] sm:$0xf]
    %v6416 = vld [vmem:[#allocation11 + $0xe8] sm:$0xf]
    %v6417 = vld [vmem:[#allocation11 + $0xec] sm:$0xf]
    %v6418 = vld [vmem:[#allocation11 + $0xf0] sm:$0xf]
    %v6419 = vld [vmem:[#allocation11 + $0xf4] sm:$0xf]
    %v6420 = vld [vmem:[#allocation11 + $0xf8] sm:$0xf]
    %v6421 = vld [vmem:[#allocation11 + $0xfc] sm:$0xf]
    %v6422 = vld [vmem:[#allocation11 + $0x100] sm:$0xf]
    %v6423 = vld [vmem:[#allocation11 + $0x104] sm:$0xf]
    %v6424 = vld [vmem:[#allocation11 + $0x108] sm:$0xf]
    %v6425 = vld [vmem:[#allocation11 + $0x10c] sm:$0xf]
    %v6426 = vld [vmem:[#allocation11 + $0x110] sm:$0xf]
    %v6427 = vld [vmem:[#allocation11 + $0x114] sm:$0xf]
    %v6428 = vld [vmem:[#allocation11 + $0x118] sm:$0xf]
    %v6429 = vld [vmem:[#allocation11 + $0x11c] sm:$0xf]
    %v6430 = vld [vmem:[#allocation11 + $0x120] sm:$0xf]
    %v6431 = vld [vmem:[#allocation11 + $0x124] sm:$0xf]
    %v6432 = vld [vmem:[#allocation11 + $0x128] sm:$0xf]
    %v6433 = vld [vmem:[#allocation11 + $0x12c] sm:$0xf]
    %v6434 = vld [vmem:[#allocation11 + $0x130] sm:$0xf]
    %v6435 = vld [vmem:[#allocation11 + $0x134] sm:$0xf]
    %v6436 = vld [vmem:[#allocation11 + $0x138] sm:$0xf]
    %v6437 = vld [vmem:[#allocation11 + $0x13c] sm:$0xf]
    %v6438 = vld [vmem:[#allocation11 + $0x140] sm:$0xf]
    %v6439 = vld [vmem:[#allocation11 + $0x144] sm:$0xf]
    %v6440 = vld [vmem:[#allocation11 + $0x148] sm:$0xf]
    %v6441 = vld [vmem:[#allocation11 + $0x14c] sm:$0xf]
    %v6442 = vld [vmem:[#allocation11 + $0x150] sm:$0xf]
    %v6443 = vld [vmem:[#allocation11 + $0x154] sm:$0xf]
    %v6444 = vld [vmem:[#allocation11 + $0x158] sm:$0xf]
    %v6445 = vld [vmem:[#allocation11 + $0x15c] sm:$0xf]
    %v6446 = vld [vmem:[#allocation11 + $0x160] sm:$0xf]
    %v6447 = vld [vmem:[#allocation11 + $0x164] sm:$0xf]
    %v6448 = vld [vmem:[#allocation11 + $0x168] sm:$0xf]
    %v6449 = vld [vmem:[#allocation11 + $0x16c] sm:$0xf]
    %v6450 = vld [vmem:[#allocation11 + $0x170] sm:$0xf]
    %v6451 = vld [vmem:[#allocation11 + $0x174] sm:$0xf]
    %v6452 = vld [vmem:[#allocation11 + $0x178] sm:$0xf]
    %v6453 = vld [vmem:[#allocation11 + $0x17c] sm:$0xf]
    %v6454 = vld [vmem:[#allocation11 + $0x180] sm:$0xf]
    %v6455 = vld [vmem:[#allocation11 + $0x184] sm:$0xf]
    %v6456 = vld [vmem:[#allocation11 + $0x188] sm:$0xf]
    %v6457 = vld [vmem:[#allocation11 + $0x18c] sm:$0xf]
    %v6458 = vld [vmem:[#allocation11 + $0x190] sm:$0xf]
    %v6459 = vld [vmem:[#allocation11 + $0x194] sm:$0xf]
    %v6460 = vld [vmem:[#allocation11 + $0x198] sm:$0xf]
    %v6461 = vld [vmem:[#allocation11 + $0x19c] sm:$0xf]
    %v6462 = vld [vmem:[#allocation11 + $0x1a0] sm:$0xf]
    %v6463 = vld [vmem:[#allocation11 + $0x1a4] sm:$0xf]
    %v6464 = vld [vmem:[#allocation11 + $0x1a8] sm:$0xf]
    %v6465 = vld [vmem:[#allocation11 + $0x1ac] sm:$0xf]
    %v6466 = vld [vmem:[#allocation11 + $0x1b0] sm:$0xf]
    %v6467 = vld [vmem:[#allocation11 + $0x1b4] sm:$0xf]
    %v6468 = vld [vmem:[#allocation11 + $0x1b8] sm:$0xf]
    %v6469 = vld [vmem:[#allocation11 + $0x1bc] sm:$0xf]
    %v6470 = vld [vmem:[#allocation11 + $0x1c0] sm:$0xf]
    %v6471 = vld [vmem:[#allocation11 + $0x1c4] sm:$0xf]
    %v6472 = vld [vmem:[#allocation11 + $0x1c8] sm:$0xf]
    %v6473 = vld [vmem:[#allocation11 + $0x1cc] sm:$0xf]
    %v6474 = vld [vmem:[#allocation11 + $0x1d0] sm:$0xf]
    %v6475 = vld [vmem:[#allocation11 + $0x1d4] sm:$0xf]
    %v6476 = vld [vmem:[#allocation11 + $0x1d8] sm:$0xf]
    %v6477 = vld [vmem:[#allocation11 + $0x1dc] sm:$0xf]
    %v6478 = vld [vmem:[#allocation11 + $0x1e0] sm:$0xf]
    %v6479 = vld [vmem:[#allocation11 + $0x1e4] sm:$0xf]
    %v6480 = vld [vmem:[#allocation11 + $0x1e8] sm:$0xf]
    %v6481 = vld [vmem:[#allocation11 + $0x1ec] sm:$0xf]
    %v6482 = vld [vmem:[#allocation11 + $0x1f0] sm:$0xf]
    %v6483 = vld [vmem:[#allocation11 + $0x1f4] sm:$0xf]
    %v6484 = vld [vmem:[#allocation11 + $0x1f8] sm:$0xf]
    %v6485 = vld [vmem:[#allocation11 + $0x1fc] sm:$0xf]
    %v6486 = vld [vmem:[#allocation11 + $0x200] sm:$0xf]
    %v6487 = vld [vmem:[#allocation11 + $0x204] sm:$0xf]
    %v6488 = vld [vmem:[#allocation11 + $0x208] sm:$0xf]
    %v6489 = vld [vmem:[#allocation11 + $0x20c] sm:$0xf]
    %v6490 = vld [vmem:[#allocation11 + $0x210] sm:$0xf]
    %v6491 = vld [vmem:[#allocation11 + $0x214] sm:$0xf]
    %v6492 = vld [vmem:[#allocation11 + $0x218] sm:$0xf]
    %v6493 = vld [vmem:[#allocation11 + $0x21c] sm:$0xf]
    %v6494 = vld [vmem:[#allocation11 + $0x220] sm:$0xf]
    %v6495 = vld [vmem:[#allocation11 + $0x224] sm:$0xf]
    %v6496 = vld [vmem:[#allocation11 + $0x228] sm:$0xf]
    %v6497 = vld [vmem:[#allocation11 + $0x22c] sm:$0xf]
    %v6498 = vld [vmem:[#allocation11 + $0x230] sm:$0xf]
    %v6499 = vld [vmem:[#allocation11 + $0x234] sm:$0xf]
    %v6500 = vld [vmem:[#allocation11 + $0x238] sm:$0xf]
    %v6501 = vld [vmem:[#allocation11 + $0x23c] sm:$0xf]
    %v6502 = vld [vmem:[#allocation11 + $0x240] sm:$0xf]
    %v6503 = vld [vmem:[#allocation11 + $0x244] sm:$0xf]
    %v6504 = vld [vmem:[#allocation11 + $0x248] sm:$0xf]
    %v6505 = vld [vmem:[#allocation11 + $0x24c] sm:$0xf]
    %v6506 = vld [vmem:[#allocation11 + $0x250] sm:$0xf]
    %v6507 = vld [vmem:[#allocation11 + $0x254] sm:$0xf]
    %v6508 = vld [vmem:[#allocation11 + $0x258] sm:$0xf]
    %v6509 = vld [vmem:[#allocation11 + $0x25c] sm:$0xf]
    %v6510 = vld [vmem:[#allocation11 + $0x260] sm:$0xf]
    %v6511 = vld [vmem:[#allocation11 + $0x264] sm:$0xf]
    %v6512 = vld [vmem:[#allocation11 + $0x268] sm:$0xf]
    %v6513 = vld [vmem:[#allocation11 + $0x26c] sm:$0xf]
    %v6514 = vld [vmem:[#allocation11 + $0x270] sm:$0xf]
    %v6515 = vld [vmem:[#allocation11 + $0x274] sm:$0xf]
    %v6516 = vld [vmem:[#allocation11 + $0x278] sm:$0xf]
    %v6517 = vld [vmem:[#allocation11 + $0x27c] sm:$0xf]
    %v6518 = vld [vmem:[#allocation13] sm:$0x1]
    %v6520 = vlaneseq
    %v6521 = vshrl.u32 %v6520, 7
    %v6522 = vsub.s32 0, %v6521
    %v6523 = vrot.slane %v6518, %v6522
    %v6685 = vunpack.c.l.b16 %v6358
    %v6686 = vunpack.c.l.b16 %v6359
    %v6687 = vunpack.c.l.b16 %v6360
    %v6688 = vunpack.c.l.b16 %v6361
    %v6689 = vunpack.c.l.b16 %v6362
    %v6690 = vunpack.c.l.b16 %v6363
    %v6691 = vunpack.c.l.b16 %v6364
    %v6692 = vunpack.c.l.b16 %v6365
    %v6693 = vunpack.c.l.b16 %v6366
    %v6694 = vunpack.c.l.b16 %v6367
    %v6695 = vunpack.c.l.b16 %v6368
    %v6696 = vunpack.c.l.b16 %v6369
    %v6697 = vunpack.c.l.b16 %v6370
    %v6698 = vunpack.c.l.b16 %v6371
    %v6699 = vunpack.c.l.b16 %v6372
    %v6700 = vunpack.c.l.b16 %v6373
    %v6701 = vunpack.c.l.b16 %v6374
    %v6702 = vunpack.c.l.b16 %v6375
    %v6703 = vunpack.c.l.b16 %v6376
    %v6704 = vunpack.c.l.b16 %v6377
    %v6705 = vunpack.c.l.b16 %v6378
    %v6706 = vunpack.c.l.b16 %v6379
    %v6707 = vunpack.c.l.b16 %v6380
    %v6708 = vunpack.c.l.b16 %v6381
    %v6709 = vunpack.c.l.b16 %v6382
    %v6710 = vunpack.c.l.b16 %v6383
    %v6711 = vunpack.c.l.b16 %v6384
    %v6712 = vunpack.c.l.b16 %v6385
    %v6713 = vunpack.c.l.b16 %v6386
    %v6714 = vunpack.c.l.b16 %v6387
    %v6715 = vunpack.c.l.b16 %v6388
    %v6716 = vunpack.c.l.b16 %v6389
    %v6717 = vunpack.c.l.b16 %v6390
    %v6718 = vunpack.c.l.b16 %v6391
    %v6719 = vunpack.c.l.b16 %v6392
    %v6720 = vunpack.c.l.b16 %v6393
    %v6721 = vunpack.c.l.b16 %v6394
    %v6722 = vunpack.c.l.b16 %v6395
    %v6723 = vunpack.c.l.b16 %v6396
    %v6724 = vunpack.c.l.b16 %v6397
    %v6725 = vunpack.c.l.b16 %v6398
    %v6726 = vunpack.c.l.b16 %v6399
    %v6727 = vunpack.c.l.b16 %v6400
    %v6728 = vunpack.c.l.b16 %v6401
    %v6729 = vunpack.c.l.b16 %v6402
    %v6730 = vunpack.c.l.b16 %v6403
    %v6731 = vunpack.c.l.b16 %v6404
    %v6732 = vunpack.c.l.b16 %v6405
    %v6733 = vunpack.c.l.b16 %v6406
    %v6734 = vunpack.c.l.b16 %v6407
    %v6735 = vunpack.c.l.b16 %v6408
    %v6736 = vunpack.c.l.b16 %v6409
    %v6737 = vunpack.c.l.b16 %v6410
    %v6738 = vunpack.c.l.b16 %v6411
    %v6739 = vunpack.c.l.b16 %v6412
    %v6740 = vunpack.c.l.b16 %v6413
    %v6741 = vunpack.c.l.b16 %v6414
    %v6742 = vunpack.c.l.b16 %v6415
    %v6743 = vunpack.c.l.b16 %v6416
    %v6744 = vunpack.c.l.b16 %v6417
    %v6745 = vunpack.c.l.b16 %v6418
    %v6746 = vunpack.c.l.b16 %v6419
    %v6747 = vunpack.c.l.b16 %v6420
    %v6748 = vunpack.c.l.b16 %v6421
    %v6749 = vunpack.c.l.b16 %v6422
    %v6750 = vunpack.c.l.b16 %v6423
    %v6751 = vunpack.c.l.b16 %v6424
    %v6752 = vunpack.c.l.b16 %v6425
    %v6753 = vunpack.c.l.b16 %v6426
    %v6754 = vunpack.c.l.b16 %v6427
    %v6755 = vunpack.c.l.b16 %v6428
    %v6756 = vunpack.c.l.b16 %v6429
    %v6757 = vunpack.c.l.b16 %v6430
    %v6758 = vunpack.c.l.b16 %v6431
    %v6759 = vunpack.c.l.b16 %v6432
    %v6760 = vunpack.c.l.b16 %v6433
    %v6761 = vunpack.c.l.b16 %v6434
    %v6762 = vunpack.c.l.b16 %v6435
    %v6763 = vunpack.c.l.b16 %v6436
    %v6764 = vunpack.c.l.b16 %v6437
    %v6765 = vunpack.c.l.b16 %v6438
    %v6766 = vunpack.c.l.b16 %v6439
    %v6767 = vunpack.c.l.b16 %v6440
    %v6768 = vunpack.c.l.b16 %v6441
    %v6769 = vunpack.c.l.b16 %v6442
    %v6770 = vunpack.c.l.b16 %v6443
    %v6771 = vunpack.c.l.b16 %v6444
    %v6772 = vunpack.c.l.b16 %v6445
    %v6773 = vunpack.c.l.b16 %v6446
    %v6774 = vunpack.c.l.b16 %v6447
    %v6775 = vunpack.c.l.b16 %v6448
    %v6776 = vunpack.c.l.b16 %v6449
    %v6777 = vunpack.c.l.b16 %v6450
    %v6778 = vunpack.c.l.b16 %v6451
    %v6779 = vunpack.c.l.b16 %v6452
    %v6780 = vunpack.c.l.b16 %v6453
    %v6781 = vunpack.c.l.b16 %v6454
    %v6782 = vunpack.c.l.b16 %v6455
    %v6783 = vunpack.c.l.b16 %v6456
    %v6784 = vunpack.c.l.b16 %v6457
    %v6785 = vunpack.c.l.b16 %v6458
    %v6786 = vunpack.c.l.b16 %v6459
    %v6787 = vunpack.c.l.b16 %v6460
    %v6788 = vunpack.c.l.b16 %v6461
    %v6789 = vunpack.c.l.b16 %v6462
    %v6790 = vunpack.c.l.b16 %v6463
    %v6791 = vunpack.c.l.b16 %v6464
    %v6792 = vunpack.c.l.b16 %v6465
    %v6793 = vunpack.c.l.b16 %v6466
    %v6794 = vunpack.c.l.b16 %v6467
    %v6795 = vunpack.c.l.b16 %v6468
    %v6796 = vunpack.c.l.b16 %v6469
    %v6797 = vunpack.c.l.b16 %v6470
    %v6798 = vunpack.c.l.b16 %v6471
    %v6799 = vunpack.c.l.b16 %v6472
    %v6800 = vunpack.c.l.b16 %v6473
    %v6801 = vunpack.c.l.b16 %v6474
    %v6802 = vunpack.c.l.b16 %v6475
    %v6803 = vunpack.c.l.b16 %v6476
    %v6804 = vunpack.c.l.b16 %v6477
    %v6805 = vunpack.c.l.b16 %v6478
    %v6806 = vunpack.c.l.b16 %v6479
    %v6807 = vunpack.c.l.b16 %v6480
    %v6808 = vunpack.c.l.b16 %v6481
    %v6809 = vunpack.c.l.b16 %v6482
    %v6810 = vunpack.c.l.b16 %v6483
    %v6811 = vunpack.c.l.b16 %v6484
    %v6812 = vunpack.c.l.b16 %v6485
    %v6813 = vunpack.c.l.b16 %v6486
    %v6814 = vunpack.c.l.b16 %v6487
    %v6815 = vunpack.c.l.b16 %v6488
    %v6816 = vunpack.c.l.b16 %v6489
    %v6817 = vunpack.c.l.b16 %v6490
    %v6818 = vunpack.c.l.b16 %v6491
    %v6819 = vunpack.c.l.b16 %v6492
    %v6820 = vunpack.c.l.b16 %v6493
    %v6821 = vunpack.c.l.b16 %v6494
    %v6822 = vunpack.c.l.b16 %v6495
    %v6823 = vunpack.c.l.b16 %v6496
    %v6824 = vunpack.c.l.b16 %v6497
    %v6825 = vunpack.c.l.b16 %v6498
    %v6826 = vunpack.c.l.b16 %v6499
    %v6827 = vunpack.c.l.b16 %v6500
    %v6828 = vunpack.c.l.b16 %v6501
    %v6829 = vunpack.c.l.b16 %v6502
    %v6830 = vunpack.c.l.b16 %v6503
    %v6831 = vunpack.c.l.b16 %v6504
    %v6832 = vunpack.c.l.b16 %v6505
    %v6833 = vunpack.c.l.b16 %v6506
    %v6834 = vunpack.c.l.b16 %v6507
    %v6835 = vunpack.c.l.b16 %v6508
    %v6836 = vunpack.c.l.b16 %v6509
    %v6837 = vunpack.c.l.b16 %v6510
    %v6838 = vunpack.c.l.b16 %v6511
    %v6839 = vunpack.c.l.b16 %v6512
    %v6840 = vunpack.c.l.b16 %v6513
    %v6841 = vunpack.c.l.b16 %v6514
    %v6842 = vunpack.c.l.b16 %v6515
    %v6843 = vunpack.c.l.b16 %v6516
    %v6844 = vunpack.c.l.b16 %v6517
    %v6845 = vpack.c.b16 %v6686, %v6685
    %v6846 = vpack.c.b16 %v6688, %v6687
    %v6847 = vpack.c.b16 %v6690, %v6689
    %v6848 = vpack.c.b16 %v6692, %v6691
    %v6849 = vpack.c.b16 %v6694, %v6693
    %v6850 = vpack.c.b16 %v6696, %v6695
    %v6851 = vpack.c.b16 %v6698, %v6697
    %v6852 = vpack.c.b16 %v6700, %v6699
    %v6853 = vpack.c.b16 %v6702, %v6701
    %v6854 = vpack.c.b16 %v6704, %v6703
    %v6855 = vpack.c.b16 %v6706, %v6705
    %v6856 = vpack.c.b16 %v6708, %v6707
    %v6857 = vpack.c.b16 %v6710, %v6709
    %v6858 = vpack.c.b16 %v6712, %v6711
    %v6859 = vpack.c.b16 %v6714, %v6713
    %v6860 = vpack.c.b16 %v6716, %v6715
    %v6861 = vpack.c.b16 %v6718, %v6717
    %v6862 = vpack.c.b16 %v6720, %v6719
    %v6863 = vpack.c.b16 %v6722, %v6721
    %v6864 = vpack.c.b16 %v6724, %v6723
    %v6865 = vpack.c.b16 %v6726, %v6725
    %v6866 = vpack.c.b16 %v6728, %v6727
    %v6867 = vpack.c.b16 %v6730, %v6729
    %v6868 = vpack.c.b16 %v6732, %v6731
    %v6869 = vpack.c.b16 %v6734, %v6733
    %v6870 = vpack.c.b16 %v6736, %v6735
    %v6871 = vpack.c.b16 %v6738, %v6737
    %v6872 = vpack.c.b16 %v6740, %v6739
    %v6873 = vpack.c.b16 %v6742, %v6741
    %v6874 = vpack.c.b16 %v6744, %v6743
    %v6875 = vpack.c.b16 %v6746, %v6745
    %v6876 = vpack.c.b16 %v6748, %v6747
    %v6877 = vpack.c.b16 %v6750, %v6749
    %v6878 = vpack.c.b16 %v6752, %v6751
    %v6879 = vpack.c.b16 %v6754, %v6753
    %v6880 = vpack.c.b16 %v6756, %v6755
    %v6881 = vpack.c.b16 %v6758, %v6757
    %v6882 = vpack.c.b16 %v6760, %v6759
    %v6883 = vpack.c.b16 %v6762, %v6761
    %v6884 = vpack.c.b16 %v6764, %v6763
    %v6885 = vpack.c.b16 %v6766, %v6765
    %v6886 = vpack.c.b16 %v6768, %v6767
    %v6887 = vpack.c.b16 %v6770, %v6769
    %v6888 = vpack.c.b16 %v6772, %v6771
    %v6889 = vpack.c.b16 %v6774, %v6773
    %v6890 = vpack.c.b16 %v6776, %v6775
    %v6891 = vpack.c.b16 %v6778, %v6777
    %v6892 = vpack.c.b16 %v6780, %v6779
    %v6893 = vpack.c.b16 %v6782, %v6781
    %v6894 = vpack.c.b16 %v6784, %v6783
    %v6895 = vpack.c.b16 %v6786, %v6785
    %v6896 = vpack.c.b16 %v6788, %v6787
    %v6897 = vpack.c.b16 %v6790, %v6789
    %v6898 = vpack.c.b16 %v6792, %v6791
    %v6899 = vpack.c.b16 %v6794, %v6793
    %v6900 = vpack.c.b16 %v6796, %v6795
    %v6901 = vpack.c.b16 %v6798, %v6797
    %v6902 = vpack.c.b16 %v6800, %v6799
    %v6903 = vpack.c.b16 %v6802, %v6801
    %v6904 = vpack.c.b16 %v6804, %v6803
    %v6905 = vpack.c.b16 %v6806, %v6805
    %v6906 = vpack.c.b16 %v6808, %v6807
    %v6907 = vpack.c.b16 %v6810, %v6809
    %v6908 = vpack.c.b16 %v6812, %v6811
    %v6909 = vpack.c.b16 %v6814, %v6813
    %v6910 = vpack.c.b16 %v6816, %v6815
    %v6911 = vpack.c.b16 %v6818, %v6817
    %v6912 = vpack.c.b16 %v6820, %v6819
    %v6913 = vpack.c.b16 %v6822, %v6821
    %v6914 = vpack.c.b16 %v6824, %v6823
    %v6915 = vpack.c.b16 %v6826, %v6825
    %v6916 = vpack.c.b16 %v6828, %v6827
    %v6917 = vpack.c.b16 %v6830, %v6829
    %v6918 = vpack.c.b16 %v6832, %v6831
    %v6919 = vpack.c.b16 %v6834, %v6833
    %v6920 = vpack.c.b16 %v6836, %v6835
    %v6921 = vpack.c.b16 %v6838, %v6837
    %v6922 = vpack.c.b16 %v6840, %v6839
    %v6923 = vpack.c.b16 %v6842, %v6841
    %v6924 = vpack.c.b16 %v6844, %v6843
    %7005 = vmatprep.subr.bf16.mxu0 0
    %7006 = vmatpush1.bf16.msra.mxu0 %v6845
    %7007 = vmatprep.subr.bf16.mxu0 0
    %7008 = vmatpush1.bf16.msra.mxu0 %v6846
    %7009 = vmatprep.subr.bf16.mxu0 0
    %7010 = vmatpush1.bf16.msra.mxu0 %v6847
    %7011 = vmatprep.subr.bf16.mxu0 0
    %7012 = vmatpush1.bf16.msra.mxu0 %v6848
    %7013 = vmatprep.subr.bf16.mxu0 0
    %7014 = vmatpush1.bf16.msra.mxu0 %v6849
    %7015 = vmatprep.subr.bf16.mxu0 0
    %7016 = vmatpush1.bf16.msra.mxu0 %v6850
    %7017 = vmatprep.subr.bf16.mxu0 0
    %7018 = vmatpush1.bf16.msra.mxu0 %v6851
    %7019 = vmatprep.subr.bf16.mxu0 0
    %7020 = vmatpush1.bf16.msra.mxu0 %v6852
    %7021 = vmatprep.subr.bf16.mxu0 0
    %7022 = vmatpush1.bf16.msra.mxu0 %v6853
    %7023 = vmatprep.subr.bf16.mxu0 0
    %7024 = vmatpush1.bf16.msra.mxu0 %v6854
    %7025 = vmatprep.subr.bf16.mxu0 0
    %7026 = vmatpush1.bf16.msra.mxu0 %v6855
    %7027 = vmatprep.subr.bf16.mxu0 0
    %7028 = vmatpush1.bf16.msra.mxu0 %v6856
    %7029 = vmatprep.subr.bf16.mxu0 0
    %7030 = vmatpush1.bf16.msra.mxu0 %v6857
    %7031 = vmatprep.subr.bf16.mxu0 0
    %7032 = vmatpush1.bf16.msra.mxu0 %v6858
    %7033 = vmatprep.subr.bf16.mxu0 0
    %7034 = vmatpush1.bf16.msra.mxu0 %v6859
    %7035 = vmatprep.subr.bf16.mxu0 0
    %7036 = vmatpush1.bf16.msra.mxu0 %v6860
    %7037 = vmatprep.mubr.bf16.mxu0 %v6349
    %7038 = vmatmul.mubr.bf16.gmra.mrb[0].mxu0 %v6348
    %v7039 = vpop.f32.mrb[0].mxu0
    %v7040 = vadd.f32 %v6523, %v7039
    %v7041 = vpop.f32.mrb[0].mxu0
    %v7042 = vpop.f32.mrb[0].mxu0
    %v7043 = vpop.f32.mrb[0].mxu0
    %7044 = vdwg.mxu0
    %7045 = vmatprep.subr.bf16.mxu0 0
    %7046 = vmatpush1.bf16.msra.mxu0 %v6861
    %7047 = vmatprep.subr.bf16.mxu0 0
    %7048 = vmatpush1.bf16.msra.mxu0 %v6862
    %7049 = vmatprep.subr.bf16.mxu0 0
    %7050 = vmatpush1.bf16.msra.mxu0 %v6863
    %7051 = vmatprep.subr.bf16.mxu0 0
    %7052 = vmatpush1.bf16.msra.mxu0 %v6864
    %7053 = vmatprep.subr.bf16.mxu0 0
    %7054 = vmatpush1.bf16.msra.mxu0 %v6865
    %7055 = vmatprep.subr.bf16.mxu0 0
    %7056 = vmatpush1.bf16.msra.mxu0 %v6866
    %7057 = vmatprep.subr.bf16.mxu0 0
    %7058 = vmatpush1.bf16.msra.mxu0 %v6867
    %7059 = vmatprep.subr.bf16.mxu0 0
    %7060 = vmatpush1.bf16.msra.mxu0 %v6868
    %7061 = vmatprep.subr.bf16.mxu0 0
    %7062 = vmatpush1.bf16.msra.mxu0 %v6869
    %7063 = vmatprep.subr.bf16.mxu0 0
    %7064 = vmatpush1.bf16.msra.mxu0 %v6870
    %7065 = vmatprep.subr.bf16.mxu0 0
    %7066 = vmatpush1.bf16.msra.mxu0 %v6871
    %7067 = vmatprep.subr.bf16.mxu0 0
    %7068 = vmatpush1.bf16.msra.mxu0 %v6872
    %7069 = vmatprep.subr.bf16.mxu0 0
    %7070 = vmatpush1.bf16.msra.mxu0 %v6873
    %7071 = vmatprep.subr.bf16.mxu0 0
    %7072 = vmatpush1.bf16.msra.mxu0 %v6874
    %7073 = vmatprep.subr.bf16.mxu0 0
    %7074 = vmatpush1.bf16.msra.mxu0 %v6875
    %7075 = vmatprep.subr.bf16.mxu0 0
    %7076 = vmatpush1.bf16.msra.mxu0 %v6876
    %7077 = vmatprep.mubr.bf16.mxu0 %v6351
    %7078 = vmatmul.mubr.bf16.gmra.mrb[0].mxu0 %v6350
    %v7079 = vpop.f32.mrb[0].mxu0
    %v7080 = vadd.f32 %v7040, %v7079
    %v7081 = vpop.f32.mrb[0].mxu0
    %v7082 = vpop.f32.mrb[0].mxu0
    %v7083 = vpop.f32.mrb[0].mxu0
    %7084 = vdwg.mxu0
    %7085 = vmatprep.subr.bf16.mxu0 0
    %7086 = vmatpush1.bf16.msra.mxu0 %v6877
    %7087 = vmatprep.subr.bf16.mxu0 0
    %7088 = vmatpush1.bf16.msra.mxu0 %v6878
    %7089 = vmatprep.subr.bf16.mxu0 0
    %7090 = vmatpush1.bf16.msra.mxu0 %v6879
    %7091 = vmatprep.subr.bf16.mxu0 0
    %7092 = vmatpush1.bf16.msra.mxu0 %v6880
    %7093 = vmatprep.subr.bf16.mxu0 0
    %7094 = vmatpush1.bf16.msra.mxu0 %v6881
    %7095 = vmatprep.subr.bf16.mxu0 0
    %7096 = vmatpush1.bf16.msra.mxu0 %v6882
    %7097 = vmatprep.subr.bf16.mxu0 0
    %7098 = vmatpush1.bf16.msra.mxu0 %v6883
    %7099 = vmatprep.subr.bf16.mxu0 0
    %7100 = vmatpush1.bf16.msra.mxu0 %v6884
    %7101 = vmatprep.subr.bf16.mxu0 0
    %7102 = vmatpush1.bf16.msra.mxu0 %v6885
    %7103 = vmatprep.subr.bf16.mxu0 0
    %7104 = vmatpush1.bf16.msra.mxu0 %v6886
    %7105 = vmatprep.subr.bf16.mxu0 0
    %7106 = vmatpush1.bf16.msra.mxu0 %v6887
    %7107 = vmatprep.subr.bf16.mxu0 0
    %7108 = vmatpush1.bf16.msra.mxu0 %v6888
    %7109 = vmatprep.subr.bf16.mxu0 0
    %7110 = vmatpush1.bf16.msra.mxu0 %v6889
    %7111 = vmatprep.subr.bf16.mxu0 0
    %7112 = vmatpush1.bf16.msra.mxu0 %v6890
    %7113 = vmatprep.subr.bf16.mxu0 0
    %7114 = vmatpush1.bf16.msra.mxu0 %v6891
    %7115 = vmatprep.subr.bf16.mxu0 0
    %7116 = vmatpush1.bf16.msra.mxu0 %v6892
    %7117 = vmatprep.mubr.bf16.mxu0 %v6353
    %7118 = vmatmul.mubr.bf16.gmra.mrb[0].mxu0 %v6352
    %v7119 = vpop.f32.mrb[0].mxu0
    %v7120 = vadd.f32 %v7080, %v7119
    %v7121 = vpop.f32.mrb[0].mxu0
    %v7122 = vpop.f32.mrb[0].mxu0
    %v7123 = vpop.f32.mrb[0].mxu0
    %7124 = vdwg.mxu0
    %7125 = vmatprep.subr.bf16.mxu0 0
    %7126 = vmatpush1.bf16.msra.mxu0 %v6893
    %7127 = vmatprep.subr.bf16.mxu0 0
    %7128 = vmatpush1.bf16.msra.mxu0 %v6894
    %7129 = vmatprep.subr.bf16.mxu0 0
    %7130 = vmatpush1.bf16.msra.mxu0 %v6895
    %7131 = vmatprep.subr.bf16.mxu0 0
    %7132 = vmatpush1.bf16.msra.mxu0 %v6896
    %7133 = vmatprep.subr.bf16.mxu0 0
    %7134 = vmatpush1.bf16.msra.mxu0 %v6897
    %7135 = vmatprep.subr.bf16.mxu0 0
    %7136 = vmatpush1.bf16.msra.mxu0 %v6898
    %7137 = vmatprep.subr.bf16.mxu0 0
    %7138 = vmatpush1.bf16.msra.mxu0 %v6899
    %7139 = vmatprep.subr.bf16.mxu0 0
    %7140 = vmatpush1.bf16.msra.mxu0 %v6900
    %7141 = vmatprep.subr.bf16.mxu0 0
    %7142 = vmatpush1.bf16.msra.mxu0 %v6901
    %7143 = vmatprep.subr.bf16.mxu0 0
    %7144 = vmatpush1.bf16.msra.mxu0 %v6902
    %7145 = vmatprep.subr.bf16.mxu0 0
    %7146 = vmatpush1.bf16.msra.mxu0 %v6903
    %7147 = vmatprep.subr.bf16.mxu0 0
    %7148 = vmatpush1.bf16.msra.mxu0 %v6904
    %7149 = vmatprep.subr.bf16.mxu0 0
    %7150 = vmatpush1.bf16.msra.mxu0 %v6905
    %7151 = vmatprep.subr.bf16.mxu0 0
    %7152 = vmatpush1.bf16.msra.mxu0 %v6906
    %7153 = vmatprep.subr.bf16.mxu0 0
    %7154 = vmatpush1.bf16.msra.mxu0 %v6907
    %7155 = vmatprep.subr.bf16.mxu0 0
    %7156 = vmatpush1.bf16.msra.mxu0 %v6908
    %7157 = vmatprep.mubr.bf16.mxu0 %v6355
    %7158 = vmatmul.mubr.bf16.gmra.mrb[0].mxu0 %v6354
    %v7159 = vpop.f32.mrb[0].mxu0
    %v7160 = vadd.f32 %v7120, %v7159
    %v7161 = vpop.f32.mrb[0].mxu0
    %v7162 = vpop.f32.mrb[0].mxu0
    %v7163 = vpop.f32.mrb[0].mxu0
    %7164 = vdwg.mxu0
    %7165 = vmatprep.subr.bf16.mxu0 0
    %7166 = vmatpush1.bf16.msra.mxu0 %v6909
    %7167 = vmatprep.subr.bf16.mxu0 0
    %7168 = vmatpush1.bf16.msra.mxu0 %v6910
    %7169 = vmatprep.subr.bf16.mxu0 0
    %7170 = vmatpush1.bf16.msra.mxu0 %v6911
    %7171 = vmatprep.subr.bf16.mxu0 0
    %7172 = vmatpush1.bf16.msra.mxu0 %v6912
    %7173 = vmatprep.subr.bf16.mxu0 0
    %7174 = vmatpush1.bf16.msra.mxu0 %v6913
    %7175 = vmatprep.subr.bf16.mxu0 0
    %7176 = vmatpush1.bf16.msra.mxu0 %v6914
    %7177 = vmatprep.subr.bf16.mxu0 0
    %7178 = vmatpush1.bf16.msra.mxu0 %v6915
    %7179 = vmatprep.subr.bf16.mxu0 0
    %7180 = vmatpush1.bf16.msra.mxu0 %v6916
    %7181 = vmatprep.subr.bf16.mxu0 0
    %7182 = vmatpush1.bf16.msra.mxu0 %v6917
    %7183 = vmatprep.subr.bf16.mxu0 0
    %7184 = vmatpush1.bf16.msra.mxu0 %v6918
    %7185 = vmatprep.subr.bf16.mxu0 0
    %7186 = vmatpush1.bf16.msra.mxu0 %v6919
    %7187 = vmatprep.subr.bf16.mxu0 0
    %7188 = vmatpush1.bf16.msra.mxu0 %v6920
    %7189 = vmatprep.subr.bf16.mxu0 0
    %7190 = vmatpush1.bf16.msra.mxu0 %v6921
    %7191 = vmatprep.subr.bf16.mxu0 0
    %7192 = vmatpush1.bf16.msra.mxu0 %v6922
    %7193 = vmatprep.subr.bf16.mxu0 0
    %7194 = vmatpush1.bf16.msra.mxu0 %v6923
    %7195 = vmatprep.subr.bf16.mxu0 0
    %7196 = vmatpush1.bf16.msra.mxu0 %v6924
    %7197 = vmatprep.mubr.bf16.mxu0 %v6357
    %7198 = vmatmul.mubr.bf16.gmra.mrb[0].mxu0 %v6356
    %v7199 = vpop.f32.mrb[0].mxu0
    %v7200 = vadd.f32 %v7160, %v7199
    %v7201 = vpop.f32.mrb[0].mxu0
    %v7202 = vpop.f32.mrb[0].mxu0
    %v7203 = vpop.f32.mrb[0].mxu0
    %7204 = vdwg.mxu0
    %7205 = vst [vmem:[#allocation14] sm:$0xff] %v7200
    // Predicated region
    $region58: #{tpu_custom_call.1} parent=1 // pred_check
      _
    $region59: #{tpu_custom_call.1} parent=1 // pred_check_branch
      %7207 = sbr.rel (0) target = $region61
    $region60: #{tpu_custom_call.1} parent=1 // pred_region
      %s7209 = ssub.s32 128, 128
      %7210 = vsyncadd [#allocation4], %s7209
      %s7212 = sshll.u32 [#allocation14], 4
      %s7213 = int_to_ptr.vmem [resolvable:$true] %s7212
      %7215 = dma.vmem_to_hbm [thread:$0]  %s7213, 128, %s7, [#allocation4]
    $region61: #{tpu_custom_call.1} parent=1 // pred_fallthru
      _
    // Predicated region
    $region62: #{tpu_custom_call.1} parent=1 // pred_check
      _
    $region63: #{tpu_custom_call.1} parent=1 // pred_check_branch
      %7217 = sbr.rel (0) target = $region65
    $region64: #{tpu_custom_call.1} parent=1 // pred_region
      %7218 = dma.done [#allocation4], 128
    $region65: #{tpu_custom_call.1} parent=1 // pred_fallthru
      _
    %7219 = vsyncpa [#allocation3], 1
    %7220 = vsyncpa [#allocation6], 1
    %7221 = vsyncpa [#allocation9], 1
    %7222 = vsyncpa [#allocation12], 1
    %7223 = vsyncpa [#allocation4], 1

</llo_original>
